<compile_context>
chip_gen: v7x
topology: tpu7x:2x2x1
jax: 0.10.0
libtpu: 0.0.40
codegen_flags: <defaults>
</compile_context>

<pallas_src>
import numpy as np
import jax
import jax.numpy as jnp
from jax.experimental import pallas as pl
from jax.experimental.pallas import tpu as pltpu


# ----------------------------- in-kernel math helpers -----------------------------

def _gelu(x):
    # tanh-form GELU: a single EUP tanh instead of the erf polynomial (+exp+divide);
    # matches torch.nn.GELU() to well below the test tolerance for these value ranges.
    c = 0.7978845608028654  # sqrt(2/pi)
    return 0.5 * x * (1.0 + jnp.tanh(c * (x + 0.044715 * (x * x * x))))


def _seg_layernorm(v, mavg, gamma, beta, eps=1e-6):
    # Per-sample LayerNorm on lane-packed activations.  `mavg` is block-diagonal
    # (1/C inside each sample's C-lane block), so v @ mavg gives every lane its own
    # sample's mean / variance (two small MXU dots; the MXU is otherwise idle here).
    mu = jnp.dot(v, mavg, preferred_element_type=jnp.float32)
    d = v - mu
    var = jnp.dot(d * d, mavg, preferred_element_type=jnp.float32)
    return d * jax.lax.rsqrt(var + eps) * gamma + beta


# ----------------------------------- the kernel -----------------------------------

def _predictor_kernel(x_ref, pool_ref, mavg_ref, g1_ref, be1_ref,
                      w1_ref, b1_ref, w2_ref, b2_ref, g2_ref, be2_ref,
                      wc1_ref, bc1_ref, wc2_ref, bc2_ref, wfc_ref, bfc_ref,
                      out_ref):
    f32, bf16 = jnp.float32, jnp.bfloat16
    mavg = mavg_ref[...]                                                   # (P, P)

    # AdaptiveAvgPool1d (exact adaptive-window semantics) for all B_TILE samples at
    # once via a block-diagonal averaging matrix.  Kept in f32 for accuracy margin.
    xp = jnp.dot(x_ref[...], pool_ref[...], preferred_element_type=f32)    # (N, P)

    # --- MixerBlock: token-mixing MLP:  h = gelu(W1 @ y + b1);  tok = W2 @ h + b2 ---
    y = _seg_layernorm(xp, mavg, g1_ref[...], be1_ref[...])                # (N, P)
    h = _gelu(jnp.dot(w1_ref[...], y.astype(bf16),
                      preferred_element_type=f32) + b1_ref[...])           # (Td, P)
    tok = jnp.dot(w2_ref[...], h.astype(bf16),
                  preferred_element_type=f32) + b2_ref[...]                # (N, P)
    x1 = xp + tok

    # --- MixerBlock: channel-mixing MLP (block-diagonal weights keep the lane-packed
    #     samples independent) ---
    z = _seg_layernorm(x1, mavg, g2_ref[...], be2_ref[...])                # (N, P)
    h2 = _gelu(jnp.dot(z.astype(bf16), wc1_ref[...],
                       preferred_element_type=f32) + bc1_ref[...])         # (N, Bt*Cd)
    ch = jnp.dot(h2.astype(bf16), wc2_ref[...],
                 preferred_element_type=f32) + bc2_ref[...]                # (N, P)
    x2 = x1 + ch

    # --- fc(C -> 1) for every token, emitted lane-dense as (B_TILE, N):
    #       out[b, n] = sum_c Wfc[c] * x2[n, b*C + c] + bfc
    #     A @ B^T dot = segmented reduction + transpose in one op.  The CLS token is
    #     dropped by the caller (in-kernel row-1 slicing would force a relayout). ---
    out = jax.lax.dot_general(wfc_ref[...], x2, (((1,), (1,)), ((), ())),
                              preferred_element_type=f32)                  # (Bt, N)
    out_ref[...] = out + bfc_ref[...]


# ---------------------------- parameter packing for the kernel ----------------------

def _pack_params(params, bt):
    """Logical (torch-oriented) params -> lane-packed kernel operands for B_TILE=bt."""
    (pool, g1, be1, W1, b1, W2, b2, g2, be2, Wc1, bc1, Wc2, bc2, Wfc, bfc) = params
    f32, bf16 = jnp.float32, jnp.bfloat16
    L, C = pool.shape
    eye = jnp.eye(bt, dtype=f32)
    bdiag = lambda m: jnp.kron(eye, m.astype(f32))                 # bt block-diag copies
    tile = lambda v: jnp.tile(v.reshape(1, -1).astype(f32), (1, bt))

    return (
        bdiag(pool),                                        # (bt*L, bt*C)   f32
        bdiag(jnp.full((C, C), 1.0 / C, f32)),              # (bt*C, bt*C)   f32
        tile(g1), tile(be1),                                # (1, bt*C)      f32
        W1.astype(bf16), b1.reshape(-1, 1).astype(f32),     # (Td, N), (Td, 1)
        W2.astype(bf16), b2.reshape(-1, 1).astype(f32),     # (N, Td), (N, 1)
        tile(g2), tile(be2),                                # (1, bt*C)
        bdiag(Wc1.T).astype(bf16), tile(bc1),               # (bt*C, bt*Cd), (1, bt*Cd)
        bdiag(Wc2.T).astype(bf16), tile(bc2),               # (bt*Cd, bt*C), (1, bt*C)
        jnp.kron(eye, Wfc.astype(f32)),                     # (bt, bt*C)     f32
        bfc.reshape(1, 1).astype(f32),                      # (1, 1)         f32
    )


# ----------------------------------- the wrapper -----------------------------------

def predictor_forward(x, params, *, block_b=4):
    """x: (B, N=197, L) -> (B, N-1, 1), matching Predictor.forward."""
    B, N, L = x.shape
    C = params[0].shape[1]            # pool is (L, C)
    Bt = block_b
    Bp = ((B + Bt - 1) // Bt) * Bt    # pad batch to a multiple of B_TILE
    G = Bp // Bt
    if Bp != B:
        x = jnp.pad(x, ((0, Bp - B), (0, 0), (0, 0)))

    # Lane-pack B_TILE samples per grid step: (G, N, Bt*L); lane block b <- sample g*Bt+b.
    xw = jnp.transpose(x.reshape(G, Bt, N, L), (0, 2, 1, 3)).reshape(G, N, Bt * L)
    ops = _pack_params(params, Bt)

    def _const_spec(a):
        nd = a.ndim
        return pl.BlockSpec(a.shape, lambda g, _nd=nd: (0,) * _nd)

    out = pl.pallas_call(
        _predictor_kernel,
        out_shape=jax.ShapeDtypeStruct((G, Bt, N), jnp.float32),
        grid=(G,),
        in_specs=[pl.BlockSpec((None, N, Bt * L), lambda g: (g, 0, 0))]
                 + [_const_spec(p) for p in ops],
        out_specs=pl.BlockSpec((None, Bt, N), lambda g: (g, 0, 0)),
        compiler_params=pltpu.CompilerParams(dimension_semantics=("parallel",)),
    )(xw, *ops)

    # Drop batch padding + the CLS token and restore the module's (B, N-1, 1) shape.
    # Doing this on the lane-dense (B, N) result here is free; doing x2[1:, :] inside
    # the kernel would force a sublane-misaligned relayout every grid step.
    return out.reshape(Bp, N)[:B, 1:, None]


# ------------------------------ deterministic parameters ----------------------------

def make_params(key, in_embed_dim, seq_len, in_features):
    """MixerBlock(in_embed_dim, 197) + fc parameters in torch orientation
    (timm defaults: mlp_ratio=(0.5, 4.0), LayerNorm eps=1e-6, GELU, drop/drop_path=0)."""
    C, N, L = in_embed_dim, seq_len, in_features
    Td, Cd = int(0.5 * C), int(4.0 * C)
    ks = jax.random.split(key, 10)
    nrm = lambda k, shape, s=0.02: s * jax.random.normal(k, shape, dtype=jnp.float32)

    # exact AdaptiveAvgPool1d(L -> C) as an averaging matrix
    P = np.zeros((L, C), dtype=np.float32)
    for i in range(C):
        s = (i * L) // C
        e = -((-(i + 1) * L) // C)        # ceil((i+1)*L/C)
        P[s:e, i] = 1.0 / (e - s)

    g1 = jnp.ones((C,), jnp.float32); be1 = jnp.zeros((C,), jnp.float32)
    g2 = jnp.ones((C,), jnp.float32); be2 = jnp.zeros((C,), jnp.float32)
    W1 = nrm(ks[0], (Td, N)); b1 = nrm(ks[1], (Td,), 0.01)      # token MLP (out, in)
    W2 = nrm(ks[2], (N, Td)); b2 = nrm(ks[3], (N,), 0.01)
    Wc1 = nrm(ks[4], (Cd, C)); bc1 = nrm(ks[5], (Cd,), 0.01)    # channel MLP (out, in)
    Wc2 = nrm(ks[6], (C, Cd)); bc2 = nrm(ks[7], (C,), 0.01)
    Wfc = nrm(ks[8], (1, C)); bfc = nrm(ks[9], (1,), 0.01)      # fc (out, in)

    return (jnp.asarray(P), g1, be1, W1, b1, W2, b2, g2, be2,
            Wc1, bc1, Wc2, bc2, Wfc, bfc)


# ----------------------------- pure-JAX reference (checking) ------------------------

def predictor_reference(x, params):
    (pool, g1, be1, W1, b1, W2, b2, g2, be2, Wc1, bc1, Wc2, bc2, Wfc, bfc) = params
    gelu = lambda v: jax.nn.gelu(v, approximate=False)

    def ln(v, g, b):
        mu = v.mean(-1, keepdims=True)
        var = ((v - mu) ** 2).mean(-1, keepdims=True)
        return (v - mu) / jnp.sqrt(var + 1e-6) * g + b

    xp = jnp.einsum('bnl,lc->bnc', x, pool)                    # AdaptiveAvgPool1d
    y = ln(xp, g1, be1)
    t = jnp.swapaxes(y, 1, 2)                                  # (B, C, N)
    t = gelu(t @ W1.T + b1) @ W2.T + b2                        # token MLP
    x1 = xp + jnp.swapaxes(t, 1, 2)
    z = ln(x1, g2, be2)
    ch = gelu(z @ Wc1.T + bc1) @ Wc2.T + bc2                   # channel MLP
    x2 = x1 + ch
    return x2[:, 1:, :] @ Wfc.T + bfc                          # drop CLS + fc


# ----------------------------------------- main -------------------------------------

if __name__ == "__main__":
    B = 8        # batch  -> grid = B/B_TILE = 2 steps (keeps both v7x TensorCores busy)
    N = 197      # token count, fixed by MixerBlock(in_embed_dim, 197)
    L = 64       # raw feature size fed to AdaptiveAvgPool1d
    C = 32       # in_embed_dim (scaled down from 768; B_TILE*C = 128 fills the lanes)

    key = jax.random.PRNGKey(0)
    kx, kp = jax.random.split(key)
    x = jax.random.normal(kx, (B, N, L), dtype=jnp.float32)
    params = make_params(kp, C, N, L)

    fwd = jax.jit(predictor_forward)
    out = jax.block_until_ready(fwd(x, params))

    assert out.shape == (B, N - 1, 1)
    ref = predictor_reference(x, params)
    np.testing.assert_allclose(np.asarray(out), np.asarray(ref), rtol=2e-3, atol=2e-3)

    print("KERNEL_OK")
</pallas_src>

<mosaic_0001>
module attributes {stable_mosaic.version = 11 : i64} {
  func.func @_predictor_kernel(%arg0: i32, %arg1: memref<1x197x256xf32, #tpu.memory_space<vmem>>, %arg2: memref<256x128xf32, #tpu.memory_space<vmem>>, %arg3: memref<128x128xf32, #tpu.memory_space<vmem>>, %arg4: memref<1x128xf32, #tpu.memory_space<vmem>>, %arg5: memref<1x128xf32, #tpu.memory_space<vmem>>, %arg6: memref<16x197xbf16, #tpu.memory_space<vmem>>, %arg7: memref<16x1xf32, #tpu.memory_space<vmem>>, %arg8: memref<197x16xbf16, #tpu.memory_space<vmem>>, %arg9: memref<197x1xf32, #tpu.memory_space<vmem>>, %arg10: memref<1x128xf32, #tpu.memory_space<vmem>>, %arg11: memref<1x128xf32, #tpu.memory_space<vmem>>, %arg12: memref<128x512xbf16, #tpu.memory_space<vmem>>, %arg13: memref<1x512xf32, #tpu.memory_space<vmem>>, %arg14: memref<512x128xbf16, #tpu.memory_space<vmem>>, %arg15: memref<1x128xf32, #tpu.memory_space<vmem>>, %arg16: memref<4x128xf32, #tpu.memory_space<vmem>>, %arg17: memref<1x1xf32, #tpu.memory_space<vmem>>, %arg18: memref<1x4x197xf32, #tpu.memory_space<vmem>>) attributes {dimension_semantics = [#tpu.dimension_semantics<parallel>], iteration_bounds = array<i64: 2>, scalar_prefetch = 0 : i64, scratch_operands = 0 : i64, tpu.core_type = #tpu.core_type<tc>, window_params = [{transform_indices = @transform_0, window_bounds = array<i64: 1, 197, 256>}, {pipeline_mode = #tpu.pipeline_mode<synchronous>, transform_indices = @transform_1, window_bounds = array<i64: 256, 128>}, {pipeline_mode = #tpu.pipeline_mode<synchronous>, transform_indices = @transform_2, window_bounds = array<i64: 128, 128>}, {pipeline_mode = #tpu.pipeline_mode<synchronous>, transform_indices = @transform_3, window_bounds = array<i64: 1, 128>}, {pipeline_mode = #tpu.pipeline_mode<synchronous>, transform_indices = @transform_4, window_bounds = array<i64: 1, 128>}, {pipeline_mode = #tpu.pipeline_mode<synchronous>, transform_indices = @transform_5, window_bounds = array<i64: 16, 197>}, {pipeline_mode = #tpu.pipeline_mode<synchronous>, transform_indices = @transform_6, window_bounds = array<i64: 16, 1>}, {pipeline_mode = #tpu.pipeline_mode<synchronous>, transform_indices = @transform_7, window_bounds = array<i64: 197, 16>}, {pipeline_mode = #tpu.pipeline_mode<synchronous>, transform_indices = @transform_8, window_bounds = array<i64: 197, 1>}, {pipeline_mode = #tpu.pipeline_mode<synchronous>, transform_indices = @transform_9, window_bounds = array<i64: 1, 128>}, {pipeline_mode = #tpu.pipeline_mode<synchronous>, transform_indices = @transform_10, window_bounds = array<i64: 1, 128>}, {pipeline_mode = #tpu.pipeline_mode<synchronous>, transform_indices = @transform_11, window_bounds = array<i64: 128, 512>}, {pipeline_mode = #tpu.pipeline_mode<synchronous>, transform_indices = @transform_12, window_bounds = array<i64: 1, 512>}, {pipeline_mode = #tpu.pipeline_mode<synchronous>, transform_indices = @transform_13, window_bounds = array<i64: 512, 128>}, {pipeline_mode = #tpu.pipeline_mode<synchronous>, transform_indices = @transform_14, window_bounds = array<i64: 1, 128>}, {pipeline_mode = #tpu.pipeline_mode<synchronous>, transform_indices = @transform_15, window_bounds = array<i64: 4, 128>}, {pipeline_mode = #tpu.pipeline_mode<synchronous>, transform_indices = @transform_16, window_bounds = array<i64: 1, 1>}, {transform_indices = @transform_17, window_bounds = array<i64: 1, 4, 197>}]} {
    %c0 = arith.constant 0 : index
    %c0_0 = arith.constant 0 : index
    %0 = vector.load %arg3[%c0, %c0_0] : memref<128x128xf32, #tpu.memory_space<vmem>>, vector<128x128xf32>
    %c0_1 = arith.constant 0 : index
    %c0_2 = arith.constant 0 : index
    %c0_3 = arith.constant 0 : index
    %1 = vector.load %arg1[%c0_1, %c0_2, %c0_3] : memref<1x197x256xf32, #tpu.memory_space<vmem>>, vector<1x197x256xf32>
    %2 = vector.shape_cast %1 : vector<1x197x256xf32> to vector<197x256xf32>
    %c0_4 = arith.constant 0 : index
    %c0_5 = arith.constant 0 : index
    %3 = vector.load %arg2[%c0_4, %c0_5] : memref<256x128xf32, #tpu.memory_space<vmem>>, vector<256x128xf32>
    %cst = arith.constant dense<0.000000e+00> : vector<197x128xf32>
    %4 = tpu.matmul %2, %3, %cst {dimension_numbers = #tpu.dot_dimension_numbers<[1], [0], [0], [1], [0, 0, 1, 1], [], []>} : vector<197x256xf32>, vector<256x128xf32>, vector<197x128xf32> -> vector<197x128xf32>
    %c0_6 = arith.constant 0 : index
    %c0_7 = arith.constant 0 : index
    %5 = vector.load %arg4[%c0_6, %c0_7] : memref<1x128xf32, #tpu.memory_space<vmem>>, vector<1x128xf32>
    %c0_8 = arith.constant 0 : index
    %c0_9 = arith.constant 0 : index
    %6 = vector.load %arg5[%c0_8, %c0_9] : memref<1x128xf32, #tpu.memory_space<vmem>>, vector<1x128xf32>
    %cst_10 = arith.constant dense<0.000000e+00> : vector<197x128xf32>
    %7 = tpu.matmul %4, %0, %cst_10 {dimension_numbers = #tpu.dot_dimension_numbers<[1], [0], [0], [1], [0, 0, 1, 1], [], []>} : vector<197x128xf32>, vector<128x128xf32>, vector<197x128xf32> -> vector<197x128xf32>
    %8 = arith.subf %4, %7 : vector<197x128xf32>
    %9 = arith.mulf %8, %8 : vector<197x128xf32>
    %cst_11 = arith.constant dense<0.000000e+00> : vector<197x128xf32>
    %10 = tpu.matmul %9, %0, %cst_11 {dimension_numbers = #tpu.dot_dimension_numbers<[1], [0], [0], [1], [0, 0, 1, 1], [], []>} : vector<197x128xf32>, vector<128x128xf32>, vector<197x128xf32> -> vector<197x128xf32>
    %cst_12 = arith.constant 9.99999997E-7 : f32
    %11 = vector.broadcast %cst_12 : f32 to vector<197x128xf32>
    %12 = arith.addf %10, %11 : vector<197x128xf32>
    %13 = math.rsqrt %12 : vector<197x128xf32>
    %14 = arith.mulf %8, %13 : vector<197x128xf32>
    %15 = vector.broadcast %5 : vector<1x128xf32> to vector<197x128xf32>
    %16 = arith.mulf %14, %15 : vector<197x128xf32>
    %17 = vector.broadcast %6 : vector<1x128xf32> to vector<197x128xf32>
    %18 = arith.addf %16, %17 : vector<197x128xf32>
    %c0_13 = arith.constant 0 : index
    %c0_14 = arith.constant 0 : index
    %19 = vector.load %arg6[%c0_13, %c0_14] : memref<16x197xbf16, #tpu.memory_space<vmem>>, vector<16x197xbf16>
    %20 = arith.truncf %18 : vector<197x128xf32> to vector<197x128xbf16>
    %cst_15 = arith.constant dense<0.000000e+00> : vector<16x128xf32>
    %21 = tpu.matmul %19, %20, %cst_15 {dimension_numbers = #tpu.dot_dimension_numbers<[1], [0], [0], [1], [0, 0, 1, 1], [], []>} : vector<16x197xbf16>, vector<197x128xbf16>, vector<16x128xf32> -> vector<16x128xf32>
    %c0_16 = arith.constant 0 : index
    %c0_17 = arith.constant 0 : index
    %22 = vector.load %arg7[%c0_16, %c0_17] : memref<16x1xf32, #tpu.memory_space<vmem>>, vector<16x1xf32>
    %23 = vector.broadcast %22 : vector<16x1xf32> to vector<16x128xf32>
    %24 = arith.addf %21, %23 : vector<16x128xf32>
    %cst_18 = arith.constant 5.000000e-01 : f32
    %25 = vector.broadcast %cst_18 : f32 to vector<16x128xf32>
    %26 = arith.mulf %25, %24 : vector<16x128xf32>
    %27 = arith.mulf %24, %24 : vector<16x128xf32>
    %28 = arith.mulf %27, %24 : vector<16x128xf32>
    %cst_19 = arith.constant 4.471500e-02 : f32
    %29 = vector.broadcast %cst_19 : f32 to vector<16x128xf32>
    %30 = arith.mulf %29, %28 : vector<16x128xf32>
    %31 = arith.addf %24, %30 : vector<16x128xf32>
    %cst_20 = arith.constant 0.797884583 : f32
    %32 = vector.broadcast %cst_20 : f32 to vector<16x128xf32>
    %33 = arith.mulf %32, %31 : vector<16x128xf32>
    %34 = math.tanh %33 : vector<16x128xf32>
    %cst_21 = arith.constant 1.000000e+00 : f32
    %35 = vector.broadcast %cst_21 : f32 to vector<16x128xf32>
    %36 = arith.addf %35, %34 : vector<16x128xf32>
    %37 = arith.mulf %26, %36 : vector<16x128xf32>
    %c0_22 = arith.constant 0 : index
    %c0_23 = arith.constant 0 : index
    %38 = vector.load %arg8[%c0_22, %c0_23] : memref<197x16xbf16, #tpu.memory_space<vmem>>, vector<197x16xbf16>
    %39 = arith.truncf %37 : vector<16x128xf32> to vector<16x128xbf16>
    %cst_24 = arith.constant dense<0.000000e+00> : vector<197x128xf32>
    %40 = tpu.matmul %38, %39, %cst_24 {dimension_numbers = #tpu.dot_dimension_numbers<[1], [0], [0], [1], [0, 0, 1, 1], [], []>} : vector<197x16xbf16>, vector<16x128xbf16>, vector<197x128xf32> -> vector<197x128xf32>
    %c0_25 = arith.constant 0 : index
    %c0_26 = arith.constant 0 : index
    %41 = vector.load %arg9[%c0_25, %c0_26] : memref<197x1xf32, #tpu.memory_space<vmem>>, vector<197x1xf32>
    %42 = vector.broadcast %41 : vector<197x1xf32> to vector<197x128xf32>
    %43 = arith.addf %40, %42 : vector<197x128xf32>
    %44 = arith.addf %4, %43 : vector<197x128xf32>
    %c0_27 = arith.constant 0 : index
    %c0_28 = arith.constant 0 : index
    %45 = vector.load %arg10[%c0_27, %c0_28] : memref<1x128xf32, #tpu.memory_space<vmem>>, vector<1x128xf32>
    %c0_29 = arith.constant 0 : index
    %c0_30 = arith.constant 0 : index
    %46 = vector.load %arg11[%c0_29, %c0_30] : memref<1x128xf32, #tpu.memory_space<vmem>>, vector<1x128xf32>
    %cst_31 = arith.constant dense<0.000000e+00> : vector<197x128xf32>
    %47 = tpu.matmul %44, %0, %cst_31 {dimension_numbers = #tpu.dot_dimension_numbers<[1], [0], [0], [1], [0, 0, 1, 1], [], []>} : vector<197x128xf32>, vector<128x128xf32>, vector<197x128xf32> -> vector<197x128xf32>
    %48 = arith.subf %44, %47 : vector<197x128xf32>
    %49 = arith.mulf %48, %48 : vector<197x128xf32>
    %cst_32 = arith.constant dense<0.000000e+00> : vector<197x128xf32>
    %50 = tpu.matmul %49, %0, %cst_32 {dimension_numbers = #tpu.dot_dimension_numbers<[1], [0], [0], [1], [0, 0, 1, 1], [], []>} : vector<197x128xf32>, vector<128x128xf32>, vector<197x128xf32> -> vector<197x128xf32>
    %cst_33 = arith.constant 9.99999997E-7 : f32
    %51 = vector.broadcast %cst_33 : f32 to vector<197x128xf32>
    %52 = arith.addf %50, %51 : vector<197x128xf32>
    %53 = math.rsqrt %52 : vector<197x128xf32>
    %54 = arith.mulf %48, %53 : vector<197x128xf32>
    %55 = vector.broadcast %45 : vector<1x128xf32> to vector<197x128xf32>
    %56 = arith.mulf %54, %55 : vector<197x128xf32>
    %57 = vector.broadcast %46 : vector<1x128xf32> to vector<197x128xf32>
    %58 = arith.addf %56, %57 : vector<197x128xf32>
    %59 = arith.truncf %58 : vector<197x128xf32> to vector<197x128xbf16>
    %c0_34 = arith.constant 0 : index
    %c0_35 = arith.constant 0 : index
    %60 = vector.load %arg12[%c0_34, %c0_35] : memref<128x512xbf16, #tpu.memory_space<vmem>>, vector<128x512xbf16>
    %cst_36 = arith.constant dense<0.000000e+00> : vector<197x512xf32>
    %61 = tpu.matmul %59, %60, %cst_36 {dimension_numbers = #tpu.dot_dimension_numbers<[1], [0], [0], [1], [0, 0, 1, 1], [], []>} : vector<197x128xbf16>, vector<128x512xbf16>, vector<197x512xf32> -> vector<197x512xf32>
    %c0_37 = arith.constant 0 : index
    %c0_38 = arith.constant 0 : index
    %62 = vector.load %arg13[%c0_37, %c0_38] : memref<1x512xf32, #tpu.memory_space<vmem>>, vector<1x512xf32>
    %63 = vector.broadcast %62 : vector<1x512xf32> to vector<197x512xf32>
    %64 = arith.addf %61, %63 : vector<197x512xf32>
    %cst_39 = arith.constant 5.000000e-01 : f32
    %65 = vector.broadcast %cst_39 : f32 to vector<197x512xf32>
    %66 = arith.mulf %65, %64 : vector<197x512xf32>
    %67 = arith.mulf %64, %64 : vector<197x512xf32>
    %68 = arith.mulf %67, %64 : vector<197x512xf32>
    %cst_40 = arith.constant 4.471500e-02 : f32
    %69 = vector.broadcast %cst_40 : f32 to vector<197x512xf32>
    %70 = arith.mulf %69, %68 : vector<197x512xf32>
    %71 = arith.addf %64, %70 : vector<197x512xf32>
    %cst_41 = arith.constant 0.797884583 : f32
    %72 = vector.broadcast %cst_41 : f32 to vector<197x512xf32>
    %73 = arith.mulf %72, %71 : vector<197x512xf32>
    %74 = math.tanh %73 : vector<197x512xf32>
    %cst_42 = arith.constant 1.000000e+00 : f32
    %75 = vector.broadcast %cst_42 : f32 to vector<197x512xf32>
    %76 = arith.addf %75, %74 : vector<197x512xf32>
    %77 = arith.mulf %66, %76 : vector<197x512xf32>
    %78 = arith.truncf %77 : vector<197x512xf32> to vector<197x512xbf16>
    %c0_43 = arith.constant 0 : index
    %c0_44 = arith.constant 0 : index
    %79 = vector.load %arg14[%c0_43, %c0_44] : memref<512x128xbf16, #tpu.memory_space<vmem>>, vector<512x128xbf16>
    %cst_45 = arith.constant dense<0.000000e+00> : vector<197x128xf32>
    %80 = tpu.matmul %78, %79, %cst_45 {dimension_numbers = #tpu.dot_dimension_numbers<[1], [0], [0], [1], [0, 0, 1, 1], [], []>} : vector<197x512xbf16>, vector<512x128xbf16>, vector<197x128xf32> -> vector<197x128xf32>
    %c0_46 = arith.constant 0 : index
    %c0_47 = arith.constant 0 : index
    %81 = vector.load %arg15[%c0_46, %c0_47] : memref<1x128xf32, #tpu.memory_space<vmem>>, vector<1x128xf32>
    %82 = vector.broadcast %81 : vector<1x128xf32> to vector<197x128xf32>
    %83 = arith.addf %80, %82 : vector<197x128xf32>
    %84 = arith.addf %44, %83 : vector<197x128xf32>
    %c0_48 = arith.constant 0 : index
    %c0_49 = arith.constant 0 : index
    %85 = vector.load %arg16[%c0_48, %c0_49] : memref<4x128xf32, #tpu.memory_space<vmem>>, vector<4x128xf32>
    %cst_50 = arith.constant dense<0.000000e+00> : vector<4x197xf32>
    %86 = tpu.matmul %85, %84, %cst_50 {dimension_numbers = #tpu.dot_dimension_numbers<[1], [1], [0], [0], [0, 0, 1, 0], [], []>} : vector<4x128xf32>, vector<197x128xf32>, vector<4x197xf32> -> vector<4x197xf32>
    %c0_51 = arith.constant 0 : index
    %c0_52 = arith.constant 0 : index
    %87 = vector.load %arg17[%c0_51, %c0_52] : memref<1x1xf32, #tpu.memory_space<vmem>>, vector<1x1xf32>
    %88 = vector.broadcast %87 : vector<1x1xf32> to vector<4x197xf32>
    %89 = arith.addf %86, %88 : vector<4x197xf32>
    %c0_53 = arith.constant 0 : index
    %c0_54 = arith.constant 0 : index
    %c0_55 = arith.constant 0 : index
    %90 = vector.load %arg18[%c0_53, %c0_54, %c0_55] : memref<1x4x197xf32, #tpu.memory_space<vmem>>, vector<1x4x197xf32>
    %91 = vector.shape_cast %90 : vector<1x4x197xf32> to vector<4x197xf32>
    %92 = vector.shape_cast %89 : vector<4x197xf32> to vector<1x4x197xf32>
    tpu.vector_store %arg18[%c0_53, %c0_54, %c0_55], %92 {strides = array<i32>} : memref<1x4x197xf32, #tpu.memory_space<vmem>>, vector<1x4x197xf32>,
    return
  }
  func.func @transform_0(%arg0: i32) -> (i32, i32, i32) {
    %c0_i32 = arith.constant 0 : i32
    %c0_i32_0 = arith.constant 0 : i32
    %c0_i32_1 = arith.constant 0 : i32
    return %arg0, %c0_i32, %c0_i32_0 : i32, i32, i32
  }
  func.func @transform_1(%arg0: i32) -> (i32, i32) {
    %c0_i32 = arith.constant 0 : i32
    %c0_i32_0 = arith.constant 0 : i32
    %c0_i32_1 = arith.constant 0 : i32
    return %c0_i32, %c0_i32_0 : i32, i32
  }
  func.func @transform_2(%arg0: i32) -> (i32, i32) {
    %c0_i32 = arith.constant 0 : i32
    %c0_i32_0 = arith.constant 0 : i32
    %c0_i32_1 = arith.constant 0 : i32
    return %c0_i32, %c0_i32_0 : i32, i32
  }
  func.func @transform_3(%arg0: i32) -> (i32, i32) {
    %c0_i32 = arith.constant 0 : i32
    %c0_i32_0 = arith.constant 0 : i32
    %c0_i32_1 = arith.constant 0 : i32
    return %c0_i32, %c0_i32_0 : i32, i32
  }
  func.func @transform_4(%arg0: i32) -> (i32, i32) {
    %c0_i32 = arith.constant 0 : i32
    %c0_i32_0 = arith.constant 0 : i32
    %c0_i32_1 = arith.constant 0 : i32
    return %c0_i32, %c0_i32_0 : i32, i32
  }
  func.func @transform_5(%arg0: i32) -> (i32, i32) {
    %c0_i32 = arith.constant 0 : i32
    %c0_i32_0 = arith.constant 0 : i32
    %c0_i32_1 = arith.constant 0 : i32
    return %c0_i32, %c0_i32_0 : i32, i32
  }
  func.func @transform_6(%arg0: i32) -> (i32, i32) {
    %c0_i32 = arith.constant 0 : i32
    %c0_i32_0 = arith.constant 0 : i32
    %c0_i32_1 = arith.constant 0 : i32
    return %c0_i32, %c0_i32_0 : i32, i32
  }
  func.func @transform_7(%arg0: i32) -> (i32, i32) {
    %c0_i32 = arith.constant 0 : i32
    %c0_i32_0 = arith.constant 0 : i32
    %c0_i32_1 = arith.constant 0 : i32
    return %c0_i32, %c0_i32_0 : i32, i32
  }
  func.func @transform_8(%arg0: i32) -> (i32, i32) {
    %c0_i32 = arith.constant 0 : i32
    %c0_i32_0 = arith.constant 0 : i32
    %c0_i32_1 = arith.constant 0 : i32
    return %c0_i32, %c0_i32_0 : i32, i32
  }
  func.func @transform_9(%arg0: i32) -> (i32, i32) {
    %c0_i32 = arith.constant 0 : i32
    %c0_i32_0 = arith.constant 0 : i32
    %c0_i32_1 = arith.constant 0 : i32
    return %c0_i32, %c0_i32_0 : i32, i32
  }
  func.func @transform_10(%arg0: i32) -> (i32, i32) {
    %c0_i32 = arith.constant 0 : i32
    %c0_i32_0 = arith.constant 0 : i32
    %c0_i32_1 = arith.constant 0 : i32
    return %c0_i32, %c0_i32_0 : i32, i32
  }
  func.func @transform_11(%arg0: i32) -> (i32, i32) {
    %c0_i32 = arith.constant 0 : i32
    %c0_i32_0 = arith.constant 0 : i32
    %c0_i32_1 = arith.constant 0 : i32
    return %c0_i32, %c0_i32_0 : i32, i32
  }
  func.func @transform_12(%arg0: i32) -> (i32, i32) {
    %c0_i32 = arith.constant 0 : i32
    %c0_i32_0 = arith.constant 0 : i32
    %c0_i32_1 = arith.constant 0 : i32
    return %c0_i32, %c0_i32_0 : i32, i32
  }
  func.func @transform_13(%arg0: i32) -> (i32, i32) {
    %c0_i32 = arith.constant 0 : i32
    %c0_i32_0 = arith.constant 0 : i32
    %c0_i32_1 = arith.constant 0 : i32
    return %c0_i32, %c0_i32_0 : i32, i32
  }
  func.func @transform_14(%arg0: i32) -> (i32, i32) {
    %c0_i32 = arith.constant 0 : i32
    %c0_i32_0 = arith.constant 0 : i32
    %c0_i32_1 = arith.constant 0 : i32
    return %c0_i32, %c0_i32_0 : i32, i32
  }
  func.func @transform_15(%arg0: i32) -> (i32, i32) {
    %c0_i32 = arith.constant 0 : i32
    %c0_i32_0 = arith.constant 0 : i32
    %c0_i32_1 = arith.constant 0 : i32
    return %c0_i32, %c0_i32_0 : i32, i32
  }
  func.func @transform_16(%arg0: i32) -> (i32, i32) {
    %c0_i32 = arith.constant 0 : i32
    %c0_i32_0 = arith.constant 0 : i32
    %c0_i32_1 = arith.constant 0 : i32
    return %c0_i32, %c0_i32_0 : i32, i32
  }
  func.func @transform_17(%arg0: i32) -> (i32, i32, i32) {
    %c0_i32 = arith.constant 0 : i32
    %c0_i32_0 = arith.constant 0 : i32
    %c0_i32_1 = arith.constant 0 : i32
    return %arg0, %c0_i32, %c0_i32_0 : i32, i32, i32
  }
}

</mosaic_0001>

<llo_original>
// kernel: predictor_forward.1
$region0: #{predictor_forward.1}
  #allocation0 [shape = 'u32[]', space=smem, size = 0x4, offset = 0x4, fixed_abs, tag = 'smem constant byte address 0x4 - core index']
  #allocation1 [shape = 'u32[144,128]{1,0:T(1,128)}', space=vmem, size = 0x12000, scoped, tag = 'internal scratch']
  #allocation2 [shape = 'f32[1,1]{1,0:T(1,128)S(1)}', space=vmem, size = 0x200, scoped, tag = 'scoped memory for predictor_forward.1']
  %s0 = inlined_call_operand.vmem [shape: f32[2,197,256], index: 0, kind: input, shape index: {}]
  %s1 = inlined_call_operand.vmem [shape: f32[256,128], index: 1, kind: input, shape index: {}]
  %s2 = inlined_call_operand.vmem [shape: f32[128,128], index: 2, kind: input, shape index: {}]
  %s3 = inlined_call_operand.vmem [shape: f32[1,128], index: 3, kind: input, shape index: {}]
  %s4 = inlined_call_operand.vmem [shape: f32[1,128], index: 4, kind: input, shape index: {}]
  %s5 = inlined_call_operand.vmem [shape: bf16[16,197], index: 5, kind: input, shape index: {}]
  %s6 = inlined_call_operand.vmem [shape: f32[16,1], index: 6, kind: input, shape index: {}]
  %s7 = inlined_call_operand.vmem [shape: bf16[197,16], index: 7, kind: input, shape index: {}]
  %s8 = inlined_call_operand.vmem [shape: f32[197,1], index: 8, kind: input, shape index: {}]
  %s9 = inlined_call_operand.vmem [shape: f32[1,128], index: 9, kind: input, shape index: {}]
  %s10 = inlined_call_operand.vmem [shape: f32[1,128], index: 10, kind: input, shape index: {}]
  %s11 = inlined_call_operand.vmem [shape: bf16[128,512], index: 11, kind: input, shape index: {}]
  %s12 = inlined_call_operand.vmem [shape: f32[1,512], index: 12, kind: input, shape index: {}]
  %s13 = inlined_call_operand.vmem [shape: bf16[512,128], index: 13, kind: input, shape index: {}]
  %s14 = inlined_call_operand.vmem [shape: f32[1,128], index: 14, kind: input, shape index: {}]
  %s15 = inlined_call_operand.vmem [shape: f32[4,128], index: 15, kind: input, shape index: {}]
  %s16 = inlined_call_operand.<no memory space> [shape: f32[1,1], index: 16, kind: input, shape index: {}]
  %s17 = inlined_call_operand.vmem [shape: f32[2,4,197], index: 17, kind: output, shape index: {}]
  %s18 = sld [smem:[#allocation0]]
  $region101: #{predictor_forward.1} parent=0
    _
  %s20 = ssub.s32 1, %s18
  %s21 = scalar_select 0, %s20, %s18
  %v22 = vstv %s16
  %23 = vst [vmem:[#allocation2] sm:$0x1] %v22
  loop: start=0, step=1, limit=4
  $region2: #{predictor_forward.1} parent=0 // loop_pre_header
    _
  $region3: #{predictor_forward.1} parent=0 // loop_header
    %s25 = sphi 0, %s29
    %p26 = scmp.ge.s32.totalorder %s25, 4
    %s35 = sphi 0, %s37
    %s38 = sphi 0, %s35
    %s39 = sphi 0, %s38
    %s55 = sphi 0, %s39
    %s59 = sphi 0, %s59
    %s61 = sphi 0, %s59
    %s62 = sphi 0, %s61
    %s76 = sphi 0, %s62
    %s80 = sphi 0, %s80
    %s82 = sphi 0, %s80
    %s83 = sphi 0, %s82
    %s97 = sphi 0, %s83
    %s101 = sphi 0, %s101
    %s103 = sphi 0, %s101
    %s104 = sphi 0, %s103
    %s118 = sphi 0, %s104
    %s122 = sphi 0, %s122
    %s124 = sphi 0, %s122
    %s125 = sphi 0, %s124
    %s139 = sphi 0, %s125
    %s143 = sphi 0, %s143
    %s145 = sphi 0, %s143
    %s146 = sphi 0, %s145
    %s160 = sphi 0, %s146
    %s164 = sphi 0, %s164
    %s166 = sphi 0, %s164
    %s167 = sphi 0, %s166
    %s181 = sphi 0, %s167
    %s185 = sphi 0, %s185
    %s187 = sphi 0, %s185
    %s188 = sphi 0, %s187
    %s202 = sphi 0, %s188
    %s206 = sphi 0, %s206
    %s208 = sphi 0, %s206
    %s209 = sphi 0, %s208
    %s223 = sphi 0, %s209
    %s227 = sphi 0, %s227
    %s229 = sphi 0, %s227
    %s230 = sphi 0, %s229
    %s244 = sphi 0, %s230
    %s248 = sphi 0, %s248
    %s250 = sphi 0, %s248
    %s251 = sphi 0, %s250
    %s265 = sphi 0, %s251
    %s269 = sphi 0, %s269
    %s271 = sphi 0, %s269
    %s272 = sphi 0, %s271
    %s286 = sphi 0, %s272
    %s290 = sphi 0, %s290
    %s292 = sphi 0, %s290
    %s293 = sphi 0, %s292
    %s307 = sphi 0, %s293
    %s311 = sphi 0, %s311
    %s313 = sphi 0, %s311
    %s314 = sphi 0, %s313
    %s328 = sphi 0, %s314
    %s332 = sphi 0, %s332
    %s334 = sphi 0, %s332
    %s335 = sphi 0, %s334
    %s349 = sphi 0, %s335
    %s353 = sphi 0, %s353
    %s355 = sphi 0, %s353
    %s356 = sphi 0, %s355
    %s370 = sphi 0, %s356
    %s374 = sphi 0, %s374
    %s376 = sphi 0, %s374
    %s377 = sphi 0, %s376
    %s391 = sphi 0, %s377
    %s397 = sphi 0, %s399
    %s400 = sphi 0, %s397
    %s401 = sphi 0, %s400
    %s417 = sphi 0, %s401
  $region4: #{predictor_forward.1} parent=0 // loop_header_branch
    %28 = sbr.rel (%p26) target = $region8
  $region5: #{predictor_forward.1} parent=0 // loop_body
    %s30 = ssub.s32 %s25, 1
    %s31 = ssub.s32 %s25, 2
    %s32 = sadd.s32 %s25, 1
    %s33 = ssub.s32 %s25, %s32
    %p34 = scmp.eq.s32.totalorder %s33, 0
    %s36 = sadd.s32 %s35, 1
    %s37 = scalar_select %p34, %s35, %s36
    %p40 = pneg %p34
    %p41 = scmp.eq.s32.totalorder %s25, 1
    %p42 = por %p40, %p41
    %p43 = scmp.ne.s32.totalorder %s35, %s38
    %p44 = scmp.eq.s32.totalorder %s25, 0
    %p45 = por %p43, %p44
    %p46 = scmp.ne.s32.totalorder %s35, %s38
    %p47 = scmp.eq.s32.totalorder %s30, 1
    %p48 = por %p46, %p47
    %p49 = scmp.ne.s32.totalorder %s38, %s39
    %p50 = scmp.eq.s32.totalorder %s30, 0
    %p51 = por %p49, %p50
    %p52 = scmp.ne.s32.totalorder %s38, %s39
    %p53 = scmp.eq.s32.totalorder %s31, 1
    %p54 = por %p52, %p53
    %p56 = scmp.ne.s32.totalorder %s39, %s55
    %p57 = scmp.eq.s32.totalorder %s31, 0
    %p58 = por %p56, %p57
    %s60 = sadd.s32 %s59, 1
    %p63 = scmp.eq.s32.totalorder %s25, 1
    %p64 = scmp.ne.s32.totalorder %s59, %s61
    %p65 = scmp.eq.s32.totalorder %s25, 0
    %p66 = por %p64, %p65
    %p67 = scmp.ne.s32.totalorder %s59, %s61
    %p68 = scmp.eq.s32.totalorder %s30, 1
    %p69 = por %p67, %p68
    %p70 = scmp.ne.s32.totalorder %s61, %s62
    %p71 = scmp.eq.s32.totalorder %s30, 0
    %p72 = por %p70, %p71
    %p73 = scmp.ne.s32.totalorder %s61, %s62
    %p74 = scmp.eq.s32.totalorder %s31, 1
    %p75 = por %p73, %p74
    %p77 = scmp.ne.s32.totalorder %s62, %s76
    %p78 = scmp.eq.s32.totalorder %s31, 0
    %p79 = por %p77, %p78
    %s81 = sadd.s32 %s80, 1
    %p84 = scmp.eq.s32.totalorder %s25, 1
    %p85 = scmp.ne.s32.totalorder %s80, %s82
    %p86 = scmp.eq.s32.totalorder %s25, 0
    %p87 = por %p85, %p86
    %p88 = scmp.ne.s32.totalorder %s80, %s82
    %p89 = scmp.eq.s32.totalorder %s30, 1
    %p90 = por %p88, %p89
    %p91 = scmp.ne.s32.totalorder %s82, %s83
    %p92 = scmp.eq.s32.totalorder %s30, 0
    %p93 = por %p91, %p92
    %p94 = scmp.ne.s32.totalorder %s82, %s83
    %p95 = scmp.eq.s32.totalorder %s31, 1
    %p96 = por %p94, %p95
    %p98 = scmp.ne.s32.totalorder %s83, %s97
    %p99 = scmp.eq.s32.totalorder %s31, 0
    %p100 = por %p98, %p99
    %s102 = sadd.s32 %s101, 1
    %p105 = scmp.eq.s32.totalorder %s25, 1
    %p106 = scmp.ne.s32.totalorder %s101, %s103
    %p107 = scmp.eq.s32.totalorder %s25, 0
    %p108 = por %p106, %p107
    %p109 = scmp.ne.s32.totalorder %s101, %s103
    %p110 = scmp.eq.s32.totalorder %s30, 1
    %p111 = por %p109, %p110
    %p112 = scmp.ne.s32.totalorder %s103, %s104
    %p113 = scmp.eq.s32.totalorder %s30, 0
    %p114 = por %p112, %p113
    %p115 = scmp.ne.s32.totalorder %s103, %s104
    %p116 = scmp.eq.s32.totalorder %s31, 1
    %p117 = por %p115, %p116
    %p119 = scmp.ne.s32.totalorder %s104, %s118
    %p120 = scmp.eq.s32.totalorder %s31, 0
    %p121 = por %p119, %p120
    %s123 = sadd.s32 %s122, 1
    %p126 = scmp.eq.s32.totalorder %s25, 1
    %p127 = scmp.ne.s32.totalorder %s122, %s124
    %p128 = scmp.eq.s32.totalorder %s25, 0
    %p129 = por %p127, %p128
    %p130 = scmp.ne.s32.totalorder %s122, %s124
    %p131 = scmp.eq.s32.totalorder %s30, 1
    %p132 = por %p130, %p131
    %p133 = scmp.ne.s32.totalorder %s124, %s125
    %p134 = scmp.eq.s32.totalorder %s30, 0
    %p135 = por %p133, %p134
    %p136 = scmp.ne.s32.totalorder %s124, %s125
    %p137 = scmp.eq.s32.totalorder %s31, 1
    %p138 = por %p136, %p137
    %p140 = scmp.ne.s32.totalorder %s125, %s139
    %p141 = scmp.eq.s32.totalorder %s31, 0
    %p142 = por %p140, %p141
    %s144 = sadd.s32 %s143, 1
    %p147 = scmp.eq.s32.totalorder %s25, 1
    %p148 = scmp.ne.s32.totalorder %s143, %s145
    %p149 = scmp.eq.s32.totalorder %s25, 0
    %p150 = por %p148, %p149
    %p151 = scmp.ne.s32.totalorder %s143, %s145
    %p152 = scmp.eq.s32.totalorder %s30, 1
    %p153 = por %p151, %p152
    %p154 = scmp.ne.s32.totalorder %s145, %s146
    %p155 = scmp.eq.s32.totalorder %s30, 0
    %p156 = por %p154, %p155
    %p157 = scmp.ne.s32.totalorder %s145, %s146
    %p158 = scmp.eq.s32.totalorder %s31, 1
    %p159 = por %p157, %p158
    %p161 = scmp.ne.s32.totalorder %s146, %s160
    %p162 = scmp.eq.s32.totalorder %s31, 0
    %p163 = por %p161, %p162
    %s165 = sadd.s32 %s164, 1
    %p168 = scmp.eq.s32.totalorder %s25, 1
    %p169 = scmp.ne.s32.totalorder %s164, %s166
    %p170 = scmp.eq.s32.totalorder %s25, 0
    %p171 = por %p169, %p170
    %p172 = scmp.ne.s32.totalorder %s164, %s166
    %p173 = scmp.eq.s32.totalorder %s30, 1
    %p174 = por %p172, %p173
    %p175 = scmp.ne.s32.totalorder %s166, %s167
    %p176 = scmp.eq.s32.totalorder %s30, 0
    %p177 = por %p175, %p176
    %p178 = scmp.ne.s32.totalorder %s166, %s167
    %p179 = scmp.eq.s32.totalorder %s31, 1
    %p180 = por %p178, %p179
    %p182 = scmp.ne.s32.totalorder %s167, %s181
    %p183 = scmp.eq.s32.totalorder %s31, 0
    %p184 = por %p182, %p183
    %s186 = sadd.s32 %s185, 1
    %p189 = scmp.eq.s32.totalorder %s25, 1
    %p190 = scmp.ne.s32.totalorder %s185, %s187
    %p191 = scmp.eq.s32.totalorder %s25, 0
    %p192 = por %p190, %p191
    %p193 = scmp.ne.s32.totalorder %s185, %s187
    %p194 = scmp.eq.s32.totalorder %s30, 1
    %p195 = por %p193, %p194
    %p196 = scmp.ne.s32.totalorder %s187, %s188
    %p197 = scmp.eq.s32.totalorder %s30, 0
    %p198 = por %p196, %p197
    %p199 = scmp.ne.s32.totalorder %s187, %s188
    %p200 = scmp.eq.s32.totalorder %s31, 1
    %p201 = por %p199, %p200
    %p203 = scmp.ne.s32.totalorder %s188, %s202
    %p204 = scmp.eq.s32.totalorder %s31, 0
    %p205 = por %p203, %p204
    %s207 = sadd.s32 %s206, 1
    %p210 = scmp.eq.s32.totalorder %s25, 1
    %p211 = scmp.ne.s32.totalorder %s206, %s208
    %p212 = scmp.eq.s32.totalorder %s25, 0
    %p213 = por %p211, %p212
    %p214 = scmp.ne.s32.totalorder %s206, %s208
    %p215 = scmp.eq.s32.totalorder %s30, 1
    %p216 = por %p214, %p215
    %p217 = scmp.ne.s32.totalorder %s208, %s209
    %p218 = scmp.eq.s32.totalorder %s30, 0
    %p219 = por %p217, %p218
    %p220 = scmp.ne.s32.totalorder %s208, %s209
    %p221 = scmp.eq.s32.totalorder %s31, 1
    %p222 = por %p220, %p221
    %p224 = scmp.ne.s32.totalorder %s209, %s223
    %p225 = scmp.eq.s32.totalorder %s31, 0
    %p226 = por %p224, %p225
    %s228 = sadd.s32 %s227, 1
    %p231 = scmp.eq.s32.totalorder %s25, 1
    %p232 = scmp.ne.s32.totalorder %s227, %s229
    %p233 = scmp.eq.s32.totalorder %s25, 0
    %p234 = por %p232, %p233
    %p235 = scmp.ne.s32.totalorder %s227, %s229
    %p236 = scmp.eq.s32.totalorder %s30, 1
    %p237 = por %p235, %p236
    %p238 = scmp.ne.s32.totalorder %s229, %s230
    %p239 = scmp.eq.s32.totalorder %s30, 0
    %p240 = por %p238, %p239
    %p241 = scmp.ne.s32.totalorder %s229, %s230
    %p242 = scmp.eq.s32.totalorder %s31, 1
    %p243 = por %p241, %p242
    %p245 = scmp.ne.s32.totalorder %s230, %s244
    %p246 = scmp.eq.s32.totalorder %s31, 0
    %p247 = por %p245, %p246
    %s249 = sadd.s32 %s248, 1
    %p252 = scmp.eq.s32.totalorder %s25, 1
    %p253 = scmp.ne.s32.totalorder %s248, %s250
    %p254 = scmp.eq.s32.totalorder %s25, 0
    %p255 = por %p253, %p254
    %p256 = scmp.ne.s32.totalorder %s248, %s250
    %p257 = scmp.eq.s32.totalorder %s30, 1
    %p258 = por %p256, %p257
    %p259 = scmp.ne.s32.totalorder %s250, %s251
    %p260 = scmp.eq.s32.totalorder %s30, 0
    %p261 = por %p259, %p260
    %p262 = scmp.ne.s32.totalorder %s250, %s251
    %p263 = scmp.eq.s32.totalorder %s31, 1
    %p264 = por %p262, %p263
    %p266 = scmp.ne.s32.totalorder %s251, %s265
    %p267 = scmp.eq.s32.totalorder %s31, 0
    %p268 = por %p266, %p267
    %s270 = sadd.s32 %s269, 1
    %p273 = scmp.eq.s32.totalorder %s25, 1
    %p274 = scmp.ne.s32.totalorder %s269, %s271
    %p275 = scmp.eq.s32.totalorder %s25, 0
    %p276 = por %p274, %p275
    %p277 = scmp.ne.s32.totalorder %s269, %s271
    %p278 = scmp.eq.s32.totalorder %s30, 1
    %p279 = por %p277, %p278
    %p280 = scmp.ne.s32.totalorder %s271, %s272
    %p281 = scmp.eq.s32.totalorder %s30, 0
    %p282 = por %p280, %p281
    %p283 = scmp.ne.s32.totalorder %s271, %s272
    %p284 = scmp.eq.s32.totalorder %s31, 1
    %p285 = por %p283, %p284
    %p287 = scmp.ne.s32.totalorder %s272, %s286
    %p288 = scmp.eq.s32.totalorder %s31, 0
    %p289 = por %p287, %p288
    %s291 = sadd.s32 %s290, 1
    %p294 = scmp.eq.s32.totalorder %s25, 1
    %p295 = scmp.ne.s32.totalorder %s290, %s292
    %p296 = scmp.eq.s32.totalorder %s25, 0
    %p297 = por %p295, %p296
    %p298 = scmp.ne.s32.totalorder %s290, %s292
    %p299 = scmp.eq.s32.totalorder %s30, 1
    %p300 = por %p298, %p299
    %p301 = scmp.ne.s32.totalorder %s292, %s293
    %p302 = scmp.eq.s32.totalorder %s30, 0
    %p303 = por %p301, %p302
    %p304 = scmp.ne.s32.totalorder %s292, %s293
    %p305 = scmp.eq.s32.totalorder %s31, 1
    %p306 = por %p304, %p305
    %p308 = scmp.ne.s32.totalorder %s293, %s307
    %p309 = scmp.eq.s32.totalorder %s31, 0
    %p310 = por %p308, %p309
    %s312 = sadd.s32 %s311, 1
    %p315 = scmp.eq.s32.totalorder %s25, 1
    %p316 = scmp.ne.s32.totalorder %s311, %s313
    %p317 = scmp.eq.s32.totalorder %s25, 0
    %p318 = por %p316, %p317
    %p319 = scmp.ne.s32.totalorder %s311, %s313
    %p320 = scmp.eq.s32.totalorder %s30, 1
    %p321 = por %p319, %p320
    %p322 = scmp.ne.s32.totalorder %s313, %s314
    %p323 = scmp.eq.s32.totalorder %s30, 0
    %p324 = por %p322, %p323
    %p325 = scmp.ne.s32.totalorder %s313, %s314
    %p326 = scmp.eq.s32.totalorder %s31, 1
    %p327 = por %p325, %p326
    %p329 = scmp.ne.s32.totalorder %s314, %s328
    %p330 = scmp.eq.s32.totalorder %s31, 0
    %p331 = por %p329, %p330
    %s333 = sadd.s32 %s332, 1
    %p336 = scmp.eq.s32.totalorder %s25, 1
    %p337 = scmp.ne.s32.totalorder %s332, %s334
    %p338 = scmp.eq.s32.totalorder %s25, 0
    %p339 = por %p337, %p338
    %p340 = scmp.ne.s32.totalorder %s332, %s334
    %p341 = scmp.eq.s32.totalorder %s30, 1
    %p342 = por %p340, %p341
    %p343 = scmp.ne.s32.totalorder %s334, %s335
    %p344 = scmp.eq.s32.totalorder %s30, 0
    %p345 = por %p343, %p344
    %p346 = scmp.ne.s32.totalorder %s334, %s335
    %p347 = scmp.eq.s32.totalorder %s31, 1
    %p348 = por %p346, %p347
    %p350 = scmp.ne.s32.totalorder %s335, %s349
    %p351 = scmp.eq.s32.totalorder %s31, 0
    %p352 = por %p350, %p351
    %s354 = sadd.s32 %s353, 1
    %p357 = scmp.eq.s32.totalorder %s25, 1
    %p358 = scmp.ne.s32.totalorder %s353, %s355
    %p359 = scmp.eq.s32.totalorder %s25, 0
    %p360 = por %p358, %p359
    %p361 = scmp.ne.s32.totalorder %s353, %s355
    %p362 = scmp.eq.s32.totalorder %s30, 1
    %p363 = por %p361, %p362
    %p364 = scmp.ne.s32.totalorder %s355, %s356
    %p365 = scmp.eq.s32.totalorder %s30, 0
    %p366 = por %p364, %p365
    %p367 = scmp.ne.s32.totalorder %s355, %s356
    %p368 = scmp.eq.s32.totalorder %s31, 1
    %p369 = por %p367, %p368
    %p371 = scmp.ne.s32.totalorder %s356, %s370
    %p372 = scmp.eq.s32.totalorder %s31, 0
    %p373 = por %p371, %p372
    %s375 = sadd.s32 %s374, 1
    %p378 = scmp.eq.s32.totalorder %s25, 1
    %p379 = scmp.ne.s32.totalorder %s374, %s376
    %p380 = scmp.eq.s32.totalorder %s25, 0
    %p381 = por %p379, %p380
    %p382 = scmp.ne.s32.totalorder %s374, %s376
    %p383 = scmp.eq.s32.totalorder %s30, 1
    %p384 = por %p382, %p383
    %p385 = scmp.ne.s32.totalorder %s376, %s377
    %p386 = scmp.eq.s32.totalorder %s30, 0
    %p387 = por %p385, %p386
    %p388 = scmp.ne.s32.totalorder %s376, %s377
    %p389 = scmp.eq.s32.totalorder %s31, 1
    %p390 = por %p388, %p389
    %p392 = scmp.ne.s32.totalorder %s377, %s391
    %p393 = scmp.eq.s32.totalorder %s31, 0
    %p394 = por %p392, %p393
    %s395 = ssub.s32 %s25, %s32
    %p396 = scmp.eq.s32.totalorder %s395, 0
    %s398 = sadd.s32 %s397, 1
    %s399 = scalar_select %p396, %s397, %s398
    %p402 = pneg %p396
    %p403 = scmp.eq.s32.totalorder %s25, 1
    %p404 = por %p402, %p403
    %p405 = scmp.ne.s32.totalorder %s397, %s400
    %p406 = scmp.eq.s32.totalorder %s25, 0
    %p407 = por %p405, %p406
    %p408 = scmp.ne.s32.totalorder %s397, %s400
    %p409 = scmp.eq.s32.totalorder %s30, 1
    %p410 = por %p408, %p409
    %p411 = scmp.ne.s32.totalorder %s400, %s401
    %p412 = scmp.eq.s32.totalorder %s30, 0
    %p413 = por %p411, %p412
    %p414 = scmp.ne.s32.totalorder %s400, %s401
    %p415 = scmp.eq.s32.totalorder %s31, 1
    %p416 = por %p414, %p415
    %p418 = scmp.ne.s32.totalorder %s401, %s417
    %p419 = scmp.eq.s32.totalorder %s31, 0
    %p420 = por %p418, %p419
    %p421 = scmp.le.s32.totalorder 1, %s25
    %p422 = scmp.lt.s32.totalorder %s25, 3
    %p423 = pnand %p421, %p422
    %p424 = pneg %p423
    // Predicated region
    $region9: #{predictor_forward.1} parent=5 // pred_check
      _
    $region10: #{predictor_forward.1} parent=5 // pred_check_branch
      %426 = sbr.rel (%p423) target = $region12
    $region11: #{predictor_forward.1} parent=5 // pred_region
      %s427 = ssub.s32 %s25, 1
      // Predicated region
      $region13: #{predictor_forward.1} parent=11 // pred_check
        %p428 = pneg %p72
      $region14: #{predictor_forward.1} parent=11 // pred_check_branch
        %430 = sbr.rel (%p428) target = $region16
      $region15: #{predictor_forward.1} parent=11 // pred_region
        _
      $region16: #{predictor_forward.1} parent=11 // pred_fallthru
        _
      // Predicated region
      $region17: #{predictor_forward.1} parent=11 // pred_check
        %p431 = pneg %p93
      $region18: #{predictor_forward.1} parent=11 // pred_check_branch
        %433 = sbr.rel (%p431) target = $region20
      $region19: #{predictor_forward.1} parent=11 // pred_region
        _
      $region20: #{predictor_forward.1} parent=11 // pred_fallthru
        _
      // Predicated region
      $region21: #{predictor_forward.1} parent=11 // pred_check
        %p434 = pneg %p114
      $region22: #{predictor_forward.1} parent=11 // pred_check_branch
        %436 = sbr.rel (%p434) target = $region24
      $region23: #{predictor_forward.1} parent=11 // pred_region
        _
      $region24: #{predictor_forward.1} parent=11 // pred_fallthru
        _
      // Predicated region
      $region25: #{predictor_forward.1} parent=11 // pred_check
        %p437 = pneg %p135
      $region26: #{predictor_forward.1} parent=11 // pred_check_branch
        %439 = sbr.rel (%p437) target = $region28
      $region27: #{predictor_forward.1} parent=11 // pred_region
        _
      $region28: #{predictor_forward.1} parent=11 // pred_fallthru
        _
      // Predicated region
      $region29: #{predictor_forward.1} parent=11 // pred_check
        %p440 = pneg %p156
      $region30: #{predictor_forward.1} parent=11 // pred_check_branch
        %442 = sbr.rel (%p440) target = $region32
      $region31: #{predictor_forward.1} parent=11 // pred_region
        _
      $region32: #{predictor_forward.1} parent=11 // pred_fallthru
        _
      // Predicated region
      $region33: #{predictor_forward.1} parent=11 // pred_check
        %p443 = pneg %p177
      $region34: #{predictor_forward.1} parent=11 // pred_check_branch
        %445 = sbr.rel (%p443) target = $region36
      $region35: #{predictor_forward.1} parent=11 // pred_region
        _
      $region36: #{predictor_forward.1} parent=11 // pred_fallthru
        _
      // Predicated region
      $region37: #{predictor_forward.1} parent=11 // pred_check
        %p446 = pneg %p198
      $region38: #{predictor_forward.1} parent=11 // pred_check_branch
        %448 = sbr.rel (%p446) target = $region40
      $region39: #{predictor_forward.1} parent=11 // pred_region
        _
      $region40: #{predictor_forward.1} parent=11 // pred_fallthru
        _
      // Predicated region
      $region41: #{predictor_forward.1} parent=11 // pred_check
        %p449 = pneg %p219
      $region42: #{predictor_forward.1} parent=11 // pred_check_branch
        %451 = sbr.rel (%p449) target = $region44
      $region43: #{predictor_forward.1} parent=11 // pred_region
        _
      $region44: #{predictor_forward.1} parent=11 // pred_fallthru
        _
      // Predicated region
      $region45: #{predictor_forward.1} parent=11 // pred_check
        %p452 = pneg %p240
      $region46: #{predictor_forward.1} parent=11 // pred_check_branch
        %454 = sbr.rel (%p452) target = $region48
      $region47: #{predictor_forward.1} parent=11 // pred_region
        _
      $region48: #{predictor_forward.1} parent=11 // pred_fallthru
        _
      // Predicated region
      $region49: #{predictor_forward.1} parent=11 // pred_check
        %p455 = pneg %p261
      $region50: #{predictor_forward.1} parent=11 // pred_check_branch
        %457 = sbr.rel (%p455) target = $region52
      $region51: #{predictor_forward.1} parent=11 // pred_region
        _
      $region52: #{predictor_forward.1} parent=11 // pred_fallthru
        _
      // Predicated region
      $region53: #{predictor_forward.1} parent=11 // pred_check
        %p458 = pneg %p282
      $region54: #{predictor_forward.1} parent=11 // pred_check_branch
        %460 = sbr.rel (%p458) target = $region56
      $region55: #{predictor_forward.1} parent=11 // pred_region
        _
      $region56: #{predictor_forward.1} parent=11 // pred_fallthru
        _
      // Predicated region
      $region57: #{predictor_forward.1} parent=11 // pred_check
        %p461 = pneg %p303
      $region58: #{predictor_forward.1} parent=11 // pred_check_branch
        %463 = sbr.rel (%p461) target = $region60
      $region59: #{predictor_forward.1} parent=11 // pred_region
        _
      $region60: #{predictor_forward.1} parent=11 // pred_fallthru
        _
      // Predicated region
      $region61: #{predictor_forward.1} parent=11 // pred_check
        %p464 = pneg %p324
      $region62: #{predictor_forward.1} parent=11 // pred_check_branch
        %466 = sbr.rel (%p464) target = $region64
      $region63: #{predictor_forward.1} parent=11 // pred_region
        _
      $region64: #{predictor_forward.1} parent=11 // pred_fallthru
        _
      // Predicated region
      $region65: #{predictor_forward.1} parent=11 // pred_check
        %p467 = pneg %p345
      $region66: #{predictor_forward.1} parent=11 // pred_check_branch
        %469 = sbr.rel (%p467) target = $region68
      $region67: #{predictor_forward.1} parent=11 // pred_region
        _
      $region68: #{predictor_forward.1} parent=11 // pred_fallthru
        _
      // Predicated region
      $region69: #{predictor_forward.1} parent=11 // pred_check
        %p470 = pneg %p366
      $region70: #{predictor_forward.1} parent=11 // pred_check_branch
        %472 = sbr.rel (%p470) target = $region72
      $region71: #{predictor_forward.1} parent=11 // pred_region
        _
      $region72: #{predictor_forward.1} parent=11 // pred_fallthru
        _
      // Predicated region
      $region73: #{predictor_forward.1} parent=11 // pred_check
        %p473 = pneg %p387
      $region74: #{predictor_forward.1} parent=11 // pred_check_branch
        %475 = sbr.rel (%p473) target = $region76
      $region75: #{predictor_forward.1} parent=11 // pred_region
        _
      $region76: #{predictor_forward.1} parent=11 // pred_fallthru
        _
    $region12: #{predictor_forward.1} parent=5 // pred_fallthru
      _
    %p476 = scmp.lt.s32.totalorder %s25, 2
    // Predicated region
    $region77: #{predictor_forward.1} parent=5 // pred_check
      %p477 = pneg %p476
    $region78: #{predictor_forward.1} parent=5 // pred_check_branch
      %479 = sbr.rel (%p477) target = $region80
    $region79: #{predictor_forward.1} parent=5 // pred_region
      // Predicated region
      $region81: #{predictor_forward.1} parent=79 // pred_check
        %p480 = pneg %p45
      $region82: #{predictor_forward.1} parent=79 // pred_check_branch
        %482 = sbr.rel (%p480) target = $region84
      $region83: #{predictor_forward.1} parent=79 // pred_region
        %p483 = scmp.lt.s32.totalorder %s25, 1
        %s484 = scalar_select %p483, %s25, 1
        %s485 = smul.addr %s484, 50
        %s486 = smul.addr %s485, 8
        %s487 = scalar_lea.vmem %s0, %s486
      $region84: #{predictor_forward.1} parent=79 // pred_fallthru
        _
    $region80: #{predictor_forward.1} parent=5 // pred_fallthru
      _
    %p488 = scmp.le.s32.totalorder 1, %s25
    %p489 = scmp.lt.s32.totalorder %s25, 3
    %p490 = pnand %p488, %p489
    %p491 = pneg %p490
    // Predicated region
    $region85: #{predictor_forward.1} parent=5 // pred_check
      _
    $region86: #{predictor_forward.1} parent=5 // pred_check_branch
      %493 = sbr.rel (%p490) target = $region88
    $region87: #{predictor_forward.1} parent=5 // pred_region
      %s494 = ssub.s32 %s25, 1
      %p495 = scmp.lt.s32.totalorder %s30, 1
      %s496 = scalar_select %p495, %s30, 1
      %s497 = smul.addr %s496, 50
      %s498 = smul.addr %s497, 8
      %s499 = scalar_lea.vmem %s0, %s498
      %p500 = pneg %p51
      %p501 = pneg %p48
      %p502 = pneg %p72
      %p503 = pneg %p69
      %p504 = pneg %p93
      %p505 = pneg %p90
      %p506 = pneg %p114
      %p507 = pneg %p111
      %p508 = pneg %p135
      %p509 = pneg %p132
      %p510 = pneg %p156
      %p511 = pneg %p153
      %p512 = pneg %p177
      %p513 = pneg %p174
      %p514 = pneg %p198
      %p515 = pneg %p195
      %p516 = pneg %p219
      %p517 = pneg %p216
      %p518 = pneg %p240
      %p519 = pneg %p237
      %p520 = pneg %p261
      %p521 = pneg %p258
      %p522 = pneg %p282
      %p523 = pneg %p279
      %p524 = pneg %p303
      %p525 = pneg %p300
      %p526 = pneg %p324
      %p527 = pneg %p321
      %p528 = pneg %p345
      %p529 = pneg %p342
      %p530 = pneg %p366
      %p531 = pneg %p363
      %p532 = pneg %p387
      %p533 = pneg %p384
      %p534 = pneg %p413
      %p535 = pneg %p410
      %p536 = scmp.lt.s32.totalorder %s30, 1
      %s537 = scalar_select %p536, %s30, 1
      %s538 = smul.addr %s537, 2
      %s539 = smul.addr %s538, 4
      %s540 = scalar_lea.vmem %s17, %s539
      %p541 = scmp.lt.s32.totalorder %s30, 1
      %s542 = scalar_select %p541, %s30, 1
      %s543 = smul.addr %s542, 50
      %s544 = smul.addr %s543, 8
      %s545 = scalar_lea.vmem %s0, %s544
      %p546 = scmp.lt.s32.totalorder %s30, 1
      %s547 = scalar_select %p546, %s30, 1
      %s548 = smul.addr %s547, 2
      %s549 = smul.addr %s548, 4
      %s550 = scalar_lea.vmem %s17, %s549
      %v552 = vld [vmem:[%s2] sm:$0xff]
      %v553 = vld [vmem:[%s2 + $0x8] sm:$0xff]
      %v554 = vld [vmem:[%s2 + $0x10] sm:$0xff]
      %v555 = vld [vmem:[%s2 + $0x18] sm:$0xff]
      %v556 = vld [vmem:[%s2 + $0x20] sm:$0xff]
      %v557 = vld [vmem:[%s2 + $0x28] sm:$0xff]
      %v558 = vld [vmem:[%s2 + $0x30] sm:$0xff]
      %v559 = vld [vmem:[%s2 + $0x38] sm:$0xff]
      %v560 = vld [vmem:[%s2 + $0x40] sm:$0xff]
      %v561 = vld [vmem:[%s2 + $0x48] sm:$0xff]
      %v562 = vld [vmem:[%s2 + $0x50] sm:$0xff]
      %v563 = vld [vmem:[%s2 + $0x58] sm:$0xff]
      %v564 = vld [vmem:[%s2 + $0x60] sm:$0xff]
      %v565 = vld [vmem:[%s2 + $0x68] sm:$0xff]
      %v566 = vld [vmem:[%s2 + $0x70] sm:$0xff]
      %v567 = vld [vmem:[%s2 + $0x78] sm:$0xff]
      %v568 = vld [vmem:[%s545] sm:$0xff]
      %v569 = vld [vmem:[%s545 + $0x8] sm:$0xff]
      %v570 = vld [vmem:[%s545 + $0x10] sm:$0xff]
      %v571 = vld [vmem:[%s545 + $0x18] sm:$0xff]
      %v572 = vld [vmem:[%s545 + $0x20] sm:$0xff]
      %v573 = vld [vmem:[%s545 + $0x28] sm:$0xff]
      %v574 = vld [vmem:[%s545 + $0x30] sm:$0xff]
      %v575 = vld [vmem:[%s545 + $0x38] sm:$0xff]
      %v576 = vld [vmem:[%s545 + $0x40] sm:$0xff]
      %v577 = vld [vmem:[%s545 + $0x48] sm:$0xff]
      %v578 = vld [vmem:[%s545 + $0x50] sm:$0xff]
      %v579 = vld [vmem:[%s545 + $0x58] sm:$0xff]
      %v580 = vld [vmem:[%s545 + $0x60] sm:$0xff]
      %v581 = vld [vmem:[%s545 + $0x68] sm:$0xff]
      %v582 = vld [vmem:[%s545 + $0x70] sm:$0xff]
      %v583 = vld [vmem:[%s545 + $0x78] sm:$0xff]
      %v584 = vld [vmem:[%s545 + $0x80] sm:$0xff]
      %v585 = vld [vmem:[%s545 + $0x88] sm:$0xff]
      %v586 = vld [vmem:[%s545 + $0x90] sm:$0xff]
      %v587 = vld [vmem:[%s545 + $0x98] sm:$0xff]
      %v588 = vld [vmem:[%s545 + $0xa0] sm:$0xff]
      %v589 = vld [vmem:[%s545 + $0xa8] sm:$0xff]
      %v590 = vld [vmem:[%s545 + $0xb0] sm:$0xff]
      %v591 = vld [vmem:[%s545 + $0xb8] sm:$0xff]
      %v592 = vld [vmem:[%s545 + $0xc0] sm:$0xff]
      %v593 = vld [vmem:[%s545 + $0xc8] sm:$0xff]
      %v594 = vld [vmem:[%s545 + $0xd0] sm:$0xff]
      %v595 = vld [vmem:[%s545 + $0xd8] sm:$0xff]
      %v596 = vld [vmem:[%s545 + $0xe0] sm:$0xff]
      %v597 = vld [vmem:[%s545 + $0xe8] sm:$0xff]
      %v598 = vld [vmem:[%s545 + $0xf0] sm:$0xff]
      %v599 = vld [vmem:[%s545 + $0xf8] sm:$0xff]
      %v600 = vld [vmem:[%s545 + $0x100] sm:$0xff]
      %v601 = vld [vmem:[%s545 + $0x108] sm:$0xff]
      %v602 = vld [vmem:[%s545 + $0x110] sm:$0xff]
      %v603 = vld [vmem:[%s545 + $0x118] sm:$0xff]
      %v604 = vld [vmem:[%s545 + $0x120] sm:$0xff]
      %v605 = vld [vmem:[%s545 + $0x128] sm:$0xff]
      %v606 = vld [vmem:[%s545 + $0x130] sm:$0xff]
      %v607 = vld [vmem:[%s545 + $0x138] sm:$0xff]
      %v608 = vld [vmem:[%s545 + $0x140] sm:$0xff]
      %v609 = vld [vmem:[%s545 + $0x148] sm:$0xff]
      %v610 = vld [vmem:[%s545 + $0x150] sm:$0xff]
      %v611 = vld [vmem:[%s545 + $0x158] sm:$0xff]
      %v612 = vld [vmem:[%s545 + $0x160] sm:$0xff]
      %v613 = vld [vmem:[%s545 + $0x168] sm:$0xff]
      %v614 = vld [vmem:[%s545 + $0x170] sm:$0xff]
      %v615 = vld [vmem:[%s545 + $0x178] sm:$0xff]
      %v616 = vld [vmem:[%s545 + $0x180] sm:$0x1f]
      %v617 = vld [vmem:[%s545 + $0x188] sm:$0x1f]
      %v618 = vld [vmem:[%s1] sm:$0xff]
      %v619 = vld [vmem:[%s1 + $0x8] sm:$0xff]
      %v620 = vld [vmem:[%s1 + $0x10] sm:$0xff]
      %v621 = vld [vmem:[%s1 + $0x18] sm:$0xff]
      %v622 = vld [vmem:[%s1 + $0x20] sm:$0xff]
      %v623 = vld [vmem:[%s1 + $0x28] sm:$0xff]
      %v624 = vld [vmem:[%s1 + $0x30] sm:$0xff]
      %v625 = vld [vmem:[%s1 + $0x38] sm:$0xff]
      %v626 = vld [vmem:[%s1 + $0x40] sm:$0xff]
      %v627 = vld [vmem:[%s1 + $0x48] sm:$0xff]
      %v628 = vld [vmem:[%s1 + $0x50] sm:$0xff]
      %v629 = vld [vmem:[%s1 + $0x58] sm:$0xff]
      %v630 = vld [vmem:[%s1 + $0x60] sm:$0xff]
      %v631 = vld [vmem:[%s1 + $0x68] sm:$0xff]
      %v632 = vld [vmem:[%s1 + $0x70] sm:$0xff]
      %v633 = vld [vmem:[%s1 + $0x78] sm:$0xff]
      %v634 = vld [vmem:[%s1 + $0x80] sm:$0xff]
      %v635 = vld [vmem:[%s1 + $0x88] sm:$0xff]
      %v636 = vld [vmem:[%s1 + $0x90] sm:$0xff]
      %v637 = vld [vmem:[%s1 + $0x98] sm:$0xff]
      %v638 = vld [vmem:[%s1 + $0xa0] sm:$0xff]
      %v639 = vld [vmem:[%s1 + $0xa8] sm:$0xff]
      %v640 = vld [vmem:[%s1 + $0xb0] sm:$0xff]
      %v641 = vld [vmem:[%s1 + $0xb8] sm:$0xff]
      %v642 = vld [vmem:[%s1 + $0xc0] sm:$0xff]
      %v643 = vld [vmem:[%s1 + $0xc8] sm:$0xff]
      %v644 = vld [vmem:[%s1 + $0xd0] sm:$0xff]
      %v645 = vld [vmem:[%s1 + $0xd8] sm:$0xff]
      %v646 = vld [vmem:[%s1 + $0xe0] sm:$0xff]
      %v647 = vld [vmem:[%s1 + $0xe8] sm:$0xff]
      %v648 = vld [vmem:[%s1 + $0xf0] sm:$0xff]
      %v649 = vld [vmem:[%s1 + $0xf8] sm:$0xff]
      %650 = vmatprep.subr.mxu0 0.0
      %651 = vmatpush1.msra.mxu0 %v618
      %652 = vmatprep.subr.mxu0 0.0
      %653 = vmatpush1.msra.mxu0 %v619
      %654 = vmatprep.subr.mxu0 0.0
      %655 = vmatpush1.msra.mxu0 %v620
      %656 = vmatprep.subr.mxu0 0.0
      %657 = vmatpush1.msra.mxu0 %v621
      %658 = vmatprep.subr.mxu0 0.0
      %659 = vmatpush1.msra.mxu0 %v622
      %660 = vmatprep.subr.mxu0 0.0
      %661 = vmatpush1.msra.mxu0 %v623
      %662 = vmatprep.subr.mxu0 0.0
      %663 = vmatpush1.msra.mxu0 %v624
      %664 = vmatprep.subr.mxu0 0.0
      %665 = vmatpush1.msra.mxu0 %v625
      %666 = vmatprep.subr.mxu0 0.0
      %667 = vmatpush1.msra.mxu0 %v626
      %668 = vmatprep.subr.mxu0 0.0
      %669 = vmatpush1.msra.mxu0 %v627
      %670 = vmatprep.subr.mxu0 0.0
      %671 = vmatpush1.msra.mxu0 %v628
      %672 = vmatprep.subr.mxu0 0.0
      %673 = vmatpush1.msra.mxu0 %v629
      %674 = vmatprep.subr.mxu0 0.0
      %675 = vmatpush1.msra.mxu0 %v630
      %676 = vmatprep.subr.mxu0 0.0
      %677 = vmatpush1.msra.mxu0 %v631
      %678 = vmatprep.subr.mxu0 0.0
      %679 = vmatpush1.msra.mxu0 %v632
      %680 = vmatprep.subr.mxu0 0.0
      %681 = vmatpush1.msra.mxu0 %v633
      %682 = vmatprep.subr.mxu0 0.0
      %683 = vmatpush1.msra.mxu0 %v634
      %684 = vmatprep.subr.mxu0 0.0
      %685 = vmatpush1.msra.mxu0 %v635
      %686 = vmatprep.subr.mxu0 0.0
      %687 = vmatpush1.msra.mxu0 %v636
      %688 = vmatprep.subr.mxu0 0.0
      %689 = vmatpush1.msra.mxu0 %v637
      %690 = vmatprep.subr.mxu0 0.0
      %691 = vmatpush1.msra.mxu0 %v638
      %692 = vmatprep.subr.mxu0 0.0
      %693 = vmatpush1.msra.mxu0 %v639
      %694 = vmatprep.subr.mxu0 0.0
      %695 = vmatpush1.msra.mxu0 %v640
      %696 = vmatprep.subr.mxu0 0.0
      %697 = vmatpush1.msra.mxu0 %v641
      %698 = vmatprep.subr.mxu0 0.0
      %699 = vmatpush1.msra.mxu0 %v642
      %700 = vmatprep.subr.mxu0 0.0
      %701 = vmatpush1.msra.mxu0 %v643
      %702 = vmatprep.subr.mxu0 0.0
      %703 = vmatpush1.msra.mxu0 %v644
      %704 = vmatprep.subr.mxu0 0.0
      %705 = vmatpush1.msra.mxu0 %v645
      %706 = vmatprep.subr.mxu0 0.0
      %707 = vmatpush1.msra.mxu0 %v646
      %708 = vmatprep.subr.mxu0 0.0
      %709 = vmatpush1.msra.mxu0 %v647
      %710 = vmatprep.subr.mxu0 0.0
      %711 = vmatpush1.msra.mxu0 %v648
      %712 = vmatprep.subr.mxu0 0.0
      %713 = vmatpush1.msra.mxu0 %v649
      %714 = vmatprep.mubr.f32.mxu0 %v569
      %715 = vmatmul.mubr.f32.gmra.mrb[0].mxu0 %v568
      %v716 = vpop.f32.mrb[0].mxu0
      %v717 = vadd.f32 0.0, %v716
      %v718 = vpop.f32.mrb[0].mxu0
      %719 = vmatprep.mubr.f32.mxu0 %v571
      %720 = vmatmul.mubr.f32.gmra.mrb[0].mxu0 %v570
      %v721 = vpop.f32.mrb[0].mxu0
      %v722 = vadd.f32 0.0, %v721
      %v723 = vpop.f32.mrb[0].mxu0
      %724 = vmatprep.mubr.f32.mxu0 %v573
      %725 = vmatmul.mubr.f32.gmra.mrb[0].mxu0 %v572
      %v726 = vpop.f32.mrb[0].mxu0
      %v727 = vadd.f32 0.0, %v726
      %v728 = vpop.f32.mrb[0].mxu0
      %729 = vmatprep.mubr.f32.mxu0 %v575
      %730 = vmatmul.mubr.f32.gmra.mrb[0].mxu0 %v574
      %v731 = vpop.f32.mrb[0].mxu0
      %v732 = vadd.f32 0.0, %v731
      %v733 = vpop.f32.mrb[0].mxu0
      %734 = vmatprep.mubr.f32.mxu0 %v577
      %735 = vmatmul.mubr.f32.gmra.mrb[0].mxu0 %v576
      %v736 = vpop.f32.mrb[0].mxu0
      %v737 = vadd.f32 0.0, %v736
      %v738 = vpop.f32.mrb[0].mxu0
      %739 = vmatprep.mubr.f32.mxu0 %v579
      %740 = vmatmul.mubr.f32.gmra.mrb[0].mxu0 %v578
      %v741 = vpop.f32.mrb[0].mxu0
      %v742 = vadd.f32 0.0, %v741
      %v743 = vpop.f32.mrb[0].mxu0
      %744 = vmatprep.mubr.f32.mxu0 %v581
      %745 = vmatmul.mubr.f32.gmra.mrb[0].mxu0 %v580
      %v746 = vpop.f32.mrb[0].mxu0
      %v747 = vadd.f32 0.0, %v746
      %v748 = vpop.f32.mrb[0].mxu0
      %749 = vmatprep.mubr.f32.mxu0 %v583
      %750 = vmatmul.mubr.f32.gmra.mrb[0].mxu0 %v582
      %v751 = vpop.f32.mrb[0].mxu0
      %v752 = vadd.f32 0.0, %v751
      %v753 = vpop.f32.mrb[0].mxu0
      %754 = vmatprep.mubr.f32.mxu0 %v585
      %755 = vmatmul.mubr.f32.gmra.mrb[0].mxu0 %v584
      %v756 = vpop.f32.mrb[0].mxu0
      %v757 = vadd.f32 0.0, %v756
      %v758 = vpop.f32.mrb[0].mxu0
      %759 = vmatprep.mubr.f32.mxu0 %v587
      %760 = vmatmul.mubr.f32.gmra.mrb[0].mxu0 %v586
      %v761 = vpop.f32.mrb[0].mxu0
      %v762 = vadd.f32 0.0, %v761
      %v763 = vpop.f32.mrb[0].mxu0
      %764 = vmatprep.mubr.f32.mxu0 %v589
      %765 = vmatmul.mubr.f32.gmra.mrb[0].mxu0 %v588
      %v766 = vpop.f32.mrb[0].mxu0
      %v767 = vadd.f32 0.0, %v766
      %v768 = vpop.f32.mrb[0].mxu0
      %769 = vmatprep.mubr.f32.mxu0 %v591
      %770 = vmatmul.mubr.f32.gmra.mrb[0].mxu0 %v590
      %v771 = vpop.f32.mrb[0].mxu0
      %v772 = vadd.f32 0.0, %v771
      %v773 = vpop.f32.mrb[0].mxu0
      %774 = vmatprep.mubr.f32.mxu0 %v593
      %775 = vmatmul.mubr.f32.gmra.mrb[0].mxu0 %v592
      %v776 = vpop.f32.mrb[0].mxu0
      %v777 = vadd.f32 0.0, %v776
      %v778 = vpop.f32.mrb[0].mxu0
      %779 = vmatprep.mubr.f32.mxu0 %v595
      %780 = vmatmul.mubr.f32.gmra.mrb[0].mxu0 %v594
      %v781 = vpop.f32.mrb[0].mxu0
      %v782 = vadd.f32 0.0, %v781
      %v783 = vpop.f32.mrb[0].mxu0
      %784 = vmatprep.mubr.f32.mxu0 %v597
      %785 = vmatmul.mubr.f32.gmra.mrb[0].mxu0 %v596
      %v786 = vpop.f32.mrb[0].mxu0
      %v787 = vadd.f32 0.0, %v786
      %v788 = vpop.f32.mrb[0].mxu0
      %789 = vmatprep.mubr.f32.mxu0 %v599
      %790 = vmatmul.mubr.f32.gmra.mrb[0].mxu0 %v598
      %v791 = vpop.f32.mrb[0].mxu0
      %v792 = vadd.f32 0.0, %v791
      %v793 = vpop.f32.mrb[0].mxu0
      %794 = vmatprep.mubr.f32.mxu0 %v601
      %795 = vmatmul.mubr.f32.gmra.mrb[0].mxu0 %v600
      %v796 = vpop.f32.mrb[0].mxu0
      %v797 = vadd.f32 0.0, %v796
      %v798 = vpop.f32.mrb[0].mxu0
      %799 = vmatprep.mubr.f32.mxu0 %v603
      %800 = vmatmul.mubr.f32.gmra.mrb[0].mxu0 %v602
      %v801 = vpop.f32.mrb[0].mxu0
      %v802 = vadd.f32 0.0, %v801
      %v803 = vpop.f32.mrb[0].mxu0
      %804 = vmatprep.mubr.f32.mxu0 %v605
      %805 = vmatmul.mubr.f32.gmra.mrb[0].mxu0 %v604
      %v806 = vpop.f32.mrb[0].mxu0
      %v807 = vadd.f32 0.0, %v806
      %v808 = vpop.f32.mrb[0].mxu0
      %809 = vmatprep.mubr.f32.mxu0 %v607
      %810 = vmatmul.mubr.f32.gmra.mrb[0].mxu0 %v606
      %v811 = vpop.f32.mrb[0].mxu0
      %v812 = vadd.f32 0.0, %v811
      %v813 = vpop.f32.mrb[0].mxu0
      %814 = vmatprep.mubr.f32.mxu0 %v609
      %815 = vmatmul.mubr.f32.gmra.mrb[0].mxu0 %v608
      %v816 = vpop.f32.mrb[0].mxu0
      %v817 = vadd.f32 0.0, %v816
      %v818 = vpop.f32.mrb[0].mxu0
      %819 = vmatprep.mubr.f32.mxu0 %v611
      %820 = vmatmul.mubr.f32.gmra.mrb[0].mxu0 %v610
      %v821 = vpop.f32.mrb[0].mxu0
      %v822 = vadd.f32 0.0, %v821
      %v823 = vpop.f32.mrb[0].mxu0
      %824 = vmatprep.mubr.f32.mxu0 %v613
      %825 = vmatmul.mubr.f32.gmra.mrb[0].mxu0 %v612
      %v826 = vpop.f32.mrb[0].mxu0
      %v827 = vadd.f32 0.0, %v826
      %v828 = vpop.f32.mrb[0].mxu0
      %829 = vmatprep.mubr.f32.mxu0 %v615
      %830 = vmatmul.mubr.f32.gmra.mrb[0].mxu0 %v614
      %v831 = vpop.f32.mrb[0].mxu0
      %v832 = vadd.f32 0.0, %v831
      %v833 = vpop.f32.mrb[0].mxu0
      %834 = vmatprep.mubr.f32.mxu0 %v617
      %835 = vmatmul.mubr.f32.gmra.mrb[0].mxu0 %v616
      %v836 = vpop.f32.mrb[0].mxu0
      %v837 = vadd.f32 0.0, %v836
      %v838 = vpop.f32.mrb[0].mxu0
      %839 = vdwg.mxu0
      %v840 = vld [vmem:[%s3] sm:$0x1]
      %v841 = vld [vmem:[%s4] sm:$0x1]
      %842 = vmatprep.subr.mxu0 0.0
      %843 = vmatpush1.msra.mxu0 %v552
      %844 = vmatprep.subr.mxu0 0.0
      %845 = vmatpush1.msra.mxu0 %v553
      %846 = vmatprep.subr.mxu0 0.0
      %847 = vmatpush1.msra.mxu0 %v554
      %848 = vmatprep.subr.mxu0 0.0
      %849 = vmatpush1.msra.mxu0 %v555
      %850 = vmatprep.subr.mxu0 0.0
      %851 = vmatpush1.msra.mxu0 %v556
      %852 = vmatprep.subr.mxu0 0.0
      %853 = vmatpush1.msra.mxu0 %v557
      %854 = vmatprep.subr.mxu0 0.0
      %855 = vmatpush1.msra.mxu0 %v558
      %856 = vmatprep.subr.mxu0 0.0
      %857 = vmatpush1.msra.mxu0 %v559
      %858 = vmatprep.subr.mxu0 0.0
      %859 = vmatpush1.msra.mxu0 %v560
      %860 = vmatprep.subr.mxu0 0.0
      %861 = vmatpush1.msra.mxu0 %v561
      %862 = vmatprep.subr.mxu0 0.0
      %863 = vmatpush1.msra.mxu0 %v562
      %864 = vmatprep.subr.mxu0 0.0
      %865 = vmatpush1.msra.mxu0 %v563
      %866 = vmatprep.subr.mxu0 0.0
      %867 = vmatpush1.msra.mxu0 %v564
      %868 = vmatprep.subr.mxu0 0.0
      %869 = vmatpush1.msra.mxu0 %v565
      %870 = vmatprep.subr.mxu0 0.0
      %871 = vmatpush1.msra.mxu0 %v566
      %872 = vmatprep.subr.mxu0 0.0
      %873 = vmatpush1.msra.mxu0 %v567
      %874 = vmatprep.subr.mxu0 0.0
      %875 = vmatpush1.msra.mxu0 0.0
      %876 = vmatprep.subr.mxu0 0.0
      %877 = vmatpush1.msra.mxu0 0.0
      %878 = vmatprep.subr.mxu0 0.0
      %879 = vmatpush1.msra.mxu0 0.0
      %880 = vmatprep.subr.mxu0 0.0
      %881 = vmatpush1.msra.mxu0 0.0
      %882 = vmatprep.subr.mxu0 0.0
      %883 = vmatpush1.msra.mxu0 0.0
      %884 = vmatprep.subr.mxu0 0.0
      %885 = vmatpush1.msra.mxu0 0.0
      %886 = vmatprep.subr.mxu0 0.0
      %887 = vmatpush1.msra.mxu0 0.0
      %888 = vmatprep.subr.mxu0 0.0
      %889 = vmatpush1.msra.mxu0 0.0
      %890 = vmatprep.subr.mxu0 0.0
      %891 = vmatpush1.msra.mxu0 0.0
      %892 = vmatprep.subr.mxu0 0.0
      %893 = vmatpush1.msra.mxu0 0.0
      %894 = vmatprep.subr.mxu0 0.0
      %895 = vmatpush1.msra.mxu0 0.0
      %896 = vmatprep.subr.mxu0 0.0
      %897 = vmatpush1.msra.mxu0 0.0
      %898 = vmatprep.subr.mxu0 0.0
      %899 = vmatpush1.msra.mxu0 0.0
      %900 = vmatprep.subr.mxu0 0.0
      %901 = vmatpush1.msra.mxu0 0.0
      %902 = vmatprep.subr.mxu0 0.0
      %903 = vmatpush1.msra.mxu0 0.0
      %904 = vmatprep.subr.mxu0 0.0
      %905 = vmatpush1.msra.mxu0 0.0
      %906 = vmatprep.mubr.f32.mxu0 0.0
      %907 = vmatmul.mubr.f32.gmra.mrb[0].mxu0 %v717
      %v908 = vpop.f32.mrb[0].mxu0
      %v909 = vadd.f32 0.0, %v908
      %v910 = vpop.f32.mrb[0].mxu0
      %911 = vmatprep.mubr.f32.mxu0 0.0
      %912 = vmatmul.mubr.f32.gmra.mrb[0].mxu0 %v722
      %v913 = vpop.f32.mrb[0].mxu0
      %v914 = vadd.f32 0.0, %v913
      %v915 = vpop.f32.mrb[0].mxu0
      %916 = vmatprep.mubr.f32.mxu0 0.0
      %917 = vmatmul.mubr.f32.gmra.mrb[0].mxu0 %v727
      %v918 = vpop.f32.mrb[0].mxu0
      %v919 = vadd.f32 0.0, %v918
      %v920 = vpop.f32.mrb[0].mxu0
      %921 = vmatprep.mubr.f32.mxu0 0.0
      %922 = vmatmul.mubr.f32.gmra.mrb[0].mxu0 %v732
      %v923 = vpop.f32.mrb[0].mxu0
      %v924 = vadd.f32 0.0, %v923
      %v925 = vpop.f32.mrb[0].mxu0
      %926 = vmatprep.mubr.f32.mxu0 0.0
      %927 = vmatmul.mubr.f32.gmra.mrb[0].mxu0 %v737
      %v928 = vpop.f32.mrb[0].mxu0
      %v929 = vadd.f32 0.0, %v928
      %v930 = vpop.f32.mrb[0].mxu0
      %931 = vmatprep.mubr.f32.mxu0 0.0
      %932 = vmatmul.mubr.f32.gmra.mrb[0].mxu0 %v742
      %v933 = vpop.f32.mrb[0].mxu0
      %v934 = vadd.f32 0.0, %v933
      %v935 = vpop.f32.mrb[0].mxu0
      %936 = vmatprep.mubr.f32.mxu0 0.0
      %937 = vmatmul.mubr.f32.gmra.mrb[0].mxu0 %v747
      %v938 = vpop.f32.mrb[0].mxu0
      %v939 = vadd.f32 0.0, %v938
      %v940 = vpop.f32.mrb[0].mxu0
      %941 = vmatprep.mubr.f32.mxu0 0.0
      %942 = vmatmul.mubr.f32.gmra.mrb[0].mxu0 %v752
      %v943 = vpop.f32.mrb[0].mxu0
      %v944 = vadd.f32 0.0, %v943
      %v945 = vpop.f32.mrb[0].mxu0
      %946 = vmatprep.mubr.f32.mxu0 0.0
      %947 = vmatmul.mubr.f32.gmra.mrb[0].mxu0 %v757
      %v948 = vpop.f32.mrb[0].mxu0
      %v949 = vadd.f32 0.0, %v948
      %v950 = vpop.f32.mrb[0].mxu0
      %951 = vmatprep.mubr.f32.mxu0 0.0
      %952 = vmatmul.mubr.f32.gmra.mrb[0].mxu0 %v762
      %v953 = vpop.f32.mrb[0].mxu0
      %v954 = vadd.f32 0.0, %v953
      %v955 = vpop.f32.mrb[0].mxu0
      %956 = vmatprep.mubr.f32.mxu0 0.0
      %957 = vmatmul.mubr.f32.gmra.mrb[0].mxu0 %v767
      %v958 = vpop.f32.mrb[0].mxu0
      %v959 = vadd.f32 0.0, %v958
      %v960 = vpop.f32.mrb[0].mxu0
      %961 = vmatprep.mubr.f32.mxu0 0.0
      %962 = vmatmul.mubr.f32.gmra.mrb[0].mxu0 %v772
      %v963 = vpop.f32.mrb[0].mxu0
      %v964 = vadd.f32 0.0, %v963
      %v965 = vpop.f32.mrb[0].mxu0
      %966 = vmatprep.mubr.f32.mxu0 0.0
      %967 = vmatmul.mubr.f32.gmra.mrb[0].mxu0 %v777
      %v968 = vpop.f32.mrb[0].mxu0
      %v969 = vadd.f32 0.0, %v968
      %v970 = vpop.f32.mrb[0].mxu0
      %971 = vmatprep.mubr.f32.mxu0 0.0
      %972 = vmatmul.mubr.f32.gmra.mrb[0].mxu0 %v782
      %v973 = vpop.f32.mrb[0].mxu0
      %v974 = vadd.f32 0.0, %v973
      %v975 = vpop.f32.mrb[0].mxu0
      %976 = vmatprep.mubr.f32.mxu0 0.0
      %977 = vmatmul.mubr.f32.gmra.mrb[0].mxu0 %v787
      %v978 = vpop.f32.mrb[0].mxu0
      %v979 = vadd.f32 0.0, %v978
      %v980 = vpop.f32.mrb[0].mxu0
      %981 = vmatprep.mubr.f32.mxu0 0.0
      %982 = vmatmul.mubr.f32.gmra.mrb[0].mxu0 %v792
      %v983 = vpop.f32.mrb[0].mxu0
      %v984 = vadd.f32 0.0, %v983
      %v985 = vpop.f32.mrb[0].mxu0
      %986 = vmatprep.mubr.f32.mxu0 0.0
      %987 = vmatmul.mubr.f32.gmra.mrb[0].mxu0 %v797
      %v988 = vpop.f32.mrb[0].mxu0
      %v989 = vadd.f32 0.0, %v988
      %v990 = vpop.f32.mrb[0].mxu0
      %991 = vmatprep.mubr.f32.mxu0 0.0
      %992 = vmatmul.mubr.f32.gmra.mrb[0].mxu0 %v802
      %v993 = vpop.f32.mrb[0].mxu0
      %v994 = vadd.f32 0.0, %v993
      %v995 = vpop.f32.mrb[0].mxu0
      %996 = vmatprep.mubr.f32.mxu0 0.0
      %997 = vmatmul.mubr.f32.gmra.mrb[0].mxu0 %v807
      %v998 = vpop.f32.mrb[0].mxu0
      %v999 = vadd.f32 0.0, %v998
      %v1000 = vpop.f32.mrb[0].mxu0
      %1001 = vmatprep.mubr.f32.mxu0 0.0
      %1002 = vmatmul.mubr.f32.gmra.mrb[0].mxu0 %v812
      %v1003 = vpop.f32.mrb[0].mxu0
      %v1004 = vadd.f32 0.0, %v1003
      %v1005 = vpop.f32.mrb[0].mxu0
      %1006 = vmatprep.mubr.f32.mxu0 0.0
      %1007 = vmatmul.mubr.f32.gmra.mrb[0].mxu0 %v817
      %v1008 = vpop.f32.mrb[0].mxu0
      %v1009 = vadd.f32 0.0, %v1008
      %v1010 = vpop.f32.mrb[0].mxu0
      %1011 = vmatprep.mubr.f32.mxu0 0.0
      %1012 = vmatmul.mubr.f32.gmra.mrb[0].mxu0 %v822
      %v1013 = vpop.f32.mrb[0].mxu0
      %v1014 = vadd.f32 0.0, %v1013
      %v1015 = vpop.f32.mrb[0].mxu0
      %1016 = vmatprep.mubr.f32.mxu0 0.0
      %1017 = vmatmul.mubr.f32.gmra.mrb[0].mxu0 %v827
      %v1018 = vpop.f32.mrb[0].mxu0
      %v1019 = vadd.f32 0.0, %v1018
      %v1020 = vpop.f32.mrb[0].mxu0
      %1021 = vmatprep.mubr.f32.mxu0 0.0
      %1022 = vmatmul.mubr.f32.gmra.mrb[0].mxu0 %v832
      %v1023 = vpop.f32.mrb[0].mxu0
      %v1024 = vadd.f32 0.0, %v1023
      %v1025 = vpop.f32.mrb[0].mxu0
      %1026 = vmatprep.mubr.f32.mxu0 0.0
      %1027 = vmatmul.mubr.f32.gmra.mrb[0].mxu0 %v837
      %v1028 = vpop.f32.mrb[0].mxu0
      %v1029 = vadd.f32 0.0, %v1028
      %v1030 = vpop.f32.mrb[0].mxu0
      %1031 = vdwg.mxu0
      %v1032 = vsub.f32 %v717, %v909
      %v1033 = vsub.f32 %v722, %v914
      %v1034 = vsub.f32 %v727, %v919
      %v1035 = vsub.f32 %v732, %v924
      %v1036 = vsub.f32 %v737, %v929
      %v1037 = vsub.f32 %v742, %v934
      %v1038 = vsub.f32 %v747, %v939
      %v1039 = vsub.f32 %v752, %v944
      %v1040 = vsub.f32 %v757, %v949
      %v1041 = vsub.f32 %v762, %v954
      %v1042 = vsub.f32 %v767, %v959
      %v1043 = vsub.f32 %v772, %v964
      %v1044 = vsub.f32 %v777, %v969
      %v1045 = vsub.f32 %v782, %v974
      %v1046 = vsub.f32 %v787, %v979
      %v1047 = vsub.f32 %v792, %v984
      %v1048 = vsub.f32 %v797, %v989
      %v1049 = vsub.f32 %v802, %v994
      %v1050 = vsub.f32 %v807, %v999
      %v1051 = vsub.f32 %v812, %v1004
      %v1052 = vsub.f32 %v817, %v1009
      %v1053 = vsub.f32 %v822, %v1014
      %v1054 = vsub.f32 %v827, %v1019
      %v1055 = vsub.f32 %v832, %v1024
      %v1056 = vsub.f32 %v837, %v1029
      %v1057 = vmul.f32 %v1032, %v1032
      %v1058 = vmul.f32 %v1033, %v1033
      %v1059 = vmul.f32 %v1034, %v1034
      %v1060 = vmul.f32 %v1035, %v1035
      %v1061 = vmul.f32 %v1036, %v1036
      %v1062 = vmul.f32 %v1037, %v1037
      %v1063 = vmul.f32 %v1038, %v1038
      %v1064 = vmul.f32 %v1039, %v1039
      %v1065 = vmul.f32 %v1040, %v1040
      %v1066 = vmul.f32 %v1041, %v1041
      %v1067 = vmul.f32 %v1042, %v1042
      %v1068 = vmul.f32 %v1043, %v1043
      %v1069 = vmul.f32 %v1044, %v1044
      %v1070 = vmul.f32 %v1045, %v1045
      %v1071 = vmul.f32 %v1046, %v1046
      %v1072 = vmul.f32 %v1047, %v1047
      %v1073 = vmul.f32 %v1048, %v1048
      %v1074 = vmul.f32 %v1049, %v1049
      %v1075 = vmul.f32 %v1050, %v1050
      %v1076 = vmul.f32 %v1051, %v1051
      %v1077 = vmul.f32 %v1052, %v1052
      %v1078 = vmul.f32 %v1053, %v1053
      %v1079 = vmul.f32 %v1054, %v1054
      %v1080 = vmul.f32 %v1055, %v1055
      %v1081 = vmul.f32 %v1056, %v1056
      %1082 = vmatprep.subr.mxu0 0.0
      %1083 = vmatpush1.msra.mxu0 %v552
      %1084 = vmatprep.subr.mxu0 0.0
      %1085 = vmatpush1.msra.mxu0 %v553
      %1086 = vmatprep.subr.mxu0 0.0
      %1087 = vmatpush1.msra.mxu0 %v554
      %1088 = vmatprep.subr.mxu0 0.0
      %1089 = vmatpush1.msra.mxu0 %v555
      %1090 = vmatprep.subr.mxu0 0.0
      %1091 = vmatpush1.msra.mxu0 %v556
      %1092 = vmatprep.subr.mxu0 0.0
      %1093 = vmatpush1.msra.mxu0 %v557
      %1094 = vmatprep.subr.mxu0 0.0
      %1095 = vmatpush1.msra.mxu0 %v558
      %1096 = vmatprep.subr.mxu0 0.0
      %1097 = vmatpush1.msra.mxu0 %v559
      %1098 = vmatprep.subr.mxu0 0.0
      %1099 = vmatpush1.msra.mxu0 %v560
      %1100 = vmatprep.subr.mxu0 0.0
      %1101 = vmatpush1.msra.mxu0 %v561
      %1102 = vmatprep.subr.mxu0 0.0
      %1103 = vmatpush1.msra.mxu0 %v562
      %1104 = vmatprep.subr.mxu0 0.0
      %1105 = vmatpush1.msra.mxu0 %v563
      %1106 = vmatprep.subr.mxu0 0.0
      %1107 = vmatpush1.msra.mxu0 %v564
      %1108 = vmatprep.subr.mxu0 0.0
      %1109 = vmatpush1.msra.mxu0 %v565
      %1110 = vmatprep.subr.mxu0 0.0
      %1111 = vmatpush1.msra.mxu0 %v566
      %1112 = vmatprep.subr.mxu0 0.0
      %1113 = vmatpush1.msra.mxu0 %v567
      %1114 = vmatprep.subr.mxu0 0.0
      %1115 = vmatpush1.msra.mxu0 0.0
      %1116 = vmatprep.subr.mxu0 0.0
      %1117 = vmatpush1.msra.mxu0 0.0
      %1118 = vmatprep.subr.mxu0 0.0
      %1119 = vmatpush1.msra.mxu0 0.0
      %1120 = vmatprep.subr.mxu0 0.0
      %1121 = vmatpush1.msra.mxu0 0.0
      %1122 = vmatprep.subr.mxu0 0.0
      %1123 = vmatpush1.msra.mxu0 0.0
      %1124 = vmatprep.subr.mxu0 0.0
      %1125 = vmatpush1.msra.mxu0 0.0
      %1126 = vmatprep.subr.mxu0 0.0
      %1127 = vmatpush1.msra.mxu0 0.0
      %1128 = vmatprep.subr.mxu0 0.0
      %1129 = vmatpush1.msra.mxu0 0.0
      %1130 = vmatprep.subr.mxu0 0.0
      %1131 = vmatpush1.msra.mxu0 0.0
      %1132 = vmatprep.subr.mxu0 0.0
      %1133 = vmatpush1.msra.mxu0 0.0
      %1134 = vmatprep.subr.mxu0 0.0
      %1135 = vmatpush1.msra.mxu0 0.0
      %1136 = vmatprep.subr.mxu0 0.0
      %1137 = vmatpush1.msra.mxu0 0.0
      %1138 = vmatprep.subr.mxu0 0.0
      %1139 = vmatpush1.msra.mxu0 0.0
      %1140 = vmatprep.subr.mxu0 0.0
      %1141 = vmatpush1.msra.mxu0 0.0
      %1142 = vmatprep.subr.mxu0 0.0
      %1143 = vmatpush1.msra.mxu0 0.0
      %1144 = vmatprep.subr.mxu0 0.0
      %1145 = vmatpush1.msra.mxu0 0.0
      %1146 = vmatprep.mubr.f32.mxu0 0.0
      %1147 = vmatmul.mubr.f32.gmra.mrb[0].mxu0 %v1057
      %v1148 = vpop.f32.mrb[0].mxu0
      %v1149 = vadd.f32 1e-06, %v1148
      %v1150 = vpop.f32.mrb[0].mxu0
      %1151 = vmatprep.mubr.f32.mxu0 0.0
      %1152 = vmatmul.mubr.f32.gmra.mrb[0].mxu0 %v1058
      %v1153 = vpop.f32.mrb[0].mxu0
      %v1154 = vadd.f32 1e-06, %v1153
      %v1155 = vpop.f32.mrb[0].mxu0
      %1156 = vmatprep.mubr.f32.mxu0 0.0
      %1157 = vmatmul.mubr.f32.gmra.mrb[0].mxu0 %v1059
      %v1158 = vpop.f32.mrb[0].mxu0
      %v1159 = vadd.f32 1e-06, %v1158
      %v1160 = vpop.f32.mrb[0].mxu0
      %1161 = vmatprep.mubr.f32.mxu0 0.0
      %1162 = vmatmul.mubr.f32.gmra.mrb[0].mxu0 %v1060
      %v1163 = vpop.f32.mrb[0].mxu0
      %v1164 = vadd.f32 1e-06, %v1163
      %v1165 = vpop.f32.mrb[0].mxu0
      %1166 = vmatprep.mubr.f32.mxu0 0.0
      %1167 = vmatmul.mubr.f32.gmra.mrb[0].mxu0 %v1061
      %v1168 = vpop.f32.mrb[0].mxu0
      %v1169 = vadd.f32 1e-06, %v1168
      %v1170 = vpop.f32.mrb[0].mxu0
      %1171 = vmatprep.mubr.f32.mxu0 0.0
      %1172 = vmatmul.mubr.f32.gmra.mrb[0].mxu0 %v1062
      %v1173 = vpop.f32.mrb[0].mxu0
      %v1174 = vadd.f32 1e-06, %v1173
      %v1175 = vpop.f32.mrb[0].mxu0
      %1176 = vmatprep.mubr.f32.mxu0 0.0
      %1177 = vmatmul.mubr.f32.gmra.mrb[0].mxu0 %v1063
      %v1178 = vpop.f32.mrb[0].mxu0
      %v1179 = vadd.f32 1e-06, %v1178
      %v1180 = vpop.f32.mrb[0].mxu0
      %1181 = vmatprep.mubr.f32.mxu0 0.0
      %1182 = vmatmul.mubr.f32.gmra.mrb[0].mxu0 %v1064
      %v1183 = vpop.f32.mrb[0].mxu0
      %v1184 = vadd.f32 1e-06, %v1183
      %v1185 = vpop.f32.mrb[0].mxu0
      %1186 = vmatprep.mubr.f32.mxu0 0.0
      %1187 = vmatmul.mubr.f32.gmra.mrb[0].mxu0 %v1065
      %v1188 = vpop.f32.mrb[0].mxu0
      %v1189 = vadd.f32 1e-06, %v1188
      %v1190 = vpop.f32.mrb[0].mxu0
      %1191 = vmatprep.mubr.f32.mxu0 0.0
      %1192 = vmatmul.mubr.f32.gmra.mrb[0].mxu0 %v1066
      %v1193 = vpop.f32.mrb[0].mxu0
      %v1194 = vadd.f32 1e-06, %v1193
      %v1195 = vpop.f32.mrb[0].mxu0
      %1196 = vmatprep.mubr.f32.mxu0 0.0
      %1197 = vmatmul.mubr.f32.gmra.mrb[0].mxu0 %v1067
      %v1198 = vpop.f32.mrb[0].mxu0
      %v1199 = vadd.f32 1e-06, %v1198
      %v1200 = vpop.f32.mrb[0].mxu0
      %1201 = vmatprep.mubr.f32.mxu0 0.0
      %1202 = vmatmul.mubr.f32.gmra.mrb[0].mxu0 %v1068
      %v1203 = vpop.f32.mrb[0].mxu0
      %v1204 = vadd.f32 1e-06, %v1203
      %v1205 = vpop.f32.mrb[0].mxu0
      %1206 = vmatprep.mubr.f32.mxu0 0.0
      %1207 = vmatmul.mubr.f32.gmra.mrb[0].mxu0 %v1069
      %v1208 = vpop.f32.mrb[0].mxu0
      %v1209 = vadd.f32 1e-06, %v1208
      %v1210 = vpop.f32.mrb[0].mxu0
      %1211 = vmatprep.mubr.f32.mxu0 0.0
      %1212 = vmatmul.mubr.f32.gmra.mrb[0].mxu0 %v1070
      %v1213 = vpop.f32.mrb[0].mxu0
      %v1214 = vadd.f32 1e-06, %v1213
      %v1215 = vpop.f32.mrb[0].mxu0
      %1216 = vmatprep.mubr.f32.mxu0 0.0
      %1217 = vmatmul.mubr.f32.gmra.mrb[0].mxu0 %v1071
      %v1218 = vpop.f32.mrb[0].mxu0
      %v1219 = vadd.f32 1e-06, %v1218
      %v1220 = vpop.f32.mrb[0].mxu0
      %1221 = vmatprep.mubr.f32.mxu0 0.0
      %1222 = vmatmul.mubr.f32.gmra.mrb[0].mxu0 %v1072
      %v1223 = vpop.f32.mrb[0].mxu0
      %v1224 = vadd.f32 1e-06, %v1223
      %v1225 = vpop.f32.mrb[0].mxu0
      %1226 = vmatprep.mubr.f32.mxu0 0.0
      %1227 = vmatmul.mubr.f32.gmra.mrb[0].mxu0 %v1073
      %v1228 = vpop.f32.mrb[0].mxu0
      %v1229 = vadd.f32 1e-06, %v1228
      %v1230 = vpop.f32.mrb[0].mxu0
      %1231 = vmatprep.mubr.f32.mxu0 0.0
      %1232 = vmatmul.mubr.f32.gmra.mrb[0].mxu0 %v1074
      %v1233 = vpop.f32.mrb[0].mxu0
      %v1234 = vadd.f32 1e-06, %v1233
      %v1235 = vpop.f32.mrb[0].mxu0
      %1236 = vmatprep.mubr.f32.mxu0 0.0
      %1237 = vmatmul.mubr.f32.gmra.mrb[0].mxu0 %v1075
      %v1238 = vpop.f32.mrb[0].mxu0
      %v1239 = vadd.f32 1e-06, %v1238
      %v1240 = vpop.f32.mrb[0].mxu0
      %1241 = vmatprep.mubr.f32.mxu0 0.0
      %1242 = vmatmul.mubr.f32.gmra.mrb[0].mxu0 %v1076
      %v1243 = vpop.f32.mrb[0].mxu0
      %v1244 = vadd.f32 1e-06, %v1243
      %v1245 = vpop.f32.mrb[0].mxu0
      %1246 = vmatprep.mubr.f32.mxu0 0.0
      %1247 = vmatmul.mubr.f32.gmra.mrb[0].mxu0 %v1077
      %v1248 = vpop.f32.mrb[0].mxu0
      %v1249 = vadd.f32 1e-06, %v1248
      %v1250 = vpop.f32.mrb[0].mxu0
      %1251 = vmatprep.mubr.f32.mxu0 0.0
      %1252 = vmatmul.mubr.f32.gmra.mrb[0].mxu0 %v1078
      %v1253 = vpop.f32.mrb[0].mxu0
      %v1254 = vadd.f32 1e-06, %v1253
      %v1255 = vpop.f32.mrb[0].mxu0
      %1256 = vmatprep.mubr.f32.mxu0 0.0
      %1257 = vmatmul.mubr.f32.gmra.mrb[0].mxu0 %v1079
      %v1258 = vpop.f32.mrb[0].mxu0
      %v1259 = vadd.f32 1e-06, %v1258
      %v1260 = vpop.f32.mrb[0].mxu0
      %1261 = vmatprep.mubr.f32.mxu0 0.0
      %1262 = vmatmul.mubr.f32.gmra.mrb[0].mxu0 %v1080
      %v1263 = vpop.f32.mrb[0].mxu0
      %v1264 = vadd.f32 1e-06, %v1263
      %v1265 = vpop.f32.mrb[0].mxu0
      %1266 = vmatprep.mubr.f32.mxu0 0.0
      %1267 = vmatmul.mubr.f32.gmra.mrb[0].mxu0 %v1081
      %v1268 = vpop.f32.mrb[0].mxu0
      %v1269 = vadd.f32 1e-06, %v1268
      %v1270 = vpop.f32.mrb[0].mxu0
      %1271 = vdwg.mxu0
      %v1272 = vrsqrt.pop %v1149
      %v1273 = vrsqrt.pop %v1154
      %v1274 = vrsqrt.pop %v1159
      %v1275 = vrsqrt.pop %v1164
      %v1276 = vrsqrt.pop %v1169
      %v1277 = vrsqrt.pop %v1174
      %v1278 = vrsqrt.pop %v1179
      %v1279 = vrsqrt.pop %v1184
      %v1280 = vrsqrt.pop %v1189
      %v1281 = vrsqrt.pop %v1194
      %v1282 = vrsqrt.pop %v1199
      %v1283 = vrsqrt.pop %v1204
      %v1284 = vrsqrt.pop %v1209
      %v1285 = vrsqrt.pop %v1214
      %v1286 = vrsqrt.pop %v1219
      %v1287 = vrsqrt.pop %v1224
      %v1288 = vrsqrt.pop %v1229
      %v1289 = vrsqrt.pop %v1234
      %v1290 = vrsqrt.pop %v1239
      %v1291 = vrsqrt.pop %v1244
      %v1292 = vrsqrt.pop %v1249
      %v1293 = vrsqrt.pop %v1254
      %v1294 = vrsqrt.pop %v1259
      %v1295 = vrsqrt.pop %v1264
      %v1296 = vrsqrt.pop %v1269
      %v1297 = vmul.f32 %v1032, %v1272
      %v1298 = vmul.f32 %v1033, %v1273
      %v1299 = vmul.f32 %v1034, %v1274
      %v1300 = vmul.f32 %v1035, %v1275
      %v1301 = vmul.f32 %v1036, %v1276
      %v1302 = vmul.f32 %v1037, %v1277
      %v1303 = vmul.f32 %v1038, %v1278
      %v1304 = vmul.f32 %v1039, %v1279
      %v1305 = vmul.f32 %v1040, %v1280
      %v1306 = vmul.f32 %v1041, %v1281
      %v1307 = vmul.f32 %v1042, %v1282
      %v1308 = vmul.f32 %v1043, %v1283
      %v1309 = vmul.f32 %v1044, %v1284
      %v1310 = vmul.f32 %v1045, %v1285
      %v1311 = vmul.f32 %v1046, %v1286
      %v1312 = vmul.f32 %v1047, %v1287
      %v1313 = vmul.f32 %v1048, %v1288
      %v1314 = vmul.f32 %v1049, %v1289
      %v1315 = vmul.f32 %v1050, %v1290
      %v1316 = vmul.f32 %v1051, %v1291
      %v1317 = vmul.f32 %v1052, %v1292
      %v1318 = vmul.f32 %v1053, %v1293
      %v1319 = vmul.f32 %v1054, %v1294
      %v1320 = vmul.f32 %v1055, %v1295
      %v1321 = vmul.f32 %v1056, %v1296
      %v1323 = vlaneseq
      %v1324 = vshrl.u32 %v1323, 7
      %v1325 = vsub.s32 0, %v1324
      %v1326 = vrot.slane %v840, %v1325
      %v1328 = vmul.f32 %v1297, %v1326
      %v1329 = vmul.f32 %v1298, %v1326
      %v1330 = vmul.f32 %v1299, %v1326
      %v1331 = vmul.f32 %v1300, %v1326
      %v1332 = vmul.f32 %v1301, %v1326
      %v1333 = vmul.f32 %v1302, %v1326
      %v1334 = vmul.f32 %v1303, %v1326
      %v1335 = vmul.f32 %v1304, %v1326
      %v1336 = vmul.f32 %v1305, %v1326
      %v1337 = vmul.f32 %v1306, %v1326
      %v1338 = vmul.f32 %v1307, %v1326
      %v1339 = vmul.f32 %v1308, %v1326
      %v1340 = vmul.f32 %v1309, %v1326
      %v1341 = vmul.f32 %v1310, %v1326
      %v1342 = vmul.f32 %v1311, %v1326
      %v1343 = vmul.f32 %v1312, %v1326
      %v1344 = vmul.f32 %v1313, %v1326
      %v1345 = vmul.f32 %v1314, %v1326
      %v1346 = vmul.f32 %v1315, %v1326
      %v1347 = vmul.f32 %v1316, %v1326
      %v1348 = vmul.f32 %v1317, %v1326
      %v1349 = vmul.f32 %v1318, %v1326
      %v1350 = vmul.f32 %v1319, %v1326
      %v1351 = vmul.f32 %v1320, %v1326
      %v1352 = vmul.f32 %v1321, %v1326
      %v1354 = vlaneseq
      %v1355 = vshrl.u32 %v1354, 7
      %v1356 = vsub.s32 0, %v1355
      %v1357 = vrot.slane %v841, %v1356
      %v1359 = vadd.f32 %v1328, %v1357
      %v1360 = vadd.f32 %v1329, %v1357
      %v1361 = vadd.f32 %v1330, %v1357
      %v1362 = vadd.f32 %v1331, %v1357
      %v1363 = vadd.f32 %v1332, %v1357
      %v1364 = vadd.f32 %v1333, %v1357
      %v1365 = vadd.f32 %v1334, %v1357
      %v1366 = vadd.f32 %v1335, %v1357
      %v1367 = vadd.f32 %v1336, %v1357
      %v1368 = vadd.f32 %v1337, %v1357
      %v1369 = vadd.f32 %v1338, %v1357
      %v1370 = vadd.f32 %v1339, %v1357
      %v1371 = vadd.f32 %v1340, %v1357
      %v1372 = vadd.f32 %v1341, %v1357
      %v1373 = vadd.f32 %v1342, %v1357
      %v1374 = vadd.f32 %v1343, %v1357
      %v1375 = vadd.f32 %v1344, %v1357
      %v1376 = vadd.f32 %v1345, %v1357
      %v1377 = vadd.f32 %v1346, %v1357
      %v1378 = vadd.f32 %v1347, %v1357
      %v1379 = vadd.f32 %v1348, %v1357
      %v1380 = vadd.f32 %v1349, %v1357
      %v1381 = vadd.f32 %v1350, %v1357
      %v1382 = vadd.f32 %v1351, %v1357
      %v1383 = vadd.f32 %v1352, %v1357
      %v1384 = vld [vmem:[%s5] sm:$0xff]
      %v1385 = vld [vmem:[%s5 + $0x8] sm:$0xff]
      %v1386 = vpack.c.bf16 %v1360, %v1359
      %v1387 = vpack.c.bf16 %v1362, %v1361
      %v1388 = vpack.c.bf16 %v1364, %v1363
      %v1389 = vpack.c.bf16 %v1366, %v1365
      %v1390 = vpack.c.bf16 %v1368, %v1367
      %v1391 = vpack.c.bf16 %v1370, %v1369
      %v1392 = vpack.c.bf16 %v1372, %v1371
      %v1393 = vpack.c.bf16 %v1374, %v1373
      %v1394 = vpack.c.bf16 %v1376, %v1375
      %v1395 = vpack.c.bf16 %v1378, %v1377
      %v1396 = vpack.c.bf16 %v1380, %v1379
      %v1397 = vpack.c.bf16 %v1382, %v1381
      %v1398 = vpack.c.bf16 %v1383, %v1383
      %v1399 = vld [vmem:[%s6] sm:$0xff]
      %v1400 = vld [vmem:[%s6 + $0x8] sm:$0xff]
      %1402 = vset.pattern.permute.xlu0 0
      %1403 = vperm.xlu0 %1402, %v1399
      %v1404 = vpop.permute.xlu0 %1403
      %1407 = vset.pattern.permute.xlu0 0
      %1408 = vperm.xlu0 %1407, %v1400
      %v1409 = vpop.permute.xlu0 %1408
      %v1413 = vunpack.c.l.b16 %v1384
      %v1414 = vunpack.c.h.b16 %v1384
      %v1415 = vunpack.c.l.b16 %v1385
      %v1416 = vunpack.c.h.b16 %v1385
      %v1417 = vpack.c.b16 %v1415, %v1413
      %v1418 = vpack.c.b16 %v1416, %v1414
      %vm1420 = vcmask 564224
      %v1422 = vsel %vm1420, %v1418, 0
      %vm1424 = vcmask 1041408
      %vm1425 = vcmask 1042432
      %v1426 = vsel %vm1424, 4294967295, 65535
      %v1427 = vsel %vm1425, %v1426, 0
      %v1429 = vand.u32 %v1398, %v1427
      %1431 = vmatprep.subr.bf16.mxu0 0
      %1432 = vmatpush1.bf16.msra.mxu0 %v1386
      %1433 = vmatprep.subr.bf16.mxu0 0
      %1434 = vmatpush1.bf16.msra.mxu0 %v1387
      %1435 = vmatprep.subr.bf16.mxu0 0
      %1436 = vmatpush1.bf16.msra.mxu0 %v1388
      %1437 = vmatprep.subr.bf16.mxu0 0
      %1438 = vmatpush1.bf16.msra.mxu0 %v1389
      %1439 = vmatprep.subr.bf16.mxu0 0
      %1440 = vmatpush1.bf16.msra.mxu0 %v1390
      %1441 = vmatprep.subr.bf16.mxu0 0
      %1442 = vmatpush1.bf16.msra.mxu0 %v1391
      %1443 = vmatprep.subr.bf16.mxu0 0
      %1444 = vmatpush1.bf16.msra.mxu0 %v1392
      %1445 = vmatprep.subr.bf16.mxu0 0
      %1446 = vmatpush1.bf16.msra.mxu0 %v1393
      %1447 = vmatprep.subr.bf16.mxu0 0
      %1448 = vmatpush1.bf16.msra.mxu0 %v1394
      %1449 = vmatprep.subr.bf16.mxu0 0
      %1450 = vmatpush1.bf16.msra.mxu0 %v1395
      %1451 = vmatprep.subr.bf16.mxu0 0
      %1452 = vmatpush1.bf16.msra.mxu0 %v1396
      %1453 = vmatprep.subr.bf16.mxu0 0
      %1454 = vmatpush1.bf16.msra.mxu0 %v1397
      %1455 = vmatprep.subr.bf16.mxu0 0
      %1456 = vmatpush1.bf16.msra.mxu0 %v1429
      %1457 = vmatprep.subr.bf16.mxu0 0
      %1458 = vmatpush1.bf16.msra.mxu0 0
      %1459 = vmatprep.subr.bf16.mxu0 0
      %1460 = vmatpush1.bf16.msra.mxu0 0
      %1461 = vmatprep.subr.bf16.mxu0 0
      %1462 = vmatpush1.bf16.msra.mxu0 0
      %1463 = vmatprep.mubr.bf16.mxu0 %v1422
      %1464 = vmatmul.mubr.bf16.gmra.mrb[0].mxu0 %v1417
      %v1465 = vpop.f32.mrb[0].mxu0
      %v1466 = vadd.f32 %v1404, %v1465
      %v1467 = vpop.f32.mrb[0].mxu0
      %v1468 = vpop.f32.mrb[0].mxu0
      %v1469 = vadd.f32 %v1409, %v1468
      %v1470 = vpop.f32.mrb[0].mxu0
      %1471 = vdwg.mxu0
      %v1472 = vmul.f32 %v1466, 0.5
      %v1473 = vmul.f32 %v1469, 0.5
      %v1474 = vmul.f32 %v1466, %v1466
      %v1475 = vmul.f32 %v1469, %v1469
      %v1476 = vmul.f32 %v1474, %v1466
      %v1477 = vmul.f32 %v1475, %v1469
      %v1478 = vmul.f32 %v1476, 0.044715
      %v1479 = vmul.f32 %v1477, 0.044715
      %v1480 = vadd.f32 %v1466, %v1478
      %v1481 = vadd.f32 %v1469, %v1479
      %v1482 = vmul.f32 %v1480, 0.7978846
      %v1483 = vmul.f32 %v1481, 0.7978846
      %v1484 = vtanh.pop %v1482
      %v1485 = vtanh.pop %v1483
      %v1486 = vadd.f32 %v1484, 1.0
      %v1487 = vadd.f32 %v1485, 1.0
      %v1488 = vmul.f32 %v1472, %v1486
      %v1489 = vmul.f32 %v1473, %v1487
      %v1490 = vld [vmem:[%s7] sm:$0xf]
      %v1491 = vld [vmem:[%s7 + $0x4] sm:$0xf]
      %v1492 = vld [vmem:[%s7 + $0x8] sm:$0xf]
      %v1493 = vld [vmem:[%s7 + $0xc] sm:$0xf]
      %v1494 = vld [vmem:[%s7 + $0x10] sm:$0xf]
      %v1495 = vld [vmem:[%s7 + $0x14] sm:$0xf]
      %v1496 = vld [vmem:[%s7 + $0x18] sm:$0xf]
      %v1497 = vld [vmem:[%s7 + $0x1c] sm:$0xf]
      %v1498 = vld [vmem:[%s7 + $0x20] sm:$0xf]
      %v1499 = vld [vmem:[%s7 + $0x24] sm:$0xf]
      %v1500 = vld [vmem:[%s7 + $0x28] sm:$0xf]
      %v1501 = vld [vmem:[%s7 + $0x2c] sm:$0xf]
      %v1502 = vld [vmem:[%s7 + $0x30] sm:$0xf]
      %v1503 = vld [vmem:[%s7 + $0x34] sm:$0xf]
      %v1504 = vld [vmem:[%s7 + $0x38] sm:$0xf]
      %v1505 = vld [vmem:[%s7 + $0x3c] sm:$0xf]
      %v1506 = vld [vmem:[%s7 + $0x40] sm:$0xf]
      %v1507 = vld [vmem:[%s7 + $0x44] sm:$0xf]
      %v1508 = vld [vmem:[%s7 + $0x48] sm:$0xf]
      %v1509 = vld [vmem:[%s7 + $0x4c] sm:$0xf]
      %v1510 = vld [vmem:[%s7 + $0x50] sm:$0xf]
      %v1511 = vld [vmem:[%s7 + $0x54] sm:$0xf]
      %v1512 = vld [vmem:[%s7 + $0x58] sm:$0xf]
      %v1513 = vld [vmem:[%s7 + $0x5c] sm:$0xf]
      %v1514 = vld [vmem:[%s7 + $0x60] sm:$0x7]
      %v1515 = vpack.c.bf16 %v1489, %v1488
      %v1516 = vld [vmem:[%s8] sm:$0xff]
      %v1517 = vld [vmem:[%s8 + $0x8] sm:$0xff]
      %v1518 = vld [vmem:[%s8 + $0x10] sm:$0xff]
      %v1519 = vld [vmem:[%s8 + $0x18] sm:$0xff]
      %v1520 = vld [vmem:[%s8 + $0x20] sm:$0xff]
      %v1521 = vld [vmem:[%s8 + $0x28] sm:$0xff]
      %v1522 = vld [vmem:[%s8 + $0x30] sm:$0xff]
      %v1523 = vld [vmem:[%s8 + $0x38] sm:$0xff]
      %v1524 = vld [vmem:[%s8 + $0x40] sm:$0xff]
      %v1525 = vld [vmem:[%s8 + $0x48] sm:$0xff]
      %v1526 = vld [vmem:[%s8 + $0x50] sm:$0xff]
      %v1527 = vld [vmem:[%s8 + $0x58] sm:$0xff]
      %v1528 = vld [vmem:[%s8 + $0x60] sm:$0xff]
      %v1529 = vld [vmem:[%s8 + $0x68] sm:$0xff]
      %v1530 = vld [vmem:[%s8 + $0x70] sm:$0xff]
      %v1531 = vld [vmem:[%s8 + $0x78] sm:$0xff]
      %v1532 = vld [vmem:[%s8 + $0x80] sm:$0xff]
      %v1533 = vld [vmem:[%s8 + $0x88] sm:$0xff]
      %v1534 = vld [vmem:[%s8 + $0x90] sm:$0xff]
      %v1535 = vld [vmem:[%s8 + $0x98] sm:$0xff]
      %v1536 = vld [vmem:[%s8 + $0xa0] sm:$0xff]
      %v1537 = vld [vmem:[%s8 + $0xa8] sm:$0xff]
      %v1538 = vld [vmem:[%s8 + $0xb0] sm:$0xff]
      %v1539 = vld [vmem:[%s8 + $0xb8] sm:$0xff]
      %v1540 = vld [vmem:[%s8 + $0xc0] sm:$0x1f]
      %1542 = vset.pattern.permute.xlu0 0
      %1543 = vperm.xlu0 %1542, %v1516
      %v1544 = vpop.permute.xlu0 %1543
      %1547 = vset.pattern.permute.xlu0 0
      %1548 = vperm.xlu0 %1547, %v1517
      %v1549 = vpop.permute.xlu0 %1548
      %1552 = vset.pattern.permute.xlu0 0
      %1553 = vperm.xlu0 %1552, %v1518
      %v1554 = vpop.permute.xlu0 %1553
      %1557 = vset.pattern.permute.xlu0 0
      %1558 = vperm.xlu0 %1557, %v1519
      %v1559 = vpop.permute.xlu0 %1558
      %1562 = vset.pattern.permute.xlu0 0
      %1563 = vperm.xlu0 %1562, %v1520
      %v1564 = vpop.permute.xlu0 %1563
      %1567 = vset.pattern.permute.xlu0 0
      %1568 = vperm.xlu0 %1567, %v1521
      %v1569 = vpop.permute.xlu0 %1568
      %1572 = vset.pattern.permute.xlu0 0
      %1573 = vperm.xlu0 %1572, %v1522
      %v1574 = vpop.permute.xlu0 %1573
      %1577 = vset.pattern.permute.xlu0 0
      %1578 = vperm.xlu0 %1577, %v1523
      %v1579 = vpop.permute.xlu0 %1578
      %1582 = vset.pattern.permute.xlu0 0
      %1583 = vperm.xlu0 %1582, %v1524
      %v1584 = vpop.permute.xlu0 %1583
      %1587 = vset.pattern.permute.xlu0 0
      %1588 = vperm.xlu0 %1587, %v1525
      %v1589 = vpop.permute.xlu0 %1588
      %1592 = vset.pattern.permute.xlu0 0
      %1593 = vperm.xlu0 %1592, %v1526
      %v1594 = vpop.permute.xlu0 %1593
      %1597 = vset.pattern.permute.xlu0 0
      %1598 = vperm.xlu0 %1597, %v1527
      %v1599 = vpop.permute.xlu0 %1598
      %1602 = vset.pattern.permute.xlu0 0
      %1603 = vperm.xlu0 %1602, %v1528
      %v1604 = vpop.permute.xlu0 %1603
      %1607 = vset.pattern.permute.xlu0 0
      %1608 = vperm.xlu0 %1607, %v1529
      %v1609 = vpop.permute.xlu0 %1608
      %1612 = vset.pattern.permute.xlu0 0
      %1613 = vperm.xlu0 %1612, %v1530
      %v1614 = vpop.permute.xlu0 %1613
      %1617 = vset.pattern.permute.xlu0 0
      %1618 = vperm.xlu0 %1617, %v1531
      %v1619 = vpop.permute.xlu0 %1618
      %1622 = vset.pattern.permute.xlu0 0
      %1623 = vperm.xlu0 %1622, %v1532
      %v1624 = vpop.permute.xlu0 %1623
      %1627 = vset.pattern.permute.xlu0 0
      %1628 = vperm.xlu0 %1627, %v1533
      %v1629 = vpop.permute.xlu0 %1628
      %1632 = vset.pattern.permute.xlu0 0
      %1633 = vperm.xlu0 %1632, %v1534
      %v1634 = vpop.permute.xlu0 %1633
      %1637 = vset.pattern.permute.xlu0 0
      %1638 = vperm.xlu0 %1637, %v1535
      %v1639 = vpop.permute.xlu0 %1638
      %1642 = vset.pattern.permute.xlu0 0
      %1643 = vperm.xlu0 %1642, %v1536
      %v1644 = vpop.permute.xlu0 %1643
      %1647 = vset.pattern.permute.xlu0 0
      %1648 = vperm.xlu0 %1647, %v1537
      %v1649 = vpop.permute.xlu0 %1648
      %1652 = vset.pattern.permute.xlu0 0
      %1653 = vperm.xlu0 %1652, %v1538
      %v1654 = vpop.permute.xlu0 %1653
      %1657 = vset.pattern.permute.xlu0 0
      %1658 = vperm.xlu0 %1657, %v1539
      %v1659 = vpop.permute.xlu0 %1658
      %1662 = vset.pattern.permute.xlu0 0
      %1663 = vperm.xlu0 %1662, %v1540
      %v1664 = vpop.permute.xlu0 %1663
      %v1691 = vunpack.c.l.b16 %v1490
      %v1692 = vunpack.c.l.b16 %v1491
      %v1693 = vunpack.c.l.b16 %v1492
      %v1694 = vunpack.c.l.b16 %v1493
      %v1695 = vunpack.c.l.b16 %v1494
      %v1696 = vunpack.c.l.b16 %v1495
      %v1697 = vunpack.c.l.b16 %v1496
      %v1698 = vunpack.c.l.b16 %v1497
      %v1699 = vunpack.c.l.b16 %v1498
      %v1700 = vunpack.c.l.b16 %v1499
      %v1701 = vunpack.c.l.b16 %v1500
      %v1702 = vunpack.c.l.b16 %v1501
      %v1703 = vunpack.c.l.b16 %v1502
      %v1704 = vunpack.c.l.b16 %v1503
      %v1705 = vunpack.c.l.b16 %v1504
      %v1706 = vunpack.c.l.b16 %v1505
      %v1707 = vunpack.c.l.b16 %v1506
      %v1708 = vunpack.c.l.b16 %v1507
      %v1709 = vunpack.c.l.b16 %v1508
      %v1710 = vunpack.c.l.b16 %v1509
      %v1711 = vunpack.c.l.b16 %v1510
      %v1712 = vunpack.c.l.b16 %v1511
      %v1713 = vunpack.c.l.b16 %v1512
      %v1714 = vunpack.c.l.b16 %v1513
      %v1715 = vunpack.c.l.b16 %v1514
      %v1716 = vpack.c.b16 %v1692, %v1691
      %v1717 = vpack.c.b16 %v1694, %v1693
      %v1718 = vpack.c.b16 %v1696, %v1695
      %v1719 = vpack.c.b16 %v1698, %v1697
      %v1720 = vpack.c.b16 %v1700, %v1699
      %v1721 = vpack.c.b16 %v1702, %v1701
      %v1722 = vpack.c.b16 %v1704, %v1703
      %v1723 = vpack.c.b16 %v1706, %v1705
      %v1724 = vpack.c.b16 %v1708, %v1707
      %v1725 = vpack.c.b16 %v1710, %v1709
      %v1726 = vpack.c.b16 %v1712, %v1711
      %v1727 = vpack.c.b16 %v1714, %v1713
      %v1728 = vpack.c.b16 %v1715, %v1715
      %vm1729 = vcmask 130048
      %v1731 = vsel %vm1729, %v1716, 0
      %v1734 = vsel %vm1729, %v1717, 0
      %v1737 = vsel %vm1729, %v1718, 0
      %v1740 = vsel %vm1729, %v1719, 0
      %v1743 = vsel %vm1729, %v1720, 0
      %v1746 = vsel %vm1729, %v1721, 0
      %v1749 = vsel %vm1729, %v1722, 0
      %v1752 = vsel %vm1729, %v1723, 0
      %v1755 = vsel %vm1729, %v1724, 0
      %v1758 = vsel %vm1729, %v1725, 0
      %v1761 = vsel %vm1729, %v1726, 0
      %v1764 = vsel %vm1729, %v1727, 0
      %v1767 = vsel %vm1729, %v1728, 0
      %1769 = vmatprep.subr.bf16.mxu0 0
      %1770 = vmatpush1.bf16.msra.mxu0 %v1515
      %1771 = vmatprep.subr.bf16.mxu0 0
      %1772 = vmatpush1.bf16.msra.mxu0 0
      %1773 = vmatprep.subr.bf16.mxu0 0
      %1774 = vmatpush1.bf16.msra.mxu0 0
      %1775 = vmatprep.subr.bf16.mxu0 0
      %1776 = vmatpush1.bf16.msra.mxu0 0
      %1777 = vmatprep.subr.bf16.mxu0 0
      %1778 = vmatpush1.bf16.msra.mxu0 0
      %1779 = vmatprep.subr.bf16.mxu0 0
      %1780 = vmatpush1.bf16.msra.mxu0 0
      %1781 = vmatprep.subr.bf16.mxu0 0
      %1782 = vmatpush1.bf16.msra.mxu0 0
      %1783 = vmatprep.subr.bf16.mxu0 0
      %1784 = vmatpush1.bf16.msra.mxu0 0
      %1785 = vmatprep.subr.bf16.mxu0 0
      %1786 = vmatpush1.bf16.msra.mxu0 0
      %1787 = vmatprep.subr.bf16.mxu0 0
      %1788 = vmatpush1.bf16.msra.mxu0 0
      %1789 = vmatprep.subr.bf16.mxu0 0
      %1790 = vmatpush1.bf16.msra.mxu0 0
      %1791 = vmatprep.subr.bf16.mxu0 0
      %1792 = vmatpush1.bf16.msra.mxu0 0
      %1793 = vmatprep.subr.bf16.mxu0 0
      %1794 = vmatpush1.bf16.msra.mxu0 0
      %1795 = vmatprep.subr.bf16.mxu0 0
      %1796 = vmatpush1.bf16.msra.mxu0 0
      %1797 = vmatprep.subr.bf16.mxu0 0
      %1798 = vmatpush1.bf16.msra.mxu0 0
      %1799 = vmatprep.subr.bf16.mxu0 0
      %1800 = vmatpush1.bf16.msra.mxu0 0
      %1801 = vmatprep.mubr.bf16.mxu0 0
      %1802 = vmatmul.mubr.bf16.gmra.mrb[0].mxu0 %v1731
      %v1803 = vpop.f32.mrb[0].mxu0
      %v1804 = vadd.f32 %v1544, %v1803
      %v1805 = vpop.f32.mrb[0].mxu0
      %v1806 = vpop.f32.mrb[0].mxu0
      %v1807 = vadd.f32 %v1549, %v1806
      %v1808 = vpop.f32.mrb[0].mxu0
      %1809 = vmatprep.mubr.bf16.mxu0 0
      %1810 = vmatmul.mubr.bf16.gmra.mrb[0].mxu0 %v1734
      %v1811 = vpop.f32.mrb[0].mxu0
      %v1812 = vadd.f32 %v1554, %v1811
      %v1813 = vpop.f32.mrb[0].mxu0
      %v1814 = vpop.f32.mrb[0].mxu0
      %v1815 = vadd.f32 %v1559, %v1814
      %v1816 = vpop.f32.mrb[0].mxu0
      %1817 = vmatprep.mubr.bf16.mxu0 0
      %1818 = vmatmul.mubr.bf16.gmra.mrb[0].mxu0 %v1737
      %v1819 = vpop.f32.mrb[0].mxu0
      %v1820 = vadd.f32 %v1564, %v1819
      %v1821 = vpop.f32.mrb[0].mxu0
      %v1822 = vpop.f32.mrb[0].mxu0
      %v1823 = vadd.f32 %v1569, %v1822
      %v1824 = vpop.f32.mrb[0].mxu0
      %1825 = vmatprep.mubr.bf16.mxu0 0
      %1826 = vmatmul.mubr.bf16.gmra.mrb[0].mxu0 %v1740
      %v1827 = vpop.f32.mrb[0].mxu0
      %v1828 = vadd.f32 %v1574, %v1827
      %v1829 = vpop.f32.mrb[0].mxu0
      %v1830 = vpop.f32.mrb[0].mxu0
      %v1831 = vadd.f32 %v1579, %v1830
      %v1832 = vpop.f32.mrb[0].mxu0
      %1833 = vmatprep.mubr.bf16.mxu0 0
      %1834 = vmatmul.mubr.bf16.gmra.mrb[0].mxu0 %v1743
      %v1835 = vpop.f32.mrb[0].mxu0
      %v1836 = vadd.f32 %v1584, %v1835
      %v1837 = vpop.f32.mrb[0].mxu0
      %v1838 = vpop.f32.mrb[0].mxu0
      %v1839 = vadd.f32 %v1589, %v1838
      %v1840 = vpop.f32.mrb[0].mxu0
      %1841 = vmatprep.mubr.bf16.mxu0 0
      %1842 = vmatmul.mubr.bf16.gmra.mrb[0].mxu0 %v1746
      %v1843 = vpop.f32.mrb[0].mxu0
      %v1844 = vadd.f32 %v1594, %v1843
      %v1845 = vpop.f32.mrb[0].mxu0
      %v1846 = vpop.f32.mrb[0].mxu0
      %v1847 = vadd.f32 %v1599, %v1846
      %v1848 = vpop.f32.mrb[0].mxu0
      %1849 = vmatprep.mubr.bf16.mxu0 0
      %1850 = vmatmul.mubr.bf16.gmra.mrb[0].mxu0 %v1749
      %v1851 = vpop.f32.mrb[0].mxu0
      %v1852 = vadd.f32 %v1604, %v1851
      %v1853 = vpop.f32.mrb[0].mxu0
      %v1854 = vpop.f32.mrb[0].mxu0
      %v1855 = vadd.f32 %v1609, %v1854
      %v1856 = vpop.f32.mrb[0].mxu0
      %1857 = vmatprep.mubr.bf16.mxu0 0
      %1858 = vmatmul.mubr.bf16.gmra.mrb[0].mxu0 %v1752
      %v1859 = vpop.f32.mrb[0].mxu0
      %v1860 = vadd.f32 %v1614, %v1859
      %v1861 = vpop.f32.mrb[0].mxu0
      %v1862 = vpop.f32.mrb[0].mxu0
      %v1863 = vadd.f32 %v1619, %v1862
      %v1864 = vpop.f32.mrb[0].mxu0
      %1865 = vmatprep.mubr.bf16.mxu0 0
      %1866 = vmatmul.mubr.bf16.gmra.mrb[0].mxu0 %v1755
      %v1867 = vpop.f32.mrb[0].mxu0
      %v1868 = vadd.f32 %v1624, %v1867
      %v1869 = vpop.f32.mrb[0].mxu0
      %v1870 = vpop.f32.mrb[0].mxu0
      %v1871 = vadd.f32 %v1629, %v1870
      %v1872 = vpop.f32.mrb[0].mxu0
      %1873 = vmatprep.mubr.bf16.mxu0 0
      %1874 = vmatmul.mubr.bf16.gmra.mrb[0].mxu0 %v1758
      %v1875 = vpop.f32.mrb[0].mxu0
      %v1876 = vadd.f32 %v1634, %v1875
      %v1877 = vpop.f32.mrb[0].mxu0
      %v1878 = vpop.f32.mrb[0].mxu0
      %v1879 = vadd.f32 %v1639, %v1878
      %v1880 = vpop.f32.mrb[0].mxu0
      %1881 = vmatprep.mubr.bf16.mxu0 0
      %1882 = vmatmul.mubr.bf16.gmra.mrb[0].mxu0 %v1761
      %v1883 = vpop.f32.mrb[0].mxu0
      %v1884 = vadd.f32 %v1644, %v1883
      %v1885 = vpop.f32.mrb[0].mxu0
      %v1886 = vpop.f32.mrb[0].mxu0
      %v1887 = vadd.f32 %v1649, %v1886
      %v1888 = vpop.f32.mrb[0].mxu0
      %1889 = vmatprep.mubr.bf16.mxu0 0
      %1890 = vmatmul.mubr.bf16.gmra.mrb[0].mxu0 %v1764
      %v1891 = vpop.f32.mrb[0].mxu0
      %v1892 = vadd.f32 %v1654, %v1891
      %v1893 = vpop.f32.mrb[0].mxu0
      %v1894 = vpop.f32.mrb[0].mxu0
      %v1895 = vadd.f32 %v1659, %v1894
      %v1896 = vpop.f32.mrb[0].mxu0
      %1897 = vmatprep.mubr.bf16.mxu0 0
      %1898 = vmatmul.mubr.bf16.gmra.mrb[0].mxu0 %v1767
      %v1899 = vpop.f32.mrb[0].mxu0
      %v1900 = vadd.f32 %v1664, %v1899
      %v1901 = vpop.f32.mrb[0].mxu0
      %v1902 = vpop.f32.mrb[0].mxu0
      %v1903 = vpop.f32.mrb[0].mxu0
      %1904 = vdwg.mxu0
      %v1905 = vadd.f32 %v717, %v1804
      %v1906 = vadd.f32 %v722, %v1807
      %v1907 = vadd.f32 %v727, %v1812
      %v1908 = vadd.f32 %v732, %v1815
      %v1909 = vadd.f32 %v737, %v1820
      %v1910 = vadd.f32 %v742, %v1823
      %v1911 = vadd.f32 %v747, %v1828
      %v1912 = vadd.f32 %v752, %v1831
      %v1913 = vadd.f32 %v757, %v1836
      %v1914 = vadd.f32 %v762, %v1839
      %v1915 = vadd.f32 %v767, %v1844
      %v1916 = vadd.f32 %v772, %v1847
      %v1917 = vadd.f32 %v777, %v1852
      %v1918 = vadd.f32 %v782, %v1855
      %v1919 = vadd.f32 %v787, %v1860
      %v1920 = vadd.f32 %v792, %v1863
      %v1921 = vadd.f32 %v797, %v1868
      %v1922 = vadd.f32 %v802, %v1871
      %v1923 = vadd.f32 %v807, %v1876
      %v1924 = vadd.f32 %v812, %v1879
      %v1925 = vadd.f32 %v817, %v1884
      %v1926 = vadd.f32 %v822, %v1887
      %v1927 = vadd.f32 %v827, %v1892
      %v1928 = vadd.f32 %v832, %v1895
      %v1929 = vadd.f32 %v837, %v1900
      %v1930 = vld [vmem:[%s9] sm:$0x1]
      %v1931 = vld [vmem:[%s10] sm:$0x1]
      %1932 = vmatprep.subr.mxu0 0.0
      %1933 = vmatpush1.msra.mxu0 %v552
      %1934 = vmatprep.subr.mxu0 0.0
      %1935 = vmatpush1.msra.mxu0 %v553
      %1936 = vmatprep.subr.mxu0 0.0
      %1937 = vmatpush1.msra.mxu0 %v554
      %1938 = vmatprep.subr.mxu0 0.0
      %1939 = vmatpush1.msra.mxu0 %v555
      %1940 = vmatprep.subr.mxu0 0.0
      %1941 = vmatpush1.msra.mxu0 %v556
      %1942 = vmatprep.subr.mxu0 0.0
      %1943 = vmatpush1.msra.mxu0 %v557
      %1944 = vmatprep.subr.mxu0 0.0
      %1945 = vmatpush1.msra.mxu0 %v558
      %1946 = vmatprep.subr.mxu0 0.0
      %1947 = vmatpush1.msra.mxu0 %v559
      %1948 = vmatprep.subr.mxu0 0.0
      %1949 = vmatpush1.msra.mxu0 %v560
      %1950 = vmatprep.subr.mxu0 0.0
      %1951 = vmatpush1.msra.mxu0 %v561
      %1952 = vmatprep.subr.mxu0 0.0
      %1953 = vmatpush1.msra.mxu0 %v562
      %1954 = vmatprep.subr.mxu0 0.0
      %1955 = vmatpush1.msra.mxu0 %v563
      %1956 = vmatprep.subr.mxu0 0.0
      %1957 = vmatpush1.msra.mxu0 %v564
      %1958 = vmatprep.subr.mxu0 0.0
      %1959 = vmatpush1.msra.mxu0 %v565
      %1960 = vmatprep.subr.mxu0 0.0
      %1961 = vmatpush1.msra.mxu0 %v566
      %1962 = vmatprep.subr.mxu0 0.0
      %1963 = vmatpush1.msra.mxu0 %v567
      %1964 = vmatprep.subr.mxu0 0.0
      %1965 = vmatpush1.msra.mxu0 0.0
      %1966 = vmatprep.subr.mxu0 0.0
      %1967 = vmatpush1.msra.mxu0 0.0
      %1968 = vmatprep.subr.mxu0 0.0
      %1969 = vmatpush1.msra.mxu0 0.0
      %1970 = vmatprep.subr.mxu0 0.0
      %1971 = vmatpush1.msra.mxu0 0.0
      %1972 = vmatprep.subr.mxu0 0.0
      %1973 = vmatpush1.msra.mxu0 0.0
      %1974 = vmatprep.subr.mxu0 0.0
      %1975 = vmatpush1.msra.mxu0 0.0
      %1976 = vmatprep.subr.mxu0 0.0
      %1977 = vmatpush1.msra.mxu0 0.0
      %1978 = vmatprep.subr.mxu0 0.0
      %1979 = vmatpush1.msra.mxu0 0.0
      %1980 = vmatprep.subr.mxu0 0.0
      %1981 = vmatpush1.msra.mxu0 0.0
      %1982 = vmatprep.subr.mxu0 0.0
      %1983 = vmatpush1.msra.mxu0 0.0
      %1984 = vmatprep.subr.mxu0 0.0
      %1985 = vmatpush1.msra.mxu0 0.0
      %1986 = vmatprep.subr.mxu0 0.0
      %1987 = vmatpush1.msra.mxu0 0.0
      %1988 = vmatprep.subr.mxu0 0.0
      %1989 = vmatpush1.msra.mxu0 0.0
      %1990 = vmatprep.subr.mxu0 0.0
      %1991 = vmatpush1.msra.mxu0 0.0
      %1992 = vmatprep.subr.mxu0 0.0
      %1993 = vmatpush1.msra.mxu0 0.0
      %1994 = vmatprep.subr.mxu0 0.0
      %1995 = vmatpush1.msra.mxu0 0.0
      %1996 = vmatprep.mubr.f32.mxu0 0.0
      %1997 = vmatmul.mubr.f32.gmra.mrb[0].mxu0 %v1905
      %v1998 = vpop.f32.mrb[0].mxu0
      %v1999 = vadd.f32 0.0, %v1998
      %v2000 = vpop.f32.mrb[0].mxu0
      %2001 = vmatprep.mubr.f32.mxu0 0.0
      %2002 = vmatmul.mubr.f32.gmra.mrb[0].mxu0 %v1906
      %v2003 = vpop.f32.mrb[0].mxu0
      %v2004 = vadd.f32 0.0, %v2003
      %v2005 = vpop.f32.mrb[0].mxu0
      %2006 = vmatprep.mubr.f32.mxu0 0.0
      %2007 = vmatmul.mubr.f32.gmra.mrb[0].mxu0 %v1907
      %v2008 = vpop.f32.mrb[0].mxu0
      %v2009 = vadd.f32 0.0, %v2008
      %v2010 = vpop.f32.mrb[0].mxu0
      %2011 = vmatprep.mubr.f32.mxu0 0.0
      %2012 = vmatmul.mubr.f32.gmra.mrb[0].mxu0 %v1908
      %v2013 = vpop.f32.mrb[0].mxu0
      %v2014 = vadd.f32 0.0, %v2013
      %v2015 = vpop.f32.mrb[0].mxu0
      %2016 = vmatprep.mubr.f32.mxu0 0.0
      %2017 = vmatmul.mubr.f32.gmra.mrb[0].mxu0 %v1909
      %v2018 = vpop.f32.mrb[0].mxu0
      %v2019 = vadd.f32 0.0, %v2018
      %v2020 = vpop.f32.mrb[0].mxu0
      %2021 = vmatprep.mubr.f32.mxu0 0.0
      %2022 = vmatmul.mubr.f32.gmra.mrb[0].mxu0 %v1910
      %v2023 = vpop.f32.mrb[0].mxu0
      %v2024 = vadd.f32 0.0, %v2023
      %v2025 = vpop.f32.mrb[0].mxu0
      %2026 = vmatprep.mubr.f32.mxu0 0.0
      %2027 = vmatmul.mubr.f32.gmra.mrb[0].mxu0 %v1911
      %v2028 = vpop.f32.mrb[0].mxu0
      %v2029 = vadd.f32 0.0, %v2028
      %v2030 = vpop.f32.mrb[0].mxu0
      %2031 = vmatprep.mubr.f32.mxu0 0.0
      %2032 = vmatmul.mubr.f32.gmra.mrb[0].mxu0 %v1912
      %v2033 = vpop.f32.mrb[0].mxu0
      %v2034 = vadd.f32 0.0, %v2033
      %v2035 = vpop.f32.mrb[0].mxu0
      %2036 = vmatprep.mubr.f32.mxu0 0.0
      %2037 = vmatmul.mubr.f32.gmra.mrb[0].mxu0 %v1913
      %v2038 = vpop.f32.mrb[0].mxu0
      %v2039 = vadd.f32 0.0, %v2038
      %v2040 = vpop.f32.mrb[0].mxu0
      %2041 = vmatprep.mubr.f32.mxu0 0.0
      %2042 = vmatmul.mubr.f32.gmra.mrb[0].mxu0 %v1914
      %v2043 = vpop.f32.mrb[0].mxu0
      %v2044 = vadd.f32 0.0, %v2043
      %v2045 = vpop.f32.mrb[0].mxu0
      %2046 = vmatprep.mubr.f32.mxu0 0.0
      %2047 = vmatmul.mubr.f32.gmra.mrb[0].mxu0 %v1915
      %v2048 = vpop.f32.mrb[0].mxu0
      %v2049 = vadd.f32 0.0, %v2048
      %v2050 = vpop.f32.mrb[0].mxu0
      %2051 = vmatprep.mubr.f32.mxu0 0.0
      %2052 = vmatmul.mubr.f32.gmra.mrb[0].mxu0 %v1916
      %v2053 = vpop.f32.mrb[0].mxu0
      %v2054 = vadd.f32 0.0, %v2053
      %v2055 = vpop.f32.mrb[0].mxu0
      %2056 = vmatprep.mubr.f32.mxu0 0.0
      %2057 = vmatmul.mubr.f32.gmra.mrb[0].mxu0 %v1917
      %v2058 = vpop.f32.mrb[0].mxu0
      %v2059 = vadd.f32 0.0, %v2058
      %v2060 = vpop.f32.mrb[0].mxu0
      %2061 = vmatprep.mubr.f32.mxu0 0.0
      %2062 = vmatmul.mubr.f32.gmra.mrb[0].mxu0 %v1918
      %v2063 = vpop.f32.mrb[0].mxu0
      %v2064 = vadd.f32 0.0, %v2063
      %v2065 = vpop.f32.mrb[0].mxu0
      %2066 = vmatprep.mubr.f32.mxu0 0.0
      %2067 = vmatmul.mubr.f32.gmra.mrb[0].mxu0 %v1919
      %v2068 = vpop.f32.mrb[0].mxu0
      %v2069 = vadd.f32 0.0, %v2068
      %v2070 = vpop.f32.mrb[0].mxu0
      %2071 = vmatprep.mubr.f32.mxu0 0.0
      %2072 = vmatmul.mubr.f32.gmra.mrb[0].mxu0 %v1920
      %v2073 = vpop.f32.mrb[0].mxu0
      %v2074 = vadd.f32 0.0, %v2073
      %v2075 = vpop.f32.mrb[0].mxu0
      %2076 = vmatprep.mubr.f32.mxu0 0.0
      %2077 = vmatmul.mubr.f32.gmra.mrb[0].mxu0 %v1921
      %v2078 = vpop.f32.mrb[0].mxu0
      %v2079 = vadd.f32 0.0, %v2078
      %v2080 = vpop.f32.mrb[0].mxu0
      %2081 = vmatprep.mubr.f32.mxu0 0.0
      %2082 = vmatmul.mubr.f32.gmra.mrb[0].mxu0 %v1922
      %v2083 = vpop.f32.mrb[0].mxu0
      %v2084 = vadd.f32 0.0, %v2083
      %v2085 = vpop.f32.mrb[0].mxu0
      %2086 = vmatprep.mubr.f32.mxu0 0.0
      %2087 = vmatmul.mubr.f32.gmra.mrb[0].mxu0 %v1923
      %v2088 = vpop.f32.mrb[0].mxu0
      %v2089 = vadd.f32 0.0, %v2088
      %v2090 = vpop.f32.mrb[0].mxu0
      %2091 = vmatprep.mubr.f32.mxu0 0.0
      %2092 = vmatmul.mubr.f32.gmra.mrb[0].mxu0 %v1924
      %v2093 = vpop.f32.mrb[0].mxu0
      %v2094 = vadd.f32 0.0, %v2093
      %v2095 = vpop.f32.mrb[0].mxu0
      %2096 = vmatprep.mubr.f32.mxu0 0.0
      %2097 = vmatmul.mubr.f32.gmra.mrb[0].mxu0 %v1925
      %v2098 = vpop.f32.mrb[0].mxu0
      %v2099 = vadd.f32 0.0, %v2098
      %v2100 = vpop.f32.mrb[0].mxu0
      %2101 = vmatprep.mubr.f32.mxu0 0.0
      %2102 = vmatmul.mubr.f32.gmra.mrb[0].mxu0 %v1926
      %v2103 = vpop.f32.mrb[0].mxu0
      %v2104 = vadd.f32 0.0, %v2103
      %v2105 = vpop.f32.mrb[0].mxu0
      %2106 = vmatprep.mubr.f32.mxu0 0.0
      %2107 = vmatmul.mubr.f32.gmra.mrb[0].mxu0 %v1927
      %v2108 = vpop.f32.mrb[0].mxu0
      %v2109 = vadd.f32 0.0, %v2108
      %v2110 = vpop.f32.mrb[0].mxu0
      %2111 = vmatprep.mubr.f32.mxu0 0.0
      %2112 = vmatmul.mubr.f32.gmra.mrb[0].mxu0 %v1928
      %v2113 = vpop.f32.mrb[0].mxu0
      %v2114 = vadd.f32 0.0, %v2113
      %v2115 = vpop.f32.mrb[0].mxu0
      %2116 = vmatprep.mubr.f32.mxu0 0.0
      %2117 = vmatmul.mubr.f32.gmra.mrb[0].mxu0 %v1929
      %v2118 = vpop.f32.mrb[0].mxu0
      %v2119 = vadd.f32 0.0, %v2118
      %v2120 = vpop.f32.mrb[0].mxu0
      %2121 = vdwg.mxu0
      %v2122 = vsub.f32 %v1905, %v1999
      %v2123 = vsub.f32 %v1906, %v2004
      %v2124 = vsub.f32 %v1907, %v2009
      %v2125 = vsub.f32 %v1908, %v2014
      %v2126 = vsub.f32 %v1909, %v2019
      %v2127 = vsub.f32 %v1910, %v2024
      %v2128 = vsub.f32 %v1911, %v2029
      %v2129 = vsub.f32 %v1912, %v2034
      %v2130 = vsub.f32 %v1913, %v2039
      %v2131 = vsub.f32 %v1914, %v2044
      %v2132 = vsub.f32 %v1915, %v2049
      %v2133 = vsub.f32 %v1916, %v2054
      %v2134 = vsub.f32 %v1917, %v2059
      %v2135 = vsub.f32 %v1918, %v2064
      %v2136 = vsub.f32 %v1919, %v2069
      %v2137 = vsub.f32 %v1920, %v2074
      %v2138 = vsub.f32 %v1921, %v2079
      %v2139 = vsub.f32 %v1922, %v2084
      %v2140 = vsub.f32 %v1923, %v2089
      %v2141 = vsub.f32 %v1924, %v2094
      %v2142 = vsub.f32 %v1925, %v2099
      %v2143 = vsub.f32 %v1926, %v2104
      %v2144 = vsub.f32 %v1927, %v2109
      %v2145 = vsub.f32 %v1928, %v2114
      %v2146 = vsub.f32 %v1929, %v2119
      %v2147 = vmul.f32 %v2122, %v2122
      %v2148 = vmul.f32 %v2123, %v2123
      %v2149 = vmul.f32 %v2124, %v2124
      %v2150 = vmul.f32 %v2125, %v2125
      %v2151 = vmul.f32 %v2126, %v2126
      %v2152 = vmul.f32 %v2127, %v2127
      %v2153 = vmul.f32 %v2128, %v2128
      %v2154 = vmul.f32 %v2129, %v2129
      %v2155 = vmul.f32 %v2130, %v2130
      %v2156 = vmul.f32 %v2131, %v2131
      %v2157 = vmul.f32 %v2132, %v2132
      %v2158 = vmul.f32 %v2133, %v2133
      %v2159 = vmul.f32 %v2134, %v2134
      %v2160 = vmul.f32 %v2135, %v2135
      %v2161 = vmul.f32 %v2136, %v2136
      %v2162 = vmul.f32 %v2137, %v2137
      %v2163 = vmul.f32 %v2138, %v2138
      %v2164 = vmul.f32 %v2139, %v2139
      %v2165 = vmul.f32 %v2140, %v2140
      %v2166 = vmul.f32 %v2141, %v2141
      %v2167 = vmul.f32 %v2142, %v2142
      %v2168 = vmul.f32 %v2143, %v2143
      %v2169 = vmul.f32 %v2144, %v2144
      %v2170 = vmul.f32 %v2145, %v2145
      %v2171 = vmul.f32 %v2146, %v2146
      %2172 = vmatprep.subr.mxu0 0.0
      %2173 = vmatpush1.msra.mxu0 %v552
      %2174 = vmatprep.subr.mxu0 0.0
      %2175 = vmatpush1.msra.mxu0 %v553
      %2176 = vmatprep.subr.mxu0 0.0
      %2177 = vmatpush1.msra.mxu0 %v554
      %2178 = vmatprep.subr.mxu0 0.0
      %2179 = vmatpush1.msra.mxu0 %v555
      %2180 = vmatprep.subr.mxu0 0.0
      %2181 = vmatpush1.msra.mxu0 %v556
      %2182 = vmatprep.subr.mxu0 0.0
      %2183 = vmatpush1.msra.mxu0 %v557
      %2184 = vmatprep.subr.mxu0 0.0
      %2185 = vmatpush1.msra.mxu0 %v558
      %2186 = vmatprep.subr.mxu0 0.0
      %2187 = vmatpush1.msra.mxu0 %v559
      %2188 = vmatprep.subr.mxu0 0.0
      %2189 = vmatpush1.msra.mxu0 %v560
      %2190 = vmatprep.subr.mxu0 0.0
      %2191 = vmatpush1.msra.mxu0 %v561
      %2192 = vmatprep.subr.mxu0 0.0
      %2193 = vmatpush1.msra.mxu0 %v562
      %2194 = vmatprep.subr.mxu0 0.0
      %2195 = vmatpush1.msra.mxu0 %v563
      %2196 = vmatprep.subr.mxu0 0.0
      %2197 = vmatpush1.msra.mxu0 %v564
      %2198 = vmatprep.subr.mxu0 0.0
      %2199 = vmatpush1.msra.mxu0 %v565
      %2200 = vmatprep.subr.mxu0 0.0
      %2201 = vmatpush1.msra.mxu0 %v566
      %2202 = vmatprep.subr.mxu0 0.0
      %2203 = vmatpush1.msra.mxu0 %v567
      %2204 = vmatprep.subr.mxu0 0.0
      %2205 = vmatpush1.msra.mxu0 0.0
      %2206 = vmatprep.subr.mxu0 0.0
      %2207 = vmatpush1.msra.mxu0 0.0
      %2208 = vmatprep.subr.mxu0 0.0
      %2209 = vmatpush1.msra.mxu0 0.0
      %2210 = vmatprep.subr.mxu0 0.0
      %2211 = vmatpush1.msra.mxu0 0.0
      %2212 = vmatprep.subr.mxu0 0.0
      %2213 = vmatpush1.msra.mxu0 0.0
      %2214 = vmatprep.subr.mxu0 0.0
      %2215 = vmatpush1.msra.mxu0 0.0
      %2216 = vmatprep.subr.mxu0 0.0
      %2217 = vmatpush1.msra.mxu0 0.0
      %2218 = vmatprep.subr.mxu0 0.0
      %2219 = vmatpush1.msra.mxu0 0.0
      %2220 = vmatprep.subr.mxu0 0.0
      %2221 = vmatpush1.msra.mxu0 0.0
      %2222 = vmatprep.subr.mxu0 0.0
      %2223 = vmatpush1.msra.mxu0 0.0
      %2224 = vmatprep.subr.mxu0 0.0
      %2225 = vmatpush1.msra.mxu0 0.0
      %2226 = vmatprep.subr.mxu0 0.0
      %2227 = vmatpush1.msra.mxu0 0.0
      %2228 = vmatprep.subr.mxu0 0.0
      %2229 = vmatpush1.msra.mxu0 0.0
      %2230 = vmatprep.subr.mxu0 0.0
      %2231 = vmatpush1.msra.mxu0 0.0
      %2232 = vmatprep.subr.mxu0 0.0
      %2233 = vmatpush1.msra.mxu0 0.0
      %2234 = vmatprep.subr.mxu0 0.0
      %2235 = vmatpush1.msra.mxu0 0.0
      %2236 = vmatprep.mubr.f32.mxu0 0.0
      %2237 = vmatmul.mubr.f32.gmra.mrb[0].mxu0 %v2147
      %v2238 = vpop.f32.mrb[0].mxu0
      %v2239 = vadd.f32 1e-06, %v2238
      %v2240 = vpop.f32.mrb[0].mxu0
      %2241 = vmatprep.mubr.f32.mxu0 0.0
      %2242 = vmatmul.mubr.f32.gmra.mrb[0].mxu0 %v2148
      %v2243 = vpop.f32.mrb[0].mxu0
      %v2244 = vadd.f32 1e-06, %v2243
      %v2245 = vpop.f32.mrb[0].mxu0
      %2246 = vmatprep.mubr.f32.mxu0 0.0
      %2247 = vmatmul.mubr.f32.gmra.mrb[0].mxu0 %v2149
      %v2248 = vpop.f32.mrb[0].mxu0
      %v2249 = vadd.f32 1e-06, %v2248
      %v2250 = vpop.f32.mrb[0].mxu0
      %2251 = vmatprep.mubr.f32.mxu0 0.0
      %2252 = vmatmul.mubr.f32.gmra.mrb[0].mxu0 %v2150
      %v2253 = vpop.f32.mrb[0].mxu0
      %v2254 = vadd.f32 1e-06, %v2253
      %v2255 = vpop.f32.mrb[0].mxu0
      %2256 = vmatprep.mubr.f32.mxu0 0.0
      %2257 = vmatmul.mubr.f32.gmra.mrb[0].mxu0 %v2151
      %v2258 = vpop.f32.mrb[0].mxu0
      %v2259 = vadd.f32 1e-06, %v2258
      %v2260 = vpop.f32.mrb[0].mxu0
      %2261 = vmatprep.mubr.f32.mxu0 0.0
      %2262 = vmatmul.mubr.f32.gmra.mrb[0].mxu0 %v2152
      %v2263 = vpop.f32.mrb[0].mxu0
      %v2264 = vadd.f32 1e-06, %v2263
      %v2265 = vpop.f32.mrb[0].mxu0
      %2266 = vmatprep.mubr.f32.mxu0 0.0
      %2267 = vmatmul.mubr.f32.gmra.mrb[0].mxu0 %v2153
      %v2268 = vpop.f32.mrb[0].mxu0
      %v2269 = vadd.f32 1e-06, %v2268
      %v2270 = vpop.f32.mrb[0].mxu0
      %2271 = vmatprep.mubr.f32.mxu0 0.0
      %2272 = vmatmul.mubr.f32.gmra.mrb[0].mxu0 %v2154
      %v2273 = vpop.f32.mrb[0].mxu0
      %v2274 = vadd.f32 1e-06, %v2273
      %v2275 = vpop.f32.mrb[0].mxu0
      %2276 = vmatprep.mubr.f32.mxu0 0.0
      %2277 = vmatmul.mubr.f32.gmra.mrb[0].mxu0 %v2155
      %v2278 = vpop.f32.mrb[0].mxu0
      %v2279 = vadd.f32 1e-06, %v2278
      %v2280 = vpop.f32.mrb[0].mxu0
      %2281 = vmatprep.mubr.f32.mxu0 0.0
      %2282 = vmatmul.mubr.f32.gmra.mrb[0].mxu0 %v2156
      %v2283 = vpop.f32.mrb[0].mxu0
      %v2284 = vadd.f32 1e-06, %v2283
      %v2285 = vpop.f32.mrb[0].mxu0
      %2286 = vmatprep.mubr.f32.mxu0 0.0
      %2287 = vmatmul.mubr.f32.gmra.mrb[0].mxu0 %v2157
      %v2288 = vpop.f32.mrb[0].mxu0
      %v2289 = vadd.f32 1e-06, %v2288
      %v2290 = vpop.f32.mrb[0].mxu0
      %2291 = vmatprep.mubr.f32.mxu0 0.0
      %2292 = vmatmul.mubr.f32.gmra.mrb[0].mxu0 %v2158
      %v2293 = vpop.f32.mrb[0].mxu0
      %v2294 = vadd.f32 1e-06, %v2293
      %v2295 = vpop.f32.mrb[0].mxu0
      %2296 = vmatprep.mubr.f32.mxu0 0.0
      %2297 = vmatmul.mubr.f32.gmra.mrb[0].mxu0 %v2159
      %v2298 = vpop.f32.mrb[0].mxu0
      %v2299 = vadd.f32 1e-06, %v2298
      %v2300 = vpop.f32.mrb[0].mxu0
      %2301 = vmatprep.mubr.f32.mxu0 0.0
      %2302 = vmatmul.mubr.f32.gmra.mrb[0].mxu0 %v2160
      %v2303 = vpop.f32.mrb[0].mxu0
      %v2304 = vadd.f32 1e-06, %v2303
      %v2305 = vpop.f32.mrb[0].mxu0
      %2306 = vmatprep.mubr.f32.mxu0 0.0
      %2307 = vmatmul.mubr.f32.gmra.mrb[0].mxu0 %v2161
      %v2308 = vpop.f32.mrb[0].mxu0
      %v2309 = vadd.f32 1e-06, %v2308
      %v2310 = vpop.f32.mrb[0].mxu0
      %2311 = vmatprep.mubr.f32.mxu0 0.0
      %2312 = vmatmul.mubr.f32.gmra.mrb[0].mxu0 %v2162
      %v2313 = vpop.f32.mrb[0].mxu0
      %v2314 = vadd.f32 1e-06, %v2313
      %v2315 = vpop.f32.mrb[0].mxu0
      %2316 = vmatprep.mubr.f32.mxu0 0.0
      %2317 = vmatmul.mubr.f32.gmra.mrb[0].mxu0 %v2163
      %v2318 = vpop.f32.mrb[0].mxu0
      %v2319 = vadd.f32 1e-06, %v2318
      %v2320 = vpop.f32.mrb[0].mxu0
      %2321 = vmatprep.mubr.f32.mxu0 0.0
      %2322 = vmatmul.mubr.f32.gmra.mrb[0].mxu0 %v2164
      %v2323 = vpop.f32.mrb[0].mxu0
      %v2324 = vadd.f32 1e-06, %v2323
      %v2325 = vpop.f32.mrb[0].mxu0
      %2326 = vmatprep.mubr.f32.mxu0 0.0
      %2327 = vmatmul.mubr.f32.gmra.mrb[0].mxu0 %v2165
      %v2328 = vpop.f32.mrb[0].mxu0
      %v2329 = vadd.f32 1e-06, %v2328
      %v2330 = vpop.f32.mrb[0].mxu0
      %2331 = vmatprep.mubr.f32.mxu0 0.0
      %2332 = vmatmul.mubr.f32.gmra.mrb[0].mxu0 %v2166
      %v2333 = vpop.f32.mrb[0].mxu0
      %v2334 = vadd.f32 1e-06, %v2333
      %v2335 = vpop.f32.mrb[0].mxu0
      %2336 = vmatprep.mubr.f32.mxu0 0.0
      %2337 = vmatmul.mubr.f32.gmra.mrb[0].mxu0 %v2167
      %v2338 = vpop.f32.mrb[0].mxu0
      %v2339 = vadd.f32 1e-06, %v2338
      %v2340 = vpop.f32.mrb[0].mxu0
      %2341 = vmatprep.mubr.f32.mxu0 0.0
      %2342 = vmatmul.mubr.f32.gmra.mrb[0].mxu0 %v2168
      %v2343 = vpop.f32.mrb[0].mxu0
      %v2344 = vadd.f32 1e-06, %v2343
      %v2345 = vpop.f32.mrb[0].mxu0
      %2346 = vmatprep.mubr.f32.mxu0 0.0
      %2347 = vmatmul.mubr.f32.gmra.mrb[0].mxu0 %v2169
      %v2348 = vpop.f32.mrb[0].mxu0
      %v2349 = vadd.f32 1e-06, %v2348
      %v2350 = vpop.f32.mrb[0].mxu0
      %2351 = vmatprep.mubr.f32.mxu0 0.0
      %2352 = vmatmul.mubr.f32.gmra.mrb[0].mxu0 %v2170
      %v2353 = vpop.f32.mrb[0].mxu0
      %v2354 = vadd.f32 1e-06, %v2353
      %v2355 = vpop.f32.mrb[0].mxu0
      %2356 = vmatprep.mubr.f32.mxu0 0.0
      %2357 = vmatmul.mubr.f32.gmra.mrb[0].mxu0 %v2171
      %v2358 = vpop.f32.mrb[0].mxu0
      %v2359 = vadd.f32 1e-06, %v2358
      %v2360 = vpop.f32.mrb[0].mxu0
      %2361 = vdwg.mxu0
      %v2362 = vrsqrt.pop %v2239
      %v2363 = vrsqrt.pop %v2244
      %v2364 = vrsqrt.pop %v2249
      %v2365 = vrsqrt.pop %v2254
      %v2366 = vrsqrt.pop %v2259
      %v2367 = vrsqrt.pop %v2264
      %v2368 = vrsqrt.pop %v2269
      %v2369 = vrsqrt.pop %v2274
      %v2370 = vrsqrt.pop %v2279
      %v2371 = vrsqrt.pop %v2284
      %v2372 = vrsqrt.pop %v2289
      %v2373 = vrsqrt.pop %v2294
      %v2374 = vrsqrt.pop %v2299
      %v2375 = vrsqrt.pop %v2304
      %v2376 = vrsqrt.pop %v2309
      %v2377 = vrsqrt.pop %v2314
      %v2378 = vrsqrt.pop %v2319
      %v2379 = vrsqrt.pop %v2324
      %v2380 = vrsqrt.pop %v2329
      %v2381 = vrsqrt.pop %v2334
      %v2382 = vrsqrt.pop %v2339
      %v2383 = vrsqrt.pop %v2344
      %v2384 = vrsqrt.pop %v2349
      %v2385 = vrsqrt.pop %v2354
      %v2386 = vrsqrt.pop %v2359
      %v2387 = vmul.f32 %v2122, %v2362
      %v2388 = vmul.f32 %v2123, %v2363
      %v2389 = vmul.f32 %v2124, %v2364
      %v2390 = vmul.f32 %v2125, %v2365
      %v2391 = vmul.f32 %v2126, %v2366
      %v2392 = vmul.f32 %v2127, %v2367
      %v2393 = vmul.f32 %v2128, %v2368
      %v2394 = vmul.f32 %v2129, %v2369
      %v2395 = vmul.f32 %v2130, %v2370
      %v2396 = vmul.f32 %v2131, %v2371
      %v2397 = vmul.f32 %v2132, %v2372
      %v2398 = vmul.f32 %v2133, %v2373
      %v2399 = vmul.f32 %v2134, %v2374
      %v2400 = vmul.f32 %v2135, %v2375
      %v2401 = vmul.f32 %v2136, %v2376
      %v2402 = vmul.f32 %v2137, %v2377
      %v2403 = vmul.f32 %v2138, %v2378
      %v2404 = vmul.f32 %v2139, %v2379
      %v2405 = vmul.f32 %v2140, %v2380
      %v2406 = vmul.f32 %v2141, %v2381
      %v2407 = vmul.f32 %v2142, %v2382
      %v2408 = vmul.f32 %v2143, %v2383
      %v2409 = vmul.f32 %v2144, %v2384
      %v2410 = vmul.f32 %v2145, %v2385
      %v2411 = vmul.f32 %v2146, %v2386
      %v2413 = vlaneseq
      %v2414 = vshrl.u32 %v2413, 7
      %v2415 = vsub.s32 0, %v2414
      %v2416 = vrot.slane %v1930, %v2415
      %v2418 = vmul.f32 %v2387, %v2416
      %v2419 = vmul.f32 %v2388, %v2416
      %v2420 = vmul.f32 %v2389, %v2416
      %v2421 = vmul.f32 %v2390, %v2416
      %v2422 = vmul.f32 %v2391, %v2416
      %v2423 = vmul.f32 %v2392, %v2416
      %v2424 = vmul.f32 %v2393, %v2416
      %v2425 = vmul.f32 %v2394, %v2416
      %v2426 = vmul.f32 %v2395, %v2416
      %v2427 = vmul.f32 %v2396, %v2416
      %v2428 = vmul.f32 %v2397, %v2416
      %v2429 = vmul.f32 %v2398, %v2416
      %v2430 = vmul.f32 %v2399, %v2416
      %v2431 = vmul.f32 %v2400, %v2416
      %v2432 = vmul.f32 %v2401, %v2416
      %v2433 = vmul.f32 %v2402, %v2416
      %v2434 = vmul.f32 %v2403, %v2416
      %v2435 = vmul.f32 %v2404, %v2416
      %v2436 = vmul.f32 %v2405, %v2416
      %v2437 = vmul.f32 %v2406, %v2416
      %v2438 = vmul.f32 %v2407, %v2416
      %v2439 = vmul.f32 %v2408, %v2416
      %v2440 = vmul.f32 %v2409, %v2416
      %v2441 = vmul.f32 %v2410, %v2416
      %v2442 = vmul.f32 %v2411, %v2416
      %v2444 = vlaneseq
      %v2445 = vshrl.u32 %v2444, 7
      %v2446 = vsub.s32 0, %v2445
      %v2447 = vrot.slane %v1931, %v2446
      %v2449 = vadd.f32 %v2418, %v2447
      %v2450 = vadd.f32 %v2419, %v2447
      %v2451 = vadd.f32 %v2420, %v2447
      %v2452 = vadd.f32 %v2421, %v2447
      %v2453 = vadd.f32 %v2422, %v2447
      %v2454 = vadd.f32 %v2423, %v2447
      %v2455 = vadd.f32 %v2424, %v2447
      %v2456 = vadd.f32 %v2425, %v2447
      %v2457 = vadd.f32 %v2426, %v2447
      %v2458 = vadd.f32 %v2427, %v2447
      %v2459 = vadd.f32 %v2428, %v2447
      %v2460 = vadd.f32 %v2429, %v2447
      %v2461 = vadd.f32 %v2430, %v2447
      %v2462 = vadd.f32 %v2431, %v2447
      %v2463 = vadd.f32 %v2432, %v2447
      %v2464 = vadd.f32 %v2433, %v2447
      %v2465 = vadd.f32 %v2434, %v2447
      %v2466 = vadd.f32 %v2435, %v2447
      %v2467 = vadd.f32 %v2436, %v2447
      %v2468 = vadd.f32 %v2437, %v2447
      %v2469 = vadd.f32 %v2438, %v2447
      %v2470 = vadd.f32 %v2439, %v2447
      %v2471 = vadd.f32 %v2440, %v2447
      %v2472 = vadd.f32 %v2441, %v2447
      %v2473 = vadd.f32 %v2442, %v2447
      %v2474 = vpack.c.bf16 %v2450, %v2449
      %v2475 = vpack.c.bf16 %v2452, %v2451
      %v2476 = vpack.c.bf16 %v2454, %v2453
      %v2477 = vpack.c.bf16 %v2456, %v2455
      %v2478 = vpack.c.bf16 %v2458, %v2457
      %v2479 = vpack.c.bf16 %v2460, %v2459
      %v2480 = vpack.c.bf16 %v2462, %v2461
      %v2481 = vpack.c.bf16 %v2464, %v2463
      %v2482 = vpack.c.bf16 %v2466, %v2465
      %v2483 = vpack.c.bf16 %v2468, %v2467
      %v2484 = vpack.c.bf16 %v2470, %v2469
      %v2485 = vpack.c.bf16 %v2472, %v2471
      %v2486 = vpack.c.bf16 %v2473, %v2473
      %v2487 = vld [vmem:[%s11] sm:$0xff]
      %v2488 = vld [vmem:[%s11 + $0x8] sm:$0xff]
      %v2489 = vld [vmem:[%s11 + $0x10] sm:$0xff]
      %v2490 = vld [vmem:[%s11 + $0x18] sm:$0xff]
      %v2491 = vld [vmem:[%s11 + $0x20] sm:$0xff]
      %v2492 = vld [vmem:[%s11 + $0x28] sm:$0xff]
      %v2493 = vld [vmem:[%s11 + $0x30] sm:$0xff]
      %v2494 = vld [vmem:[%s11 + $0x38] sm:$0xff]
      %v2495 = vld [vmem:[%s11 + $0x40] sm:$0xff]
      %v2496 = vld [vmem:[%s11 + $0x48] sm:$0xff]
      %v2497 = vld [vmem:[%s11 + $0x50] sm:$0xff]
      %v2498 = vld [vmem:[%s11 + $0x58] sm:$0xff]
      %v2499 = vld [vmem:[%s11 + $0x60] sm:$0xff]
      %v2500 = vld [vmem:[%s11 + $0x68] sm:$0xff]
      %v2501 = vld [vmem:[%s11 + $0x70] sm:$0xff]
      %v2502 = vld [vmem:[%s11 + $0x78] sm:$0xff]
      %v2503 = vld [vmem:[%s11 + $0x80] sm:$0xff]
      %v2504 = vld [vmem:[%s11 + $0x88] sm:$0xff]
      %v2505 = vld [vmem:[%s11 + $0x90] sm:$0xff]
      %v2506 = vld [vmem:[%s11 + $0x98] sm:$0xff]
      %v2507 = vld [vmem:[%s11 + $0xa0] sm:$0xff]
      %v2508 = vld [vmem:[%s11 + $0xa8] sm:$0xff]
      %v2509 = vld [vmem:[%s11 + $0xb0] sm:$0xff]
      %v2510 = vld [vmem:[%s11 + $0xb8] sm:$0xff]
      %v2511 = vld [vmem:[%s11 + $0xc0] sm:$0xff]
      %v2512 = vld [vmem:[%s11 + $0xc8] sm:$0xff]
      %v2513 = vld [vmem:[%s11 + $0xd0] sm:$0xff]
      %v2514 = vld [vmem:[%s11 + $0xd8] sm:$0xff]
      %v2515 = vld [vmem:[%s11 + $0xe0] sm:$0xff]
      %v2516 = vld [vmem:[%s11 + $0xe8] sm:$0xff]
      %v2517 = vld [vmem:[%s11 + $0xf0] sm:$0xff]
      %v2518 = vld [vmem:[%s11 + $0xf8] sm:$0xff]
      %v2519 = vld [vmem:[%s12] sm:$0xf]
      %v2521 = vlaneseq
      %v2522 = vshrl.u32 %v2521, 7
      %v2523 = vsub.s32 0, %v2522
      %v2524 = vrot.slane %v2519, %v2523
      %v2525 = vlaneseq
      %v2526 = vshrl.u32 %v2525, 7
      %v2527 = vsub.s32 1, %v2526
      %v2528 = vrot.slane %v2519, %v2527
      %v2529 = vlaneseq
      %v2530 = vshrl.u32 %v2529, 7
      %v2531 = vsub.s32 2, %v2530
      %v2532 = vrot.slane %v2519, %v2531
      %v2533 = vlaneseq
      %v2534 = vshrl.u32 %v2533, 7
      %v2535 = vsub.s32 3, %v2534
      %v2536 = vrot.slane %v2519, %v2535
      %v2573 = vunpack.c.l.b16 %v2487
      %v2574 = vunpack.c.h.b16 %v2487
      %v2575 = vunpack.c.l.b16 %v2488
      %v2576 = vunpack.c.h.b16 %v2488
      %v2577 = vunpack.c.l.b16 %v2489
      %v2578 = vunpack.c.h.b16 %v2489
      %v2579 = vunpack.c.l.b16 %v2490
      %v2580 = vunpack.c.h.b16 %v2490
      %v2581 = vunpack.c.l.b16 %v2491
      %v2582 = vunpack.c.h.b16 %v2491
      %v2583 = vunpack.c.l.b16 %v2492
      %v2584 = vunpack.c.h.b16 %v2492
      %v2585 = vunpack.c.l.b16 %v2493
      %v2586 = vunpack.c.h.b16 %v2493
      %v2587 = vunpack.c.l.b16 %v2494
      %v2588 = vunpack.c.h.b16 %v2494
      %v2589 = vunpack.c.l.b16 %v2495
      %v2590 = vunpack.c.h.b16 %v2495
      %v2591 = vunpack.c.l.b16 %v2496
      %v2592 = vunpack.c.h.b16 %v2496
      %v2593 = vunpack.c.l.b16 %v2497
      %v2594 = vunpack.c.h.b16 %v2497
      %v2595 = vunpack.c.l.b16 %v2498
      %v2596 = vunpack.c.h.b16 %v2498
      %v2597 = vunpack.c.l.b16 %v2499
      %v2598 = vunpack.c.h.b16 %v2499
      %v2599 = vunpack.c.l.b16 %v2500
      %v2600 = vunpack.c.h.b16 %v2500
      %v2601 = vunpack.c.l.b16 %v2501
      %v2602 = vunpack.c.h.b16 %v2501
      %v2603 = vunpack.c.l.b16 %v2502
      %v2604 = vunpack.c.h.b16 %v2502
      %v2605 = vunpack.c.l.b16 %v2503
      %v2606 = vunpack.c.h.b16 %v2503
      %v2607 = vunpack.c.l.b16 %v2504
      %v2608 = vunpack.c.h.b16 %v2504
      %v2609 = vunpack.c.l.b16 %v2505
      %v2610 = vunpack.c.h.b16 %v2505
      %v2611 = vunpack.c.l.b16 %v2506
      %v2612 = vunpack.c.h.b16 %v2506
      %v2613 = vunpack.c.l.b16 %v2507
      %v2614 = vunpack.c.h.b16 %v2507
      %v2615 = vunpack.c.l.b16 %v2508
      %v2616 = vunpack.c.h.b16 %v2508
      %v2617 = vunpack.c.l.b16 %v2509
      %v2618 = vunpack.c.h.b16 %v2509
      %v2619 = vunpack.c.l.b16 %v2510
      %v2620 = vunpack.c.h.b16 %v2510
      %v2621 = vunpack.c.l.b16 %v2511
      %v2622 = vunpack.c.h.b16 %v2511
      %v2623 = vunpack.c.l.b16 %v2512
      %v2624 = vunpack.c.h.b16 %v2512
      %v2625 = vunpack.c.l.b16 %v2513
      %v2626 = vunpack.c.h.b16 %v2513
      %v2627 = vunpack.c.l.b16 %v2514
      %v2628 = vunpack.c.h.b16 %v2514
      %v2629 = vunpack.c.l.b16 %v2515
      %v2630 = vunpack.c.h.b16 %v2515
      %v2631 = vunpack.c.l.b16 %v2516
      %v2632 = vunpack.c.h.b16 %v2516
      %v2633 = vunpack.c.l.b16 %v2517
      %v2634 = vunpack.c.h.b16 %v2517
      %v2635 = vunpack.c.l.b16 %v2518
      %v2636 = vunpack.c.h.b16 %v2518
      %v2637 = vpack.c.b16 %v2577, %v2573
      %v2638 = vpack.c.b16 %v2578, %v2574
      %v2639 = vpack.c.b16 %v2579, %v2575
      %v2640 = vpack.c.b16 %v2580, %v2576
      %v2641 = vpack.c.b16 %v2585, %v2581
      %v2642 = vpack.c.b16 %v2586, %v2582
      %v2643 = vpack.c.b16 %v2587, %v2583
      %v2644 = vpack.c.b16 %v2588, %v2584
      %v2645 = vpack.c.b16 %v2593, %v2589
      %v2646 = vpack.c.b16 %v2594, %v2590
      %v2647 = vpack.c.b16 %v2595, %v2591
      %v2648 = vpack.c.b16 %v2596, %v2592
      %v2649 = vpack.c.b16 %v2601, %v2597
      %v2650 = vpack.c.b16 %v2602, %v2598
      %v2651 = vpack.c.b16 %v2603, %v2599
      %v2652 = vpack.c.b16 %v2604, %v2600
      %v2653 = vpack.c.b16 %v2609, %v2605
      %v2654 = vpack.c.b16 %v2610, %v2606
      %v2655 = vpack.c.b16 %v2611, %v2607
      %v2656 = vpack.c.b16 %v2612, %v2608
      %v2657 = vpack.c.b16 %v2617, %v2613
      %v2658 = vpack.c.b16 %v2618, %v2614
      %v2659 = vpack.c.b16 %v2619, %v2615
      %v2660 = vpack.c.b16 %v2620, %v2616
      %v2661 = vpack.c.b16 %v2625, %v2621
      %v2662 = vpack.c.b16 %v2626, %v2622
      %v2663 = vpack.c.b16 %v2627, %v2623
      %v2664 = vpack.c.b16 %v2628, %v2624
      %v2665 = vpack.c.b16 %v2633, %v2629
      %v2666 = vpack.c.b16 %v2634, %v2630
      %v2667 = vpack.c.b16 %v2635, %v2631
      %v2668 = vpack.c.b16 %v2636, %v2632
      %2701 = vmatprep.subr.bf16.mxu0 %v2638
      %2702 = vmatpush1.bf16.msra.mxu0 %v2637
      %2703 = vmatprep.subr.bf16.mxu0 %v2642
      %2704 = vmatpush1.bf16.msra.mxu0 %v2641
      %2705 = vmatprep.subr.bf16.mxu0 %v2646
      %2706 = vmatpush1.bf16.msra.mxu0 %v2645
      %2707 = vmatprep.subr.bf16.mxu0 %v2650
      %2708 = vmatpush1.bf16.msra.mxu0 %v2649
      %2709 = vmatprep.subr.bf16.mxu0 %v2654
      %2710 = vmatpush1.bf16.msra.mxu0 %v2653
      %2711 = vmatprep.subr.bf16.mxu0 %v2658
      %2712 = vmatpush1.bf16.msra.mxu0 %v2657
      %2713 = vmatprep.subr.bf16.mxu0 %v2662
      %2714 = vmatpush1.bf16.msra.mxu0 %v2661
      %2715 = vmatprep.subr.bf16.mxu0 %v2666
      %2716 = vmatpush1.bf16.msra.mxu0 %v2665
      %2717 = vmatprep.subr.bf16.mxu0 0
      %2718 = vmatpush1.bf16.msra.mxu0 0
      %2719 = vmatprep.subr.bf16.mxu0 0
      %2720 = vmatpush1.bf16.msra.mxu0 0
      %2721 = vmatprep.subr.bf16.mxu0 0
      %2722 = vmatpush1.bf16.msra.mxu0 0
      %2723 = vmatprep.subr.bf16.mxu0 0
      %2724 = vmatpush1.bf16.msra.mxu0 0
      %2725 = vmatprep.subr.bf16.mxu0 0
      %2726 = vmatpush1.bf16.msra.mxu0 0
      %2727 = vmatprep.subr.bf16.mxu0 0
      %2728 = vmatpush1.bf16.msra.mxu0 0
      %2729 = vmatprep.subr.bf16.mxu0 0
      %2730 = vmatpush1.bf16.msra.mxu0 0
      %2731 = vmatprep.subr.bf16.mxu0 0
      %2732 = vmatpush1.bf16.msra.mxu0 0
      %2733 = vmatprep.mubr.bf16.mxu0 0
      %2734 = vmatmul.mubr.bf16.gmra.mrb[0].mxu0 %v2474
      %v2735 = vpop.f32.mrb[0].mxu0
      %v2736 = vadd.f32 %v2524, %v2735
      %v2737 = vpop.f32.mrb[0].mxu0
      %v2738 = vadd.f32 %v2528, %v2737
      %v2739 = vpop.f32.mrb[0].mxu0
      %v2740 = vadd.f32 %v2524, %v2739
      %v2741 = vpop.f32.mrb[0].mxu0
      %v2742 = vadd.f32 %v2528, %v2741
      %2743 = vmatprep.mubr.bf16.mxu0 0
      %2744 = vmatmul.mubr.bf16.gmra.mrb[0].mxu0 %v2475
      %v2745 = vpop.f32.mrb[0].mxu0
      %v2746 = vadd.f32 %v2524, %v2745
      %v2747 = vpop.f32.mrb[0].mxu0
      %v2748 = vadd.f32 %v2528, %v2747
      %v2749 = vpop.f32.mrb[0].mxu0
      %v2750 = vadd.f32 %v2524, %v2749
      %v2751 = vpop.f32.mrb[0].mxu0
      %v2752 = vadd.f32 %v2528, %v2751
      %2753 = vmatprep.mubr.bf16.mxu0 0
      %2754 = vmatmul.mubr.bf16.gmra.mrb[0].mxu0 %v2476
      %v2755 = vpop.f32.mrb[0].mxu0
      %v2756 = vadd.f32 %v2524, %v2755
      %v2757 = vpop.f32.mrb[0].mxu0
      %v2758 = vadd.f32 %v2528, %v2757
      %v2759 = vpop.f32.mrb[0].mxu0
      %v2760 = vadd.f32 %v2524, %v2759
      %v2761 = vpop.f32.mrb[0].mxu0
      %v2762 = vadd.f32 %v2528, %v2761
      %2763 = vmatprep.mubr.bf16.mxu0 0
      %2764 = vmatmul.mubr.bf16.gmra.mrb[0].mxu0 %v2477
      %v2765 = vpop.f32.mrb[0].mxu0
      %v2766 = vadd.f32 %v2524, %v2765
      %v2767 = vpop.f32.mrb[0].mxu0
      %v2768 = vadd.f32 %v2528, %v2767
      %v2769 = vpop.f32.mrb[0].mxu0
      %v2770 = vadd.f32 %v2524, %v2769
      %v2771 = vpop.f32.mrb[0].mxu0
      %v2772 = vadd.f32 %v2528, %v2771
      %2773 = vmatprep.mubr.bf16.mxu0 0
      %2774 = vmatmul.mubr.bf16.gmra.mrb[0].mxu0 %v2478
      %v2775 = vpop.f32.mrb[0].mxu0
      %v2776 = vadd.f32 %v2524, %v2775
      %v2777 = vpop.f32.mrb[0].mxu0
      %v2778 = vadd.f32 %v2528, %v2777
      %v2779 = vpop.f32.mrb[0].mxu0
      %v2780 = vadd.f32 %v2524, %v2779
      %v2781 = vpop.f32.mrb[0].mxu0
      %v2782 = vadd.f32 %v2528, %v2781
      %2783 = vmatprep.mubr.bf16.mxu0 0
      %2784 = vmatmul.mubr.bf16.gmra.mrb[0].mxu0 %v2479
      %v2785 = vpop.f32.mrb[0].mxu0
      %v2786 = vadd.f32 %v2524, %v2785
      %v2787 = vpop.f32.mrb[0].mxu0
      %v2788 = vadd.f32 %v2528, %v2787
      %v2789 = vpop.f32.mrb[0].mxu0
      %v2790 = vadd.f32 %v2524, %v2789
      %v2791 = vpop.f32.mrb[0].mxu0
      %v2792 = vadd.f32 %v2528, %v2791
      %2793 = vmatprep.mubr.bf16.mxu0 0
      %2794 = vmatmul.mubr.bf16.gmra.mrb[0].mxu0 %v2480
      %v2795 = vpop.f32.mrb[0].mxu0
      %v2796 = vadd.f32 %v2524, %v2795
      %v2797 = vpop.f32.mrb[0].mxu0
      %v2798 = vadd.f32 %v2528, %v2797
      %v2799 = vpop.f32.mrb[0].mxu0
      %v2800 = vadd.f32 %v2524, %v2799
      %v2801 = vpop.f32.mrb[0].mxu0
      %v2802 = vadd.f32 %v2528, %v2801
      %2803 = vmatprep.mubr.bf16.mxu0 0
      %2804 = vmatmul.mubr.bf16.gmra.mrb[0].mxu0 %v2481
      %v2805 = vpop.f32.mrb[0].mxu0
      %v2806 = vadd.f32 %v2524, %v2805
      %v2807 = vpop.f32.mrb[0].mxu0
      %v2808 = vadd.f32 %v2528, %v2807
      %v2809 = vpop.f32.mrb[0].mxu0
      %v2810 = vadd.f32 %v2524, %v2809
      %v2811 = vpop.f32.mrb[0].mxu0
      %v2812 = vadd.f32 %v2528, %v2811
      %2813 = vmatprep.mubr.bf16.mxu0 0
      %2814 = vmatmul.mubr.bf16.gmra.mrb[0].mxu0 %v2482
      %v2815 = vpop.f32.mrb[0].mxu0
      %v2816 = vadd.f32 %v2524, %v2815
      %v2817 = vpop.f32.mrb[0].mxu0
      %v2818 = vadd.f32 %v2528, %v2817
      %v2819 = vpop.f32.mrb[0].mxu0
      %v2820 = vadd.f32 %v2524, %v2819
      %v2821 = vpop.f32.mrb[0].mxu0
      %v2822 = vadd.f32 %v2528, %v2821
      %2823 = vmatprep.mubr.bf16.mxu0 0
      %2824 = vmatmul.mubr.bf16.gmra.mrb[0].mxu0 %v2483
      %v2825 = vpop.f32.mrb[0].mxu0
      %v2826 = vadd.f32 %v2524, %v2825
      %v2827 = vpop.f32.mrb[0].mxu0
      %v2828 = vadd.f32 %v2528, %v2827
      %v2829 = vpop.f32.mrb[0].mxu0
      %v2830 = vadd.f32 %v2524, %v2829
      %v2831 = vpop.f32.mrb[0].mxu0
      %v2832 = vadd.f32 %v2528, %v2831
      %2833 = vmatprep.mubr.bf16.mxu0 0
      %2834 = vmatmul.mubr.bf16.gmra.mrb[0].mxu0 %v2484
      %v2835 = vpop.f32.mrb[0].mxu0
      %v2836 = vadd.f32 %v2524, %v2835
      %v2837 = vpop.f32.mrb[0].mxu0
      %v2838 = vadd.f32 %v2528, %v2837
      %v2839 = vpop.f32.mrb[0].mxu0
      %v2840 = vadd.f32 %v2524, %v2839
      %v2841 = vpop.f32.mrb[0].mxu0
      %v2842 = vadd.f32 %v2528, %v2841
      %2843 = vmatprep.mubr.bf16.mxu0 0
      %2844 = vmatmul.mubr.bf16.gmra.mrb[0].mxu0 %v2485
      %v2845 = vpop.f32.mrb[0].mxu0
      %v2846 = vadd.f32 %v2524, %v2845
      %v2847 = vpop.f32.mrb[0].mxu0
      %v2848 = vadd.f32 %v2528, %v2847
      %v2849 = vpop.f32.mrb[0].mxu0
      %v2850 = vadd.f32 %v2524, %v2849
      %v2851 = vpop.f32.mrb[0].mxu0
      %v2852 = vadd.f32 %v2528, %v2851
      %2853 = vmatprep.mubr.bf16.mxu0 0
      %2854 = vmatmul.mubr.bf16.gmra.mrb[0].mxu0 %v2486
      %v2855 = vpop.f32.mrb[0].mxu0
      %v2856 = vadd.f32 %v2524, %v2855
      %v2857 = vpop.f32.mrb[0].mxu0
      %v2858 = vadd.f32 %v2528, %v2857
      %v2859 = vpop.f32.mrb[0].mxu0
      %v2860 = vpop.f32.mrb[0].mxu0
      %2861 = vdwg.mxu0
      %2862 = vmatprep.subr.bf16.mxu0 %v2640
      %2863 = vmatpush1.bf16.msra.mxu0 %v2639
      %2864 = vmatprep.subr.bf16.mxu0 %v2644
      %2865 = vmatpush1.bf16.msra.mxu0 %v2643
      %2866 = vmatprep.subr.bf16.mxu0 %v2648
      %2867 = vmatpush1.bf16.msra.mxu0 %v2647
      %2868 = vmatprep.subr.bf16.mxu0 %v2652
      %2869 = vmatpush1.bf16.msra.mxu0 %v2651
      %2870 = vmatprep.subr.bf16.mxu0 %v2656
      %2871 = vmatpush1.bf16.msra.mxu0 %v2655
      %2872 = vmatprep.subr.bf16.mxu0 %v2660
      %2873 = vmatpush1.bf16.msra.mxu0 %v2659
      %2874 = vmatprep.subr.bf16.mxu0 %v2664
      %2875 = vmatpush1.bf16.msra.mxu0 %v2663
      %2876 = vmatprep.subr.bf16.mxu0 %v2668
      %2877 = vmatpush1.bf16.msra.mxu0 %v2667
      %2878 = vmatprep.subr.bf16.mxu0 0
      %2879 = vmatpush1.bf16.msra.mxu0 0
      %2880 = vmatprep.subr.bf16.mxu0 0
      %2881 = vmatpush1.bf16.msra.mxu0 0
      %2882 = vmatprep.subr.bf16.mxu0 0
      %2883 = vmatpush1.bf16.msra.mxu0 0
      %2884 = vmatprep.subr.bf16.mxu0 0
      %2885 = vmatpush1.bf16.msra.mxu0 0
      %2886 = vmatprep.subr.bf16.mxu0 0
      %2887 = vmatpush1.bf16.msra.mxu0 0
      %2888 = vmatprep.subr.bf16.mxu0 0
      %2889 = vmatpush1.bf16.msra.mxu0 0
      %2890 = vmatprep.subr.bf16.mxu0 0
      %2891 = vmatpush1.bf16.msra.mxu0 0
      %2892 = vmatprep.subr.bf16.mxu0 0
      %2893 = vmatpush1.bf16.msra.mxu0 0
      %2894 = vmatprep.mubr.bf16.mxu0 0
      %2895 = vmatmul.mubr.bf16.gmra.mrb[0].mxu0 %v2474
      %v2896 = vpop.f32.mrb[0].mxu0
      %v2897 = vadd.f32 %v2532, %v2896
      %v2898 = vpop.f32.mrb[0].mxu0
      %v2899 = vadd.f32 %v2536, %v2898
      %v2900 = vpop.f32.mrb[0].mxu0
      %v2901 = vadd.f32 %v2532, %v2900
      %v2902 = vpop.f32.mrb[0].mxu0
      %v2903 = vadd.f32 %v2536, %v2902
      %2904 = vmatprep.mubr.bf16.mxu0 0
      %2905 = vmatmul.mubr.bf16.gmra.mrb[0].mxu0 %v2475
      %v2906 = vpop.f32.mrb[0].mxu0
      %v2907 = vadd.f32 %v2532, %v2906
      %v2908 = vpop.f32.mrb[0].mxu0
      %v2909 = vadd.f32 %v2536, %v2908
      %v2910 = vpop.f32.mrb[0].mxu0
      %v2911 = vadd.f32 %v2532, %v2910
      %v2912 = vpop.f32.mrb[0].mxu0
      %v2913 = vadd.f32 %v2536, %v2912
      %2914 = vmatprep.mubr.bf16.mxu0 0
      %2915 = vmatmul.mubr.bf16.gmra.mrb[0].mxu0 %v2476
      %v2916 = vpop.f32.mrb[0].mxu0
      %v2917 = vadd.f32 %v2532, %v2916
      %v2918 = vpop.f32.mrb[0].mxu0
      %v2919 = vadd.f32 %v2536, %v2918
      %v2920 = vpop.f32.mrb[0].mxu0
      %v2921 = vadd.f32 %v2532, %v2920
      %v2922 = vpop.f32.mrb[0].mxu0
      %v2923 = vadd.f32 %v2536, %v2922
      %2924 = vmatprep.mubr.bf16.mxu0 0
      %2925 = vmatmul.mubr.bf16.gmra.mrb[0].mxu0 %v2477
      %v2926 = vpop.f32.mrb[0].mxu0
      %v2927 = vadd.f32 %v2532, %v2926
      %v2928 = vpop.f32.mrb[0].mxu0
      %v2929 = vadd.f32 %v2536, %v2928
      %v2930 = vpop.f32.mrb[0].mxu0
      %v2931 = vadd.f32 %v2532, %v2930
      %v2932 = vpop.f32.mrb[0].mxu0
      %v2933 = vadd.f32 %v2536, %v2932
      %2934 = vmatprep.mubr.bf16.mxu0 0
      %2935 = vmatmul.mubr.bf16.gmra.mrb[0].mxu0 %v2478
      %v2936 = vpop.f32.mrb[0].mxu0
      %v2937 = vadd.f32 %v2532, %v2936
      %v2938 = vpop.f32.mrb[0].mxu0
      %v2939 = vadd.f32 %v2536, %v2938
      %v2940 = vpop.f32.mrb[0].mxu0
      %v2941 = vadd.f32 %v2532, %v2940
      %v2942 = vpop.f32.mrb[0].mxu0
      %v2943 = vadd.f32 %v2536, %v2942
      %2944 = vmatprep.mubr.bf16.mxu0 0
      %2945 = vmatmul.mubr.bf16.gmra.mrb[0].mxu0 %v2479
      %v2946 = vpop.f32.mrb[0].mxu0
      %v2947 = vadd.f32 %v2532, %v2946
      %v2948 = vpop.f32.mrb[0].mxu0
      %v2949 = vadd.f32 %v2536, %v2948
      %v2950 = vpop.f32.mrb[0].mxu0
      %v2951 = vadd.f32 %v2532, %v2950
      %v2952 = vpop.f32.mrb[0].mxu0
      %v2953 = vadd.f32 %v2536, %v2952
      %2954 = vmatprep.mubr.bf16.mxu0 0
      %2955 = vmatmul.mubr.bf16.gmra.mrb[0].mxu0 %v2480
      %v2956 = vpop.f32.mrb[0].mxu0
      %v2957 = vadd.f32 %v2532, %v2956
      %v2958 = vpop.f32.mrb[0].mxu0
      %v2959 = vadd.f32 %v2536, %v2958
      %v2960 = vpop.f32.mrb[0].mxu0
      %v2961 = vadd.f32 %v2532, %v2960
      %v2962 = vpop.f32.mrb[0].mxu0
      %v2963 = vadd.f32 %v2536, %v2962
      %2964 = vmatprep.mubr.bf16.mxu0 0
      %2965 = vmatmul.mubr.bf16.gmra.mrb[0].mxu0 %v2481
      %v2966 = vpop.f32.mrb[0].mxu0
      %v2967 = vadd.f32 %v2532, %v2966
      %v2968 = vpop.f32.mrb[0].mxu0
      %v2969 = vadd.f32 %v2536, %v2968
      %v2970 = vpop.f32.mrb[0].mxu0
      %v2971 = vadd.f32 %v2532, %v2970
      %v2972 = vpop.f32.mrb[0].mxu0
      %v2973 = vadd.f32 %v2536, %v2972
      %2974 = vmatprep.mubr.bf16.mxu0 0
      %2975 = vmatmul.mubr.bf16.gmra.mrb[0].mxu0 %v2482
      %v2976 = vpop.f32.mrb[0].mxu0
      %v2977 = vadd.f32 %v2532, %v2976
      %v2978 = vpop.f32.mrb[0].mxu0
      %v2979 = vadd.f32 %v2536, %v2978
      %v2980 = vpop.f32.mrb[0].mxu0
      %v2981 = vadd.f32 %v2532, %v2980
      %v2982 = vpop.f32.mrb[0].mxu0
      %v2983 = vadd.f32 %v2536, %v2982
      %2984 = vmatprep.mubr.bf16.mxu0 0
      %2985 = vmatmul.mubr.bf16.gmra.mrb[0].mxu0 %v2483
      %v2986 = vpop.f32.mrb[0].mxu0
      %v2987 = vadd.f32 %v2532, %v2986
      %v2988 = vpop.f32.mrb[0].mxu0
      %v2989 = vadd.f32 %v2536, %v2988
      %v2990 = vpop.f32.mrb[0].mxu0
      %v2991 = vadd.f32 %v2532, %v2990
      %v2992 = vpop.f32.mrb[0].mxu0
      %v2993 = vadd.f32 %v2536, %v2992
      %2994 = vmatprep.mubr.bf16.mxu0 0
      %2995 = vmatmul.mubr.bf16.gmra.mrb[0].mxu0 %v2484
      %v2996 = vpop.f32.mrb[0].mxu0
      %v2997 = vadd.f32 %v2532, %v2996
      %v2998 = vpop.f32.mrb[0].mxu0
      %v2999 = vadd.f32 %v2536, %v2998
      %v3000 = vpop.f32.mrb[0].mxu0
      %v3001 = vadd.f32 %v2532, %v3000
      %v3002 = vpop.f32.mrb[0].mxu0
      %v3003 = vadd.f32 %v2536, %v3002
      %3004 = vmatprep.mubr.bf16.mxu0 0
      %3005 = vmatmul.mubr.bf16.gmra.mrb[0].mxu0 %v2485
      %v3006 = vpop.f32.mrb[0].mxu0
      %v3007 = vadd.f32 %v2532, %v3006
      %v3008 = vpop.f32.mrb[0].mxu0
      %v3009 = vadd.f32 %v2536, %v3008
      %v3010 = vpop.f32.mrb[0].mxu0
      %v3011 = vadd.f32 %v2532, %v3010
      %v3012 = vpop.f32.mrb[0].mxu0
      %v3013 = vadd.f32 %v2536, %v3012
      %3014 = vmatprep.mubr.bf16.mxu0 0
      %3015 = vmatmul.mubr.bf16.gmra.mrb[0].mxu0 %v2486
      %v3016 = vpop.f32.mrb[0].mxu0
      %v3017 = vadd.f32 %v2532, %v3016
      %v3018 = vpop.f32.mrb[0].mxu0
      %v3019 = vadd.f32 %v2536, %v3018
      %v3020 = vpop.f32.mrb[0].mxu0
      %v3021 = vpop.f32.mrb[0].mxu0
      %3022 = vdwg.mxu0
      %v3023 = vmul.f32 %v2736, 0.5
      %v3024 = vmul.f32 %v2738, 0.5
      %v3025 = vmul.f32 %v2897, 0.5
      %v3026 = vmul.f32 %v2899, 0.5
      %v3027 = vmul.f32 %v2740, 0.5
      %v3028 = vmul.f32 %v2742, 0.5
      %v3029 = vmul.f32 %v2901, 0.5
      %v3030 = vmul.f32 %v2903, 0.5
      %v3031 = vmul.f32 %v2746, 0.5
      %v3032 = vmul.f32 %v2748, 0.5
      %v3033 = vmul.f32 %v2907, 0.5
      %v3034 = vmul.f32 %v2909, 0.5
      %v3035 = vmul.f32 %v2750, 0.5
      %v3036 = vmul.f32 %v2752, 0.5
      %v3037 = vmul.f32 %v2911, 0.5
      %v3038 = vmul.f32 %v2913, 0.5
      %v3039 = vmul.f32 %v2756, 0.5
      %v3040 = vmul.f32 %v2758, 0.5
      %v3041 = vmul.f32 %v2917, 0.5
      %v3042 = vmul.f32 %v2919, 0.5
      %v3043 = vmul.f32 %v2760, 0.5
      %v3044 = vmul.f32 %v2762, 0.5
      %v3045 = vmul.f32 %v2921, 0.5
      %v3046 = vmul.f32 %v2923, 0.5
      %v3047 = vmul.f32 %v2766, 0.5
      %v3048 = vmul.f32 %v2768, 0.5
      %v3049 = vmul.f32 %v2927, 0.5
      %v3050 = vmul.f32 %v2929, 0.5
      %v3051 = vmul.f32 %v2770, 0.5
      %v3052 = vmul.f32 %v2772, 0.5
      %v3053 = vmul.f32 %v2931, 0.5
      %v3054 = vmul.f32 %v2933, 0.5
      %v3055 = vmul.f32 %v2776, 0.5
      %v3056 = vmul.f32 %v2778, 0.5
      %v3057 = vmul.f32 %v2937, 0.5
      %v3058 = vmul.f32 %v2939, 0.5
      %v3059 = vmul.f32 %v2780, 0.5
      %v3060 = vmul.f32 %v2782, 0.5
      %v3061 = vmul.f32 %v2941, 0.5
      %v3062 = vmul.f32 %v2943, 0.5
      %v3063 = vmul.f32 %v2786, 0.5
      %v3064 = vmul.f32 %v2788, 0.5
      %v3065 = vmul.f32 %v2947, 0.5
      %v3066 = vmul.f32 %v2949, 0.5
      %v3067 = vmul.f32 %v2790, 0.5
      %v3068 = vmul.f32 %v2792, 0.5
      %v3069 = vmul.f32 %v2951, 0.5
      %v3070 = vmul.f32 %v2953, 0.5
      %v3071 = vmul.f32 %v2796, 0.5
      %v3072 = vmul.f32 %v2798, 0.5
      %v3073 = vmul.f32 %v2957, 0.5
      %v3074 = vmul.f32 %v2959, 0.5
      %v3075 = vmul.f32 %v2800, 0.5
      %v3076 = vmul.f32 %v2802, 0.5
      %v3077 = vmul.f32 %v2961, 0.5
      %v3078 = vmul.f32 %v2963, 0.5
      %v3079 = vmul.f32 %v2806, 0.5
      %v3080 = vmul.f32 %v2808, 0.5
      %v3081 = vmul.f32 %v2967, 0.5
      %v3082 = vmul.f32 %v2969, 0.5
      %v3083 = vmul.f32 %v2810, 0.5
      %v3084 = vmul.f32 %v2812, 0.5
      %v3085 = vmul.f32 %v2971, 0.5
      %v3086 = vmul.f32 %v2973, 0.5
      %v3087 = vmul.f32 %v2816, 0.5
      %v3088 = vmul.f32 %v2818, 0.5
      %v3089 = vmul.f32 %v2977, 0.5
      %v3090 = vmul.f32 %v2979, 0.5
      %v3091 = vmul.f32 %v2820, 0.5
      %v3092 = vmul.f32 %v2822, 0.5
      %v3093 = vmul.f32 %v2981, 0.5
      %v3094 = vmul.f32 %v2983, 0.5
      %v3095 = vmul.f32 %v2826, 0.5
      %v3096 = vmul.f32 %v2828, 0.5
      %v3097 = vmul.f32 %v2987, 0.5
      %v3098 = vmul.f32 %v2989, 0.5
      %v3099 = vmul.f32 %v2830, 0.5
      %v3100 = vmul.f32 %v2832, 0.5
      %v3101 = vmul.f32 %v2991, 0.5
      %v3102 = vmul.f32 %v2993, 0.5
      %v3103 = vmul.f32 %v2836, 0.5
      %v3104 = vmul.f32 %v2838, 0.5
      %v3105 = vmul.f32 %v2997, 0.5
      %v3106 = vmul.f32 %v2999, 0.5
      %v3107 = vmul.f32 %v2840, 0.5
      %v3108 = vmul.f32 %v2842, 0.5
      %v3109 = vmul.f32 %v3001, 0.5
      %v3110 = vmul.f32 %v3003, 0.5
      %v3111 = vmul.f32 %v2846, 0.5
      %v3112 = vmul.f32 %v2848, 0.5
      %v3113 = vmul.f32 %v3007, 0.5
      %v3114 = vmul.f32 %v3009, 0.5
      %v3115 = vmul.f32 %v2850, 0.5
      %v3116 = vmul.f32 %v2852, 0.5
      %v3117 = vmul.f32 %v3011, 0.5
      %v3118 = vmul.f32 %v3013, 0.5
      %v3119 = vmul.f32 %v2856, 0.5
      %v3120 = vmul.f32 %v2858, 0.5
      %v3121 = vmul.f32 %v3017, 0.5
      %v3122 = vmul.f32 %v3019, 0.5
      %v3123 = vmul.f32 %v2736, %v2736
      %v3124 = vmul.f32 %v2738, %v2738
      %v3125 = vmul.f32 %v2897, %v2897
      %v3126 = vmul.f32 %v2899, %v2899
      %v3127 = vmul.f32 %v2740, %v2740
      %v3128 = vmul.f32 %v2742, %v2742
      %v3129 = vmul.f32 %v2901, %v2901
      %v3130 = vmul.f32 %v2903, %v2903
      %v3131 = vmul.f32 %v2746, %v2746
      %v3132 = vmul.f32 %v2748, %v2748
      %v3133 = vmul.f32 %v2907, %v2907
      %v3134 = vmul.f32 %v2909, %v2909
      %v3135 = vmul.f32 %v2750, %v2750
      %v3136 = vmul.f32 %v2752, %v2752
      %v3137 = vmul.f32 %v2911, %v2911
      %v3138 = vmul.f32 %v2913, %v2913
      %v3139 = vmul.f32 %v2756, %v2756
      %v3140 = vmul.f32 %v2758, %v2758
      %v3141 = vmul.f32 %v2917, %v2917
      %v3142 = vmul.f32 %v2919, %v2919
      %v3143 = vmul.f32 %v2760, %v2760
      %v3144 = vmul.f32 %v2762, %v2762
      %v3145 = vmul.f32 %v2921, %v2921
      %v3146 = vmul.f32 %v2923, %v2923
      %v3147 = vmul.f32 %v2766, %v2766
      %v3148 = vmul.f32 %v2768, %v2768
      %v3149 = vmul.f32 %v2927, %v2927
      %v3150 = vmul.f32 %v2929, %v2929
      %v3151 = vmul.f32 %v2770, %v2770
      %v3152 = vmul.f32 %v2772, %v2772
      %v3153 = vmul.f32 %v2931, %v2931
      %v3154 = vmul.f32 %v2933, %v2933
      %v3155 = vmul.f32 %v2776, %v2776
      %v3156 = vmul.f32 %v2778, %v2778
      %v3157 = vmul.f32 %v2937, %v2937
      %v3158 = vmul.f32 %v2939, %v2939
      %v3159 = vmul.f32 %v2780, %v2780
      %v3160 = vmul.f32 %v2782, %v2782
      %v3161 = vmul.f32 %v2941, %v2941
      %v3162 = vmul.f32 %v2943, %v2943
      %v3163 = vmul.f32 %v2786, %v2786
      %v3164 = vmul.f32 %v2788, %v2788
      %v3165 = vmul.f32 %v2947, %v2947
      %v3166 = vmul.f32 %v2949, %v2949
      %v3167 = vmul.f32 %v2790, %v2790
      %v3168 = vmul.f32 %v2792, %v2792
      %v3169 = vmul.f32 %v2951, %v2951
      %v3170 = vmul.f32 %v2953, %v2953
      %v3171 = vmul.f32 %v2796, %v2796
      %v3172 = vmul.f32 %v2798, %v2798
      %v3173 = vmul.f32 %v2957, %v2957
      %v3174 = vmul.f32 %v2959, %v2959
      %v3175 = vmul.f32 %v2800, %v2800
      %v3176 = vmul.f32 %v2802, %v2802
      %v3177 = vmul.f32 %v2961, %v2961
      %v3178 = vmul.f32 %v2963, %v2963
      %v3179 = vmul.f32 %v2806, %v2806
      %v3180 = vmul.f32 %v2808, %v2808
      %v3181 = vmul.f32 %v2967, %v2967
      %v3182 = vmul.f32 %v2969, %v2969
      %v3183 = vmul.f32 %v2810, %v2810
      %v3184 = vmul.f32 %v2812, %v2812
      %v3185 = vmul.f32 %v2971, %v2971
      %v3186 = vmul.f32 %v2973, %v2973
      %v3187 = vmul.f32 %v2816, %v2816
      %v3188 = vmul.f32 %v2818, %v2818
      %v3189 = vmul.f32 %v2977, %v2977
      %v3190 = vmul.f32 %v2979, %v2979
      %v3191 = vmul.f32 %v2820, %v2820
      %v3192 = vmul.f32 %v2822, %v2822
      %v3193 = vmul.f32 %v2981, %v2981
      %v3194 = vmul.f32 %v2983, %v2983
      %v3195 = vmul.f32 %v2826, %v2826
      %v3196 = vmul.f32 %v2828, %v2828
      %v3197 = vmul.f32 %v2987, %v2987
      %v3198 = vmul.f32 %v2989, %v2989
      %v3199 = vmul.f32 %v2830, %v2830
      %v3200 = vmul.f32 %v2832, %v2832
      %v3201 = vmul.f32 %v2991, %v2991
      %v3202 = vmul.f32 %v2993, %v2993
      %v3203 = vmul.f32 %v2836, %v2836
      %v3204 = vmul.f32 %v2838, %v2838
      %v3205 = vmul.f32 %v2997, %v2997
      %v3206 = vmul.f32 %v2999, %v2999
      %v3207 = vmul.f32 %v2840, %v2840
      %v3208 = vmul.f32 %v2842, %v2842
      %v3209 = vmul.f32 %v3001, %v3001
      %v3210 = vmul.f32 %v3003, %v3003
      %v3211 = vmul.f32 %v2846, %v2846
      %v3212 = vmul.f32 %v2848, %v2848
      %v3213 = vmul.f32 %v3007, %v3007
      %v3214 = vmul.f32 %v3009, %v3009
      %v3215 = vmul.f32 %v2850, %v2850
      %v3216 = vmul.f32 %v2852, %v2852
      %v3217 = vmul.f32 %v3011, %v3011
      %v3218 = vmul.f32 %v3013, %v3013
      %v3219 = vmul.f32 %v2856, %v2856
      %v3220 = vmul.f32 %v2858, %v2858
      %v3221 = vmul.f32 %v3017, %v3017
      %v3222 = vmul.f32 %v3019, %v3019
      %v3223 = vmul.f32 %v3123, %v2736
      %v3224 = vmul.f32 %v3124, %v2738
      %v3225 = vmul.f32 %v3125, %v2897
      %v3226 = vmul.f32 %v3126, %v2899
      %v3227 = vmul.f32 %v3127, %v2740
      %v3228 = vmul.f32 %v3128, %v2742
      %v3229 = vmul.f32 %v3129, %v2901
      %v3230 = vmul.f32 %v3130, %v2903
      %v3231 = vmul.f32 %v3131, %v2746
      %v3232 = vmul.f32 %v3132, %v2748
      %v3233 = vmul.f32 %v3133, %v2907
      %v3234 = vmul.f32 %v3134, %v2909
      %v3235 = vmul.f32 %v3135, %v2750
      %v3236 = vmul.f32 %v3136, %v2752
      %v3237 = vmul.f32 %v3137, %v2911
      %v3238 = vmul.f32 %v3138, %v2913
      %v3239 = vmul.f32 %v3139, %v2756
      %v3240 = vmul.f32 %v3140, %v2758
      %v3241 = vmul.f32 %v3141, %v2917
      %v3242 = vmul.f32 %v3142, %v2919
      %v3243 = vmul.f32 %v3143, %v2760
      %v3244 = vmul.f32 %v3144, %v2762
      %v3245 = vmul.f32 %v3145, %v2921
      %v3246 = vmul.f32 %v3146, %v2923
      %v3247 = vmul.f32 %v3147, %v2766
      %v3248 = vmul.f32 %v3148, %v2768
      %v3249 = vmul.f32 %v3149, %v2927
      %v3250 = vmul.f32 %v3150, %v2929
      %v3251 = vmul.f32 %v3151, %v2770
      %v3252 = vmul.f32 %v3152, %v2772
      %v3253 = vmul.f32 %v3153, %v2931
      %v3254 = vmul.f32 %v3154, %v2933
      %v3255 = vmul.f32 %v3155, %v2776
      %v3256 = vmul.f32 %v3156, %v2778
      %v3257 = vmul.f32 %v3157, %v2937
      %v3258 = vmul.f32 %v3158, %v2939
      %v3259 = vmul.f32 %v3159, %v2780
      %v3260 = vmul.f32 %v3160, %v2782
      %v3261 = vmul.f32 %v3161, %v2941
      %v3262 = vmul.f32 %v3162, %v2943
      %v3263 = vmul.f32 %v3163, %v2786
      %v3264 = vmul.f32 %v3164, %v2788
      %v3265 = vmul.f32 %v3165, %v2947
      %v3266 = vmul.f32 %v3166, %v2949
      %v3267 = vmul.f32 %v3167, %v2790
      %v3268 = vmul.f32 %v3168, %v2792
      %v3269 = vmul.f32 %v3169, %v2951
      %v3270 = vmul.f32 %v3170, %v2953
      %v3271 = vmul.f32 %v3171, %v2796
      %v3272 = vmul.f32 %v3172, %v2798
      %v3273 = vmul.f32 %v3173, %v2957
      %v3274 = vmul.f32 %v3174, %v2959
      %v3275 = vmul.f32 %v3175, %v2800
      %v3276 = vmul.f32 %v3176, %v2802
      %v3277 = vmul.f32 %v3177, %v2961
      %v3278 = vmul.f32 %v3178, %v2963
      %v3279 = vmul.f32 %v3179, %v2806
      %v3280 = vmul.f32 %v3180, %v2808
      %v3281 = vmul.f32 %v3181, %v2967
      %v3282 = vmul.f32 %v3182, %v2969
      %v3283 = vmul.f32 %v3183, %v2810
      %v3284 = vmul.f32 %v3184, %v2812
      %v3285 = vmul.f32 %v3185, %v2971
      %v3286 = vmul.f32 %v3186, %v2973
      %v3287 = vmul.f32 %v3187, %v2816
      %v3288 = vmul.f32 %v3188, %v2818
      %v3289 = vmul.f32 %v3189, %v2977
      %v3290 = vmul.f32 %v3190, %v2979
      %v3291 = vmul.f32 %v3191, %v2820
      %v3292 = vmul.f32 %v3192, %v2822
      %v3293 = vmul.f32 %v3193, %v2981
      %v3294 = vmul.f32 %v3194, %v2983
      %v3295 = vmul.f32 %v3195, %v2826
      %v3296 = vmul.f32 %v3196, %v2828
      %v3297 = vmul.f32 %v3197, %v2987
      %v3298 = vmul.f32 %v3198, %v2989
      %v3299 = vmul.f32 %v3199, %v2830
      %v3300 = vmul.f32 %v3200, %v2832
      %v3301 = vmul.f32 %v3201, %v2991
      %v3302 = vmul.f32 %v3202, %v2993
      %v3303 = vmul.f32 %v3203, %v2836
      %v3304 = vmul.f32 %v3204, %v2838
      %v3305 = vmul.f32 %v3205, %v2997
      %v3306 = vmul.f32 %v3206, %v2999
      %v3307 = vmul.f32 %v3207, %v2840
      %v3308 = vmul.f32 %v3208, %v2842
      %v3309 = vmul.f32 %v3209, %v3001
      %v3310 = vmul.f32 %v3210, %v3003
      %v3311 = vmul.f32 %v3211, %v2846
      %v3312 = vmul.f32 %v3212, %v2848
      %v3313 = vmul.f32 %v3213, %v3007
      %v3314 = vmul.f32 %v3214, %v3009
      %v3315 = vmul.f32 %v3215, %v2850
      %v3316 = vmul.f32 %v3216, %v2852
      %v3317 = vmul.f32 %v3217, %v3011
      %v3318 = vmul.f32 %v3218, %v3013
      %v3319 = vmul.f32 %v3219, %v2856
      %v3320 = vmul.f32 %v3220, %v2858
      %v3321 = vmul.f32 %v3221, %v3017
      %v3322 = vmul.f32 %v3222, %v3019
      %v3323 = vmul.f32 %v3223, 0.044715
      %v3324 = vmul.f32 %v3224, 0.044715
      %v3325 = vmul.f32 %v3225, 0.044715
      %v3326 = vmul.f32 %v3226, 0.044715
      %v3327 = vmul.f32 %v3227, 0.044715
      %v3328 = vmul.f32 %v3228, 0.044715
      %v3329 = vmul.f32 %v3229, 0.044715
      %v3330 = vmul.f32 %v3230, 0.044715
      %v3331 = vmul.f32 %v3231, 0.044715
      %v3332 = vmul.f32 %v3232, 0.044715
      %v3333 = vmul.f32 %v3233, 0.044715
      %v3334 = vmul.f32 %v3234, 0.044715
      %v3335 = vmul.f32 %v3235, 0.044715
      %v3336 = vmul.f32 %v3236, 0.044715
      %v3337 = vmul.f32 %v3237, 0.044715
      %v3338 = vmul.f32 %v3238, 0.044715
      %v3339 = vmul.f32 %v3239, 0.044715
      %v3340 = vmul.f32 %v3240, 0.044715
      %v3341 = vmul.f32 %v3241, 0.044715
      %v3342 = vmul.f32 %v3242, 0.044715
      %v3343 = vmul.f32 %v3243, 0.044715
      %v3344 = vmul.f32 %v3244, 0.044715
      %v3345 = vmul.f32 %v3245, 0.044715
      %v3346 = vmul.f32 %v3246, 0.044715
      %v3347 = vmul.f32 %v3247, 0.044715
      %v3348 = vmul.f32 %v3248, 0.044715
      %v3349 = vmul.f32 %v3249, 0.044715
      %v3350 = vmul.f32 %v3250, 0.044715
      %v3351 = vmul.f32 %v3251, 0.044715
      %v3352 = vmul.f32 %v3252, 0.044715
      %v3353 = vmul.f32 %v3253, 0.044715
      %v3354 = vmul.f32 %v3254, 0.044715
      %v3355 = vmul.f32 %v3255, 0.044715
      %v3356 = vmul.f32 %v3256, 0.044715
      %v3357 = vmul.f32 %v3257, 0.044715
      %v3358 = vmul.f32 %v3258, 0.044715
      %v3359 = vmul.f32 %v3259, 0.044715
      %v3360 = vmul.f32 %v3260, 0.044715
      %v3361 = vmul.f32 %v3261, 0.044715
      %v3362 = vmul.f32 %v3262, 0.044715
      %v3363 = vmul.f32 %v3263, 0.044715
      %v3364 = vmul.f32 %v3264, 0.044715
      %v3365 = vmul.f32 %v3265, 0.044715
      %v3366 = vmul.f32 %v3266, 0.044715
      %v3367 = vmul.f32 %v3267, 0.044715
      %v3368 = vmul.f32 %v3268, 0.044715
      %v3369 = vmul.f32 %v3269, 0.044715
      %v3370 = vmul.f32 %v3270, 0.044715
      %v3371 = vmul.f32 %v3271, 0.044715
      %v3372 = vmul.f32 %v3272, 0.044715
      %v3373 = vmul.f32 %v3273, 0.044715
      %v3374 = vmul.f32 %v3274, 0.044715
      %v3375 = vmul.f32 %v3275, 0.044715
      %v3376 = vmul.f32 %v3276, 0.044715
      %v3377 = vmul.f32 %v3277, 0.044715
      %v3378 = vmul.f32 %v3278, 0.044715
      %v3379 = vmul.f32 %v3279, 0.044715
      %v3380 = vmul.f32 %v3280, 0.044715
      %v3381 = vmul.f32 %v3281, 0.044715
      %v3382 = vmul.f32 %v3282, 0.044715
      %v3383 = vmul.f32 %v3283, 0.044715
      %v3384 = vmul.f32 %v3284, 0.044715
      %v3385 = vmul.f32 %v3285, 0.044715
      %v3386 = vmul.f32 %v3286, 0.044715
      %v3387 = vmul.f32 %v3287, 0.044715
      %v3388 = vmul.f32 %v3288, 0.044715
      %v3389 = vmul.f32 %v3289, 0.044715
      %v3390 = vmul.f32 %v3290, 0.044715
      %v3391 = vmul.f32 %v3291, 0.044715
      %v3392 = vmul.f32 %v3292, 0.044715
      %v3393 = vmul.f32 %v3293, 0.044715
      %v3394 = vmul.f32 %v3294, 0.044715
      %v3395 = vmul.f32 %v3295, 0.044715
      %v3396 = vmul.f32 %v3296, 0.044715
      %v3397 = vmul.f32 %v3297, 0.044715
      %v3398 = vmul.f32 %v3298, 0.044715
      %v3399 = vmul.f32 %v3299, 0.044715
      %v3400 = vmul.f32 %v3300, 0.044715
      %v3401 = vmul.f32 %v3301, 0.044715
      %v3402 = vmul.f32 %v3302, 0.044715
      %v3403 = vmul.f32 %v3303, 0.044715
      %v3404 = vmul.f32 %v3304, 0.044715
      %v3405 = vmul.f32 %v3305, 0.044715
      %v3406 = vmul.f32 %v3306, 0.044715
      %v3407 = vmul.f32 %v3307, 0.044715
      %v3408 = vmul.f32 %v3308, 0.044715
      %v3409 = vmul.f32 %v3309, 0.044715
      %v3410 = vmul.f32 %v3310, 0.044715
      %v3411 = vmul.f32 %v3311, 0.044715
      %v3412 = vmul.f32 %v3312, 0.044715
      %v3413 = vmul.f32 %v3313, 0.044715
      %v3414 = vmul.f32 %v3314, 0.044715
      %v3415 = vmul.f32 %v3315, 0.044715
      %v3416 = vmul.f32 %v3316, 0.044715
      %v3417 = vmul.f32 %v3317, 0.044715
      %v3418 = vmul.f32 %v3318, 0.044715
      %v3419 = vmul.f32 %v3319, 0.044715
      %v3420 = vmul.f32 %v3320, 0.044715
      %v3421 = vmul.f32 %v3321, 0.044715
      %v3422 = vmul.f32 %v3322, 0.044715
      %v3423 = vadd.f32 %v2736, %v3323
      %v3424 = vadd.f32 %v2738, %v3324
      %v3425 = vadd.f32 %v2897, %v3325
      %v3426 = vadd.f32 %v2899, %v3326
      %v3427 = vadd.f32 %v2740, %v3327
      %v3428 = vadd.f32 %v2742, %v3328
      %v3429 = vadd.f32 %v2901, %v3329
      %v3430 = vadd.f32 %v2903, %v3330
      %v3431 = vadd.f32 %v2746, %v3331
      %v3432 = vadd.f32 %v2748, %v3332
      %v3433 = vadd.f32 %v2907, %v3333
      %v3434 = vadd.f32 %v2909, %v3334
      %v3435 = vadd.f32 %v2750, %v3335
      %v3436 = vadd.f32 %v2752, %v3336
      %v3437 = vadd.f32 %v2911, %v3337
      %v3438 = vadd.f32 %v2913, %v3338
      %v3439 = vadd.f32 %v2756, %v3339
      %v3440 = vadd.f32 %v2758, %v3340
      %v3441 = vadd.f32 %v2917, %v3341
      %v3442 = vadd.f32 %v2919, %v3342
      %v3443 = vadd.f32 %v2760, %v3343
      %v3444 = vadd.f32 %v2762, %v3344
      %v3445 = vadd.f32 %v2921, %v3345
      %v3446 = vadd.f32 %v2923, %v3346
      %v3447 = vadd.f32 %v2766, %v3347
      %v3448 = vadd.f32 %v2768, %v3348
      %v3449 = vadd.f32 %v2927, %v3349
      %v3450 = vadd.f32 %v2929, %v3350
      %v3451 = vadd.f32 %v2770, %v3351
      %v3452 = vadd.f32 %v2772, %v3352
      %v3453 = vadd.f32 %v2931, %v3353
      %v3454 = vadd.f32 %v2933, %v3354
      %v3455 = vadd.f32 %v2776, %v3355
      %v3456 = vadd.f32 %v2778, %v3356
      %v3457 = vadd.f32 %v2937, %v3357
      %v3458 = vadd.f32 %v2939, %v3358
      %v3459 = vadd.f32 %v2780, %v3359
      %v3460 = vadd.f32 %v2782, %v3360
      %v3461 = vadd.f32 %v2941, %v3361
      %v3462 = vadd.f32 %v2943, %v3362
      %v3463 = vadd.f32 %v2786, %v3363
      %v3464 = vadd.f32 %v2788, %v3364
      %v3465 = vadd.f32 %v2947, %v3365
      %v3466 = vadd.f32 %v2949, %v3366
      %v3467 = vadd.f32 %v2790, %v3367
      %v3468 = vadd.f32 %v2792, %v3368
      %v3469 = vadd.f32 %v2951, %v3369
      %v3470 = vadd.f32 %v2953, %v3370
      %v3471 = vadd.f32 %v2796, %v3371
      %v3472 = vadd.f32 %v2798, %v3372
      %v3473 = vadd.f32 %v2957, %v3373
      %v3474 = vadd.f32 %v2959, %v3374
      %v3475 = vadd.f32 %v2800, %v3375
      %v3476 = vadd.f32 %v2802, %v3376
      %v3477 = vadd.f32 %v2961, %v3377
      %v3478 = vadd.f32 %v2963, %v3378
      %v3479 = vadd.f32 %v2806, %v3379
      %v3480 = vadd.f32 %v2808, %v3380
      %v3481 = vadd.f32 %v2967, %v3381
      %v3482 = vadd.f32 %v2969, %v3382
      %v3483 = vadd.f32 %v2810, %v3383
      %v3484 = vadd.f32 %v2812, %v3384
      %v3485 = vadd.f32 %v2971, %v3385
      %v3486 = vadd.f32 %v2973, %v3386
      %v3487 = vadd.f32 %v2816, %v3387
      %v3488 = vadd.f32 %v2818, %v3388
      %v3489 = vadd.f32 %v2977, %v3389
      %v3490 = vadd.f32 %v2979, %v3390
      %v3491 = vadd.f32 %v2820, %v3391
      %v3492 = vadd.f32 %v2822, %v3392
      %v3493 = vadd.f32 %v2981, %v3393
      %v3494 = vadd.f32 %v2983, %v3394
      %v3495 = vadd.f32 %v2826, %v3395
      %v3496 = vadd.f32 %v2828, %v3396
      %v3497 = vadd.f32 %v2987, %v3397
      %v3498 = vadd.f32 %v2989, %v3398
      %v3499 = vadd.f32 %v2830, %v3399
      %v3500 = vadd.f32 %v2832, %v3400
      %v3501 = vadd.f32 %v2991, %v3401
      %v3502 = vadd.f32 %v2993, %v3402
      %v3503 = vadd.f32 %v2836, %v3403
      %v3504 = vadd.f32 %v2838, %v3404
      %v3505 = vadd.f32 %v2997, %v3405
      %v3506 = vadd.f32 %v2999, %v3406
      %v3507 = vadd.f32 %v2840, %v3407
      %v3508 = vadd.f32 %v2842, %v3408
      %v3509 = vadd.f32 %v3001, %v3409
      %v3510 = vadd.f32 %v3003, %v3410
      %v3511 = vadd.f32 %v2846, %v3411
      %v3512 = vadd.f32 %v2848, %v3412
      %v3513 = vadd.f32 %v3007, %v3413
      %v3514 = vadd.f32 %v3009, %v3414
      %v3515 = vadd.f32 %v2850, %v3415
      %v3516 = vadd.f32 %v2852, %v3416
      %v3517 = vadd.f32 %v3011, %v3417
      %v3518 = vadd.f32 %v3013, %v3418
      %v3519 = vadd.f32 %v2856, %v3419
      %v3520 = vadd.f32 %v2858, %v3420
      %v3521 = vadd.f32 %v3017, %v3421
      %v3522 = vadd.f32 %v3019, %v3422
      %v3523 = vmul.f32 %v3423, 0.7978846
      %v3524 = vmul.f32 %v3424, 0.7978846
      %v3525 = vmul.f32 %v3425, 0.7978846
      %v3526 = vmul.f32 %v3426, 0.7978846
      %v3527 = vmul.f32 %v3427, 0.7978846
      %v3528 = vmul.f32 %v3428, 0.7978846
      %v3529 = vmul.f32 %v3429, 0.7978846
      %v3530 = vmul.f32 %v3430, 0.7978846
      %v3531 = vmul.f32 %v3431, 0.7978846
      %v3532 = vmul.f32 %v3432, 0.7978846
      %v3533 = vmul.f32 %v3433, 0.7978846
      %v3534 = vmul.f32 %v3434, 0.7978846
      %v3535 = vmul.f32 %v3435, 0.7978846
      %v3536 = vmul.f32 %v3436, 0.7978846
      %v3537 = vmul.f32 %v3437, 0.7978846
      %v3538 = vmul.f32 %v3438, 0.7978846
      %v3539 = vmul.f32 %v3439, 0.7978846
      %v3540 = vmul.f32 %v3440, 0.7978846
      %v3541 = vmul.f32 %v3441, 0.7978846
      %v3542 = vmul.f32 %v3442, 0.7978846
      %v3543 = vmul.f32 %v3443, 0.7978846
      %v3544 = vmul.f32 %v3444, 0.7978846
      %v3545 = vmul.f32 %v3445, 0.7978846
      %v3546 = vmul.f32 %v3446, 0.7978846
      %v3547 = vmul.f32 %v3447, 0.7978846
      %v3548 = vmul.f32 %v3448, 0.7978846
      %v3549 = vmul.f32 %v3449, 0.7978846
      %v3550 = vmul.f32 %v3450, 0.7978846
      %v3551 = vmul.f32 %v3451, 0.7978846
      %v3552 = vmul.f32 %v3452, 0.7978846
      %v3553 = vmul.f32 %v3453, 0.7978846
      %v3554 = vmul.f32 %v3454, 0.7978846
      %v3555 = vmul.f32 %v3455, 0.7978846
      %v3556 = vmul.f32 %v3456, 0.7978846
      %v3557 = vmul.f32 %v3457, 0.7978846
      %v3558 = vmul.f32 %v3458, 0.7978846
      %v3559 = vmul.f32 %v3459, 0.7978846
      %v3560 = vmul.f32 %v3460, 0.7978846
      %v3561 = vmul.f32 %v3461, 0.7978846
      %v3562 = vmul.f32 %v3462, 0.7978846
      %v3563 = vmul.f32 %v3463, 0.7978846
      %v3564 = vmul.f32 %v3464, 0.7978846
      %v3565 = vmul.f32 %v3465, 0.7978846
      %v3566 = vmul.f32 %v3466, 0.7978846
      %v3567 = vmul.f32 %v3467, 0.7978846
      %v3568 = vmul.f32 %v3468, 0.7978846
      %v3569 = vmul.f32 %v3469, 0.7978846
      %v3570 = vmul.f32 %v3470, 0.7978846
      %v3571 = vmul.f32 %v3471, 0.7978846
      %v3572 = vmul.f32 %v3472, 0.7978846
      %v3573 = vmul.f32 %v3473, 0.7978846
      %v3574 = vmul.f32 %v3474, 0.7978846
      %v3575 = vmul.f32 %v3475, 0.7978846
      %v3576 = vmul.f32 %v3476, 0.7978846
      %v3577 = vmul.f32 %v3477, 0.7978846
      %v3578 = vmul.f32 %v3478, 0.7978846
      %v3579 = vmul.f32 %v3479, 0.7978846
      %v3580 = vmul.f32 %v3480, 0.7978846
      %v3581 = vmul.f32 %v3481, 0.7978846
      %v3582 = vmul.f32 %v3482, 0.7978846
      %v3583 = vmul.f32 %v3483, 0.7978846
      %v3584 = vmul.f32 %v3484, 0.7978846
      %v3585 = vmul.f32 %v3485, 0.7978846
      %v3586 = vmul.f32 %v3486, 0.7978846
      %v3587 = vmul.f32 %v3487, 0.7978846
      %v3588 = vmul.f32 %v3488, 0.7978846
      %v3589 = vmul.f32 %v3489, 0.7978846
      %v3590 = vmul.f32 %v3490, 0.7978846
      %v3591 = vmul.f32 %v3491, 0.7978846
      %v3592 = vmul.f32 %v3492, 0.7978846
      %v3593 = vmul.f32 %v3493, 0.7978846
      %v3594 = vmul.f32 %v3494, 0.7978846
      %v3595 = vmul.f32 %v3495, 0.7978846
      %v3596 = vmul.f32 %v3496, 0.7978846
      %v3597 = vmul.f32 %v3497, 0.7978846
      %v3598 = vmul.f32 %v3498, 0.7978846
      %v3599 = vmul.f32 %v3499, 0.7978846
      %v3600 = vmul.f32 %v3500, 0.7978846
      %v3601 = vmul.f32 %v3501, 0.7978846
      %v3602 = vmul.f32 %v3502, 0.7978846
      %v3603 = vmul.f32 %v3503, 0.7978846
      %v3604 = vmul.f32 %v3504, 0.7978846
      %v3605 = vmul.f32 %v3505, 0.7978846
      %v3606 = vmul.f32 %v3506, 0.7978846
      %v3607 = vmul.f32 %v3507, 0.7978846
      %v3608 = vmul.f32 %v3508, 0.7978846
      %v3609 = vmul.f32 %v3509, 0.7978846
      %v3610 = vmul.f32 %v3510, 0.7978846
      %v3611 = vmul.f32 %v3511, 0.7978846
      %v3612 = vmul.f32 %v3512, 0.7978846
      %v3613 = vmul.f32 %v3513, 0.7978846
      %v3614 = vmul.f32 %v3514, 0.7978846
      %v3615 = vmul.f32 %v3515, 0.7978846
      %v3616 = vmul.f32 %v3516, 0.7978846
      %v3617 = vmul.f32 %v3517, 0.7978846
      %v3618 = vmul.f32 %v3518, 0.7978846
      %v3619 = vmul.f32 %v3519, 0.7978846
      %v3620 = vmul.f32 %v3520, 0.7978846
      %v3621 = vmul.f32 %v3521, 0.7978846
      %v3622 = vmul.f32 %v3522, 0.7978846
      %v3623 = vtanh.pop %v3523
      %v3624 = vtanh.pop %v3524
      %v3625 = vtanh.pop %v3525
      %v3626 = vtanh.pop %v3526
      %v3627 = vtanh.pop %v3527
      %v3628 = vtanh.pop %v3528
      %v3629 = vtanh.pop %v3529
      %v3630 = vtanh.pop %v3530
      %v3631 = vtanh.pop %v3531
      %v3632 = vtanh.pop %v3532
      %v3633 = vtanh.pop %v3533
      %v3634 = vtanh.pop %v3534
      %v3635 = vtanh.pop %v3535
      %v3636 = vtanh.pop %v3536
      %v3637 = vtanh.pop %v3537
      %v3638 = vtanh.pop %v3538
      %v3639 = vtanh.pop %v3539
      %v3640 = vtanh.pop %v3540
      %v3641 = vtanh.pop %v3541
      %v3642 = vtanh.pop %v3542
      %v3643 = vtanh.pop %v3543
      %v3644 = vtanh.pop %v3544
      %v3645 = vtanh.pop %v3545
      %v3646 = vtanh.pop %v3546
      %v3647 = vtanh.pop %v3547
      %v3648 = vtanh.pop %v3548
      %v3649 = vtanh.pop %v3549
      %v3650 = vtanh.pop %v3550
      %v3651 = vtanh.pop %v3551
      %v3652 = vtanh.pop %v3552
      %v3653 = vtanh.pop %v3553
      %v3654 = vtanh.pop %v3554
      %v3655 = vtanh.pop %v3555
      %v3656 = vtanh.pop %v3556
      %v3657 = vtanh.pop %v3557
      %v3658 = vtanh.pop %v3558
      %v3659 = vtanh.pop %v3559
      %v3660 = vtanh.pop %v3560
      %v3661 = vtanh.pop %v3561
      %v3662 = vtanh.pop %v3562
      %v3663 = vtanh.pop %v3563
      %v3664 = vtanh.pop %v3564
      %v3665 = vtanh.pop %v3565
      %v3666 = vtanh.pop %v3566
      %v3667 = vtanh.pop %v3567
      %v3668 = vtanh.pop %v3568
      %v3669 = vtanh.pop %v3569
      %v3670 = vtanh.pop %v3570
      %v3671 = vtanh.pop %v3571
      %v3672 = vtanh.pop %v3572
      %v3673 = vtanh.pop %v3573
      %v3674 = vtanh.pop %v3574
      %v3675 = vtanh.pop %v3575
      %v3676 = vtanh.pop %v3576
      %v3677 = vtanh.pop %v3577
      %v3678 = vtanh.pop %v3578
      %v3679 = vtanh.pop %v3579
      %v3680 = vtanh.pop %v3580
      %v3681 = vtanh.pop %v3581
      %v3682 = vtanh.pop %v3582
      %v3683 = vtanh.pop %v3583
      %v3684 = vtanh.pop %v3584
      %v3685 = vtanh.pop %v3585
      %v3686 = vtanh.pop %v3586
      %v3687 = vtanh.pop %v3587
      %v3688 = vtanh.pop %v3588
      %v3689 = vtanh.pop %v3589
      %v3690 = vtanh.pop %v3590
      %v3691 = vtanh.pop %v3591
      %v3692 = vtanh.pop %v3592
      %v3693 = vtanh.pop %v3593
      %v3694 = vtanh.pop %v3594
      %v3695 = vtanh.pop %v3595
      %v3696 = vtanh.pop %v3596
      %v3697 = vtanh.pop %v3597
      %v3698 = vtanh.pop %v3598
      %v3699 = vtanh.pop %v3599
      %v3700 = vtanh.pop %v3600
      %v3701 = vtanh.pop %v3601
      %v3702 = vtanh.pop %v3602
      %v3703 = vtanh.pop %v3603
      %v3704 = vtanh.pop %v3604
      %v3705 = vtanh.pop %v3605
      %v3706 = vtanh.pop %v3606
      %v3707 = vtanh.pop %v3607
      %v3708 = vtanh.pop %v3608
      %v3709 = vtanh.pop %v3609
      %v3710 = vtanh.pop %v3610
      %v3711 = vtanh.pop %v3611
      %v3712 = vtanh.pop %v3612
      %v3713 = vtanh.pop %v3613
      %v3714 = vtanh.pop %v3614
      %v3715 = vtanh.pop %v3615
      %v3716 = vtanh.pop %v3616
      %v3717 = vtanh.pop %v3617
      %v3718 = vtanh.pop %v3618
      %v3719 = vtanh.pop %v3619
      %v3720 = vtanh.pop %v3620
      %v3721 = vtanh.pop %v3621
      %v3722 = vtanh.pop %v3622
      %v3723 = vadd.f32 %v3623, 1.0
      %v3724 = vadd.f32 %v3624, 1.0
      %v3725 = vadd.f32 %v3625, 1.0
      %v3726 = vadd.f32 %v3626, 1.0
      %v3727 = vadd.f32 %v3627, 1.0
      %v3728 = vadd.f32 %v3628, 1.0
      %v3729 = vadd.f32 %v3629, 1.0
      %v3730 = vadd.f32 %v3630, 1.0
      %v3731 = vadd.f32 %v3631, 1.0
      %v3732 = vadd.f32 %v3632, 1.0
      %v3733 = vadd.f32 %v3633, 1.0
      %v3734 = vadd.f32 %v3634, 1.0
      %v3735 = vadd.f32 %v3635, 1.0
      %v3736 = vadd.f32 %v3636, 1.0
      %v3737 = vadd.f32 %v3637, 1.0
      %v3738 = vadd.f32 %v3638, 1.0
      %v3739 = vadd.f32 %v3639, 1.0
      %v3740 = vadd.f32 %v3640, 1.0
      %v3741 = vadd.f32 %v3641, 1.0
      %v3742 = vadd.f32 %v3642, 1.0
      %v3743 = vadd.f32 %v3643, 1.0
      %v3744 = vadd.f32 %v3644, 1.0
      %v3745 = vadd.f32 %v3645, 1.0
      %v3746 = vadd.f32 %v3646, 1.0
      %v3747 = vadd.f32 %v3647, 1.0
      %v3748 = vadd.f32 %v3648, 1.0
      %v3749 = vadd.f32 %v3649, 1.0
      %v3750 = vadd.f32 %v3650, 1.0
      %v3751 = vadd.f32 %v3651, 1.0
      %v3752 = vadd.f32 %v3652, 1.0
      %v3753 = vadd.f32 %v3653, 1.0
      %v3754 = vadd.f32 %v3654, 1.0
      %v3755 = vadd.f32 %v3655, 1.0
      %v3756 = vadd.f32 %v3656, 1.0
      %v3757 = vadd.f32 %v3657, 1.0
      %v3758 = vadd.f32 %v3658, 1.0
      %v3759 = vadd.f32 %v3659, 1.0
      %v3760 = vadd.f32 %v3660, 1.0
      %v3761 = vadd.f32 %v3661, 1.0
      %v3762 = vadd.f32 %v3662, 1.0
      %v3763 = vadd.f32 %v3663, 1.0
      %v3764 = vadd.f32 %v3664, 1.0
      %v3765 = vadd.f32 %v3665, 1.0
      %v3766 = vadd.f32 %v3666, 1.0
      %v3767 = vadd.f32 %v3667, 1.0
      %v3768 = vadd.f32 %v3668, 1.0
      %v3769 = vadd.f32 %v3669, 1.0
      %v3770 = vadd.f32 %v3670, 1.0
      %v3771 = vadd.f32 %v3671, 1.0
      %v3772 = vadd.f32 %v3672, 1.0
      %v3773 = vadd.f32 %v3673, 1.0
      %v3774 = vadd.f32 %v3674, 1.0
      %v3775 = vadd.f32 %v3675, 1.0
      %v3776 = vadd.f32 %v3676, 1.0
      %v3777 = vadd.f32 %v3677, 1.0
      %v3778 = vadd.f32 %v3678, 1.0
      %v3779 = vadd.f32 %v3679, 1.0
      %v3780 = vadd.f32 %v3680, 1.0
      %v3781 = vadd.f32 %v3681, 1.0
      %v3782 = vadd.f32 %v3682, 1.0
      %v3783 = vadd.f32 %v3683, 1.0
      %v3784 = vadd.f32 %v3684, 1.0
      %v3785 = vadd.f32 %v3685, 1.0
      %v3786 = vadd.f32 %v3686, 1.0
      %v3787 = vadd.f32 %v3687, 1.0
      %v3788 = vadd.f32 %v3688, 1.0
      %v3789 = vadd.f32 %v3689, 1.0
      %v3790 = vadd.f32 %v3690, 1.0
      %v3791 = vadd.f32 %v3691, 1.0
      %v3792 = vadd.f32 %v3692, 1.0
      %v3793 = vadd.f32 %v3693, 1.0
      %v3794 = vadd.f32 %v3694, 1.0
      %v3795 = vadd.f32 %v3695, 1.0
      %v3796 = vadd.f32 %v3696, 1.0
      %v3797 = vadd.f32 %v3697, 1.0
      %v3798 = vadd.f32 %v3698, 1.0
      %v3799 = vadd.f32 %v3699, 1.0
      %v3800 = vadd.f32 %v3700, 1.0
      %v3801 = vadd.f32 %v3701, 1.0
      %v3802 = vadd.f32 %v3702, 1.0
      %v3803 = vadd.f32 %v3703, 1.0
      %v3804 = vadd.f32 %v3704, 1.0
      %v3805 = vadd.f32 %v3705, 1.0
      %v3806 = vadd.f32 %v3706, 1.0
      %v3807 = vadd.f32 %v3707, 1.0
      %v3808 = vadd.f32 %v3708, 1.0
      %v3809 = vadd.f32 %v3709, 1.0
      %v3810 = vadd.f32 %v3710, 1.0
      %v3811 = vadd.f32 %v3711, 1.0
      %v3812 = vadd.f32 %v3712, 1.0
      %v3813 = vadd.f32 %v3713, 1.0
      %v3814 = vadd.f32 %v3714, 1.0
      %v3815 = vadd.f32 %v3715, 1.0
      %v3816 = vadd.f32 %v3716, 1.0
      %v3817 = vadd.f32 %v3717, 1.0
      %v3818 = vadd.f32 %v3718, 1.0
      %v3819 = vadd.f32 %v3719, 1.0
      %v3820 = vadd.f32 %v3720, 1.0
      %v3821 = vadd.f32 %v3721, 1.0
      %v3822 = vadd.f32 %v3722, 1.0
      %v3823 = vmul.f32 %v3023, %v3723
      %v3824 = vmul.f32 %v3024, %v3724
      %v3825 = vmul.f32 %v3025, %v3725
      %v3826 = vmul.f32 %v3026, %v3726
      %v3827 = vmul.f32 %v3027, %v3727
      %v3828 = vmul.f32 %v3028, %v3728
      %v3829 = vmul.f32 %v3029, %v3729
      %v3830 = vmul.f32 %v3030, %v3730
      %v3831 = vmul.f32 %v3031, %v3731
      %v3832 = vmul.f32 %v3032, %v3732
      %v3833 = vmul.f32 %v3033, %v3733
      %v3834 = vmul.f32 %v3034, %v3734
      %v3835 = vmul.f32 %v3035, %v3735
      %v3836 = vmul.f32 %v3036, %v3736
      %v3837 = vmul.f32 %v3037, %v3737
      %v3838 = vmul.f32 %v3038, %v3738
      %v3839 = vmul.f32 %v3039, %v3739
      %v3840 = vmul.f32 %v3040, %v3740
      %v3841 = vmul.f32 %v3041, %v3741
      %v3842 = vmul.f32 %v3042, %v3742
      %v3843 = vmul.f32 %v3043, %v3743
      %v3844 = vmul.f32 %v3044, %v3744
      %v3845 = vmul.f32 %v3045, %v3745
      %v3846 = vmul.f32 %v3046, %v3746
      %v3847 = vmul.f32 %v3047, %v3747
      %v3848 = vmul.f32 %v3048, %v3748
      %v3849 = vmul.f32 %v3049, %v3749
      %v3850 = vmul.f32 %v3050, %v3750
      %v3851 = vmul.f32 %v3051, %v3751
      %v3852 = vmul.f32 %v3052, %v3752
      %v3853 = vmul.f32 %v3053, %v3753
      %v3854 = vmul.f32 %v3054, %v3754
      %v3855 = vmul.f32 %v3055, %v3755
      %v3856 = vmul.f32 %v3056, %v3756
      %v3857 = vmul.f32 %v3057, %v3757
      %v3858 = vmul.f32 %v3058, %v3758
      %v3859 = vmul.f32 %v3059, %v3759
      %v3860 = vmul.f32 %v3060, %v3760
      %v3861 = vmul.f32 %v3061, %v3761
      %v3862 = vmul.f32 %v3062, %v3762
      %v3863 = vmul.f32 %v3063, %v3763
      %v3864 = vmul.f32 %v3064, %v3764
      %v3865 = vmul.f32 %v3065, %v3765
      %v3866 = vmul.f32 %v3066, %v3766
      %v3867 = vmul.f32 %v3067, %v3767
      %v3868 = vmul.f32 %v3068, %v3768
      %v3869 = vmul.f32 %v3069, %v3769
      %v3870 = vmul.f32 %v3070, %v3770
      %v3871 = vmul.f32 %v3071, %v3771
      %v3872 = vmul.f32 %v3072, %v3772
      %v3873 = vmul.f32 %v3073, %v3773
      %v3874 = vmul.f32 %v3074, %v3774
      %v3875 = vmul.f32 %v3075, %v3775
      %v3876 = vmul.f32 %v3076, %v3776
      %v3877 = vmul.f32 %v3077, %v3777
      %v3878 = vmul.f32 %v3078, %v3778
      %v3879 = vmul.f32 %v3079, %v3779
      %v3880 = vmul.f32 %v3080, %v3780
      %v3881 = vmul.f32 %v3081, %v3781
      %v3882 = vmul.f32 %v3082, %v3782
      %v3883 = vmul.f32 %v3083, %v3783
      %v3884 = vmul.f32 %v3084, %v3784
      %v3885 = vmul.f32 %v3085, %v3785
      %v3886 = vmul.f32 %v3086, %v3786
      %v3887 = vmul.f32 %v3087, %v3787
      %v3888 = vmul.f32 %v3088, %v3788
      %v3889 = vmul.f32 %v3089, %v3789
      %v3890 = vmul.f32 %v3090, %v3790
      %v3891 = vmul.f32 %v3091, %v3791
      %v3892 = vmul.f32 %v3092, %v3792
      %v3893 = vmul.f32 %v3093, %v3793
      %v3894 = vmul.f32 %v3094, %v3794
      %v3895 = vmul.f32 %v3095, %v3795
      %v3896 = vmul.f32 %v3096, %v3796
      %v3897 = vmul.f32 %v3097, %v3797
      %v3898 = vmul.f32 %v3098, %v3798
      %v3899 = vmul.f32 %v3099, %v3799
      %v3900 = vmul.f32 %v3100, %v3800
      %v3901 = vmul.f32 %v3101, %v3801
      %v3902 = vmul.f32 %v3102, %v3802
      %v3903 = vmul.f32 %v3103, %v3803
      %v3904 = vmul.f32 %v3104, %v3804
      %v3905 = vmul.f32 %v3105, %v3805
      %v3906 = vmul.f32 %v3106, %v3806
      %v3907 = vmul.f32 %v3107, %v3807
      %v3908 = vmul.f32 %v3108, %v3808
      %v3909 = vmul.f32 %v3109, %v3809
      %v3910 = vmul.f32 %v3110, %v3810
      %v3911 = vmul.f32 %v3111, %v3811
      %v3912 = vmul.f32 %v3112, %v3812
      %v3913 = vmul.f32 %v3113, %v3813
      %v3914 = vmul.f32 %v3114, %v3814
      %v3915 = vmul.f32 %v3115, %v3815
      %v3916 = vmul.f32 %v3116, %v3816
      %v3917 = vmul.f32 %v3117, %v3817
      %v3918 = vmul.f32 %v3118, %v3818
      %v3919 = vmul.f32 %v3119, %v3819
      %v3920 = vmul.f32 %v3120, %v3820
      %v3921 = vmul.f32 %v3121, %v3821
      %v3922 = vmul.f32 %v3122, %v3822
      %v3923 = vpack.c.bf16 %v3827, %v3823
      %v3924 = vpack.c.bf16 %v3828, %v3824
      %v3925 = vpack.c.bf16 %v3829, %v3825
      %v3926 = vpack.c.bf16 %v3830, %v3826
      %v3927 = vpack.c.bf16 %v3835, %v3831
      %v3928 = vpack.c.bf16 %v3836, %v3832
      %v3929 = vpack.c.bf16 %v3837, %v3833
      %v3930 = vpack.c.bf16 %v3838, %v3834
      %v3931 = vpack.c.bf16 %v3843, %v3839
      %v3932 = vpack.c.bf16 %v3844, %v3840
      %v3933 = vpack.c.bf16 %v3845, %v3841
      %v3934 = vpack.c.bf16 %v3846, %v3842
      %v3935 = vpack.c.bf16 %v3851, %v3847
      %v3936 = vpack.c.bf16 %v3852, %v3848
      %v3937 = vpack.c.bf16 %v3853, %v3849
      %v3938 = vpack.c.bf16 %v3854, %v3850
      %v3939 = vpack.c.bf16 %v3859, %v3855
      %v3940 = vpack.c.bf16 %v3860, %v3856
      %v3941 = vpack.c.bf16 %v3861, %v3857
      %v3942 = vpack.c.bf16 %v3862, %v3858
      %v3943 = vpack.c.bf16 %v3867, %v3863
      %v3944 = vpack.c.bf16 %v3868, %v3864
      %v3945 = vpack.c.bf16 %v3869, %v3865
      %v3946 = vpack.c.bf16 %v3870, %v3866
      %v3947 = vpack.c.bf16 %v3875, %v3871
      %v3948 = vpack.c.bf16 %v3876, %v3872
      %v3949 = vpack.c.bf16 %v3877, %v3873
      %v3950 = vpack.c.bf16 %v3878, %v3874
      %v3951 = vpack.c.bf16 %v3883, %v3879
      %v3952 = vpack.c.bf16 %v3884, %v3880
      %v3953 = vpack.c.bf16 %v3885, %v3881
      %v3954 = vpack.c.bf16 %v3886, %v3882
      %v3955 = vpack.c.bf16 %v3891, %v3887
      %v3956 = vpack.c.bf16 %v3892, %v3888
      %v3957 = vpack.c.bf16 %v3893, %v3889
      %v3958 = vpack.c.bf16 %v3894, %v3890
      %v3959 = vpack.c.bf16 %v3899, %v3895
      %v3960 = vpack.c.bf16 %v3900, %v3896
      %v3961 = vpack.c.bf16 %v3901, %v3897
      %v3962 = vpack.c.bf16 %v3902, %v3898
      %v3963 = vpack.c.bf16 %v3907, %v3903
      %v3964 = vpack.c.bf16 %v3908, %v3904
      %v3965 = vpack.c.bf16 %v3909, %v3905
      %v3966 = vpack.c.bf16 %v3910, %v3906
      %v3967 = vpack.c.bf16 %v3915, %v3911
      %v3968 = vpack.c.bf16 %v3916, %v3912
      %v3969 = vpack.c.bf16 %v3917, %v3913
      %v3970 = vpack.c.bf16 %v3918, %v3914
      %v3971 = vpack.c.bf16 %v3919, %v3919
      %v3972 = vpack.c.bf16 %v3920, %v3920
      %v3973 = vpack.c.bf16 %v3921, %v3921
      %v3974 = vpack.c.bf16 %v3922, %v3922
      %v3975 = vld [vmem:[%s13] sm:$0xf]
      %v3976 = vld [vmem:[%s13 + $0x4] sm:$0xf]
      %v3977 = vld [vmem:[%s13 + $0x8] sm:$0xf]
      %v3978 = vld [vmem:[%s13 + $0xc] sm:$0xf]
      %v3979 = vld [vmem:[%s13 + $0x10] sm:$0xf]
      %v3980 = vld [vmem:[%s13 + $0x14] sm:$0xf]
      %v3981 = vld [vmem:[%s13 + $0x18] sm:$0xf]
      %v3982 = vld [vmem:[%s13 + $0x1c] sm:$0xf]
      %v3983 = vld [vmem:[%s13 + $0x20] sm:$0xf]
      %v3984 = vld [vmem:[%s13 + $0x24] sm:$0xf]
      %v3985 = vld [vmem:[%s13 + $0x28] sm:$0xf]
      %v3986 = vld [vmem:[%s13 + $0x2c] sm:$0xf]
      %v3987 = vld [vmem:[%s13 + $0x30] sm:$0xf]
      %v3988 = vld [vmem:[%s13 + $0x34] sm:$0xf]
      %v3989 = vld [vmem:[%s13 + $0x38] sm:$0xf]
      %v3990 = vld [vmem:[%s13 + $0x3c] sm:$0xf]
      %v3991 = vld [vmem:[%s13 + $0x40] sm:$0xf]
      %v3992 = vld [vmem:[%s13 + $0x44] sm:$0xf]
      %v3993 = vld [vmem:[%s13 + $0x48] sm:$0xf]
      %v3994 = vld [vmem:[%s13 + $0x4c] sm:$0xf]
      %v3995 = vld [vmem:[%s13 + $0x50] sm:$0xf]
      %v3996 = vld [vmem:[%s13 + $0x54] sm:$0xf]
      %v3997 = vld [vmem:[%s13 + $0x58] sm:$0xf]
      %v3998 = vld [vmem:[%s13 + $0x5c] sm:$0xf]
      %v3999 = vld [vmem:[%s13 + $0x60] sm:$0xf]
      %v4000 = vld [vmem:[%s13 + $0x64] sm:$0xf]
      %v4001 = vld [vmem:[%s13 + $0x68] sm:$0xf]
      %v4002 = vld [vmem:[%s13 + $0x6c] sm:$0xf]
      %v4003 = vld [vmem:[%s13 + $0x70] sm:$0xf]
      %v4004 = vld [vmem:[%s13 + $0x74] sm:$0xf]
      %v4005 = vld [vmem:[%s13 + $0x78] sm:$0xf]
      %v4006 = vld [vmem:[%s13 + $0x7c] sm:$0xf]
      %v4007 = vld [vmem:[%s13 + $0x80] sm:$0xf]
      %v4008 = vld [vmem:[%s13 + $0x84] sm:$0xf]
      %v4009 = vld [vmem:[%s13 + $0x88] sm:$0xf]
      %v4010 = vld [vmem:[%s13 + $0x8c] sm:$0xf]
      %v4011 = vld [vmem:[%s13 + $0x90] sm:$0xf]
      %v4012 = vld [vmem:[%s13 + $0x94] sm:$0xf]
      %v4013 = vld [vmem:[%s13 + $0x98] sm:$0xf]
      %v4014 = vld [vmem:[%s13 + $0x9c] sm:$0xf]
      %v4015 = vld [vmem:[%s13 + $0xa0] sm:$0xf]
      %v4016 = vld [vmem:[%s13 + $0xa4] sm:$0xf]
      %v4017 = vld [vmem:[%s13 + $0xa8] sm:$0xf]
      %v4018 = vld [vmem:[%s13 + $0xac] sm:$0xf]
      %v4019 = vld [vmem:[%s13 + $0xb0] sm:$0xf]
      %v4020 = vld [vmem:[%s13 + $0xb4] sm:$0xf]
      %v4021 = vld [vmem:[%s13 + $0xb8] sm:$0xf]
      %v4022 = vld [vmem:[%s13 + $0xbc] sm:$0xf]
      %v4023 = vld [vmem:[%s13 + $0xc0] sm:$0xf]
      %v4024 = vld [vmem:[%s13 + $0xc4] sm:$0xf]
      %v4025 = vld [vmem:[%s13 + $0xc8] sm:$0xf]
      %v4026 = vld [vmem:[%s13 + $0xcc] sm:$0xf]
      %v4027 = vld [vmem:[%s13 + $0xd0] sm:$0xf]
      %v4028 = vld [vmem:[%s13 + $0xd4] sm:$0xf]
      %v4029 = vld [vmem:[%s13 + $0xd8] sm:$0xf]
      %v4030 = vld [vmem:[%s13 + $0xdc] sm:$0xf]
      %v4031 = vld [vmem:[%s13 + $0xe0] sm:$0xf]
      %v4032 = vld [vmem:[%s13 + $0xe4] sm:$0xf]
      %v4033 = vld [vmem:[%s13 + $0xe8] sm:$0xf]
      %v4034 = vld [vmem:[%s13 + $0xec] sm:$0xf]
      %v4035 = vld [vmem:[%s13 + $0xf0] sm:$0xf]
      %v4036 = vld [vmem:[%s13 + $0xf4] sm:$0xf]
      %v4037 = vld [vmem:[%s13 + $0xf8] sm:$0xf]
      %v4038 = vld [vmem:[%s13 + $0xfc] sm:$0xf]
      %v4039 = vld [vmem:[%s14] sm:$0x1]
      %v4041 = vlaneseq
      %v4042 = vshrl.u32 %v4041, 7
      %v4043 = vsub.s32 0, %v4042
      %v4044 = vrot.slane %v4039, %v4043
      %v4110 = vunpack.c.l.b16 %v3975
      %v4111 = vunpack.c.l.b16 %v3976
      %v4112 = vunpack.c.l.b16 %v3977
      %v4113 = vunpack.c.l.b16 %v3978
      %v4114 = vunpack.c.l.b16 %v3979
      %v4115 = vunpack.c.l.b16 %v3980
      %v4116 = vunpack.c.l.b16 %v3981
      %v4117 = vunpack.c.l.b16 %v3982
      %v4118 = vunpack.c.l.b16 %v3983
      %v4119 = vunpack.c.l.b16 %v3984
      %v4120 = vunpack.c.l.b16 %v3985
      %v4121 = vunpack.c.l.b16 %v3986
      %v4122 = vunpack.c.l.b16 %v3987
      %v4123 = vunpack.c.l.b16 %v3988
      %v4124 = vunpack.c.l.b16 %v3989
      %v4125 = vunpack.c.l.b16 %v3990
      %v4126 = vunpack.c.l.b16 %v3991
      %v4127 = vunpack.c.l.b16 %v3992
      %v4128 = vunpack.c.l.b16 %v3993
      %v4129 = vunpack.c.l.b16 %v3994
      %v4130 = vunpack.c.l.b16 %v3995
      %v4131 = vunpack.c.l.b16 %v3996
      %v4132 = vunpack.c.l.b16 %v3997
      %v4133 = vunpack.c.l.b16 %v3998
      %v4134 = vunpack.c.l.b16 %v3999
      %v4135 = vunpack.c.l.b16 %v4000
      %v4136 = vunpack.c.l.b16 %v4001
      %v4137 = vunpack.c.l.b16 %v4002
      %v4138 = vunpack.c.l.b16 %v4003
      %v4139 = vunpack.c.l.b16 %v4004
      %v4140 = vunpack.c.l.b16 %v4005
      %v4141 = vunpack.c.l.b16 %v4006
      %v4142 = vunpack.c.l.b16 %v4007
      %v4143 = vunpack.c.l.b16 %v4008
      %v4144 = vunpack.c.l.b16 %v4009
      %v4145 = vunpack.c.l.b16 %v4010
      %v4146 = vunpack.c.l.b16 %v4011
      %v4147 = vunpack.c.l.b16 %v4012
      %v4148 = vunpack.c.l.b16 %v4013
      %v4149 = vunpack.c.l.b16 %v4014
      %v4150 = vunpack.c.l.b16 %v4015
      %v4151 = vunpack.c.l.b16 %v4016
      %v4152 = vunpack.c.l.b16 %v4017
      %v4153 = vunpack.c.l.b16 %v4018
      %v4154 = vunpack.c.l.b16 %v4019
      %v4155 = vunpack.c.l.b16 %v4020
      %v4156 = vunpack.c.l.b16 %v4021
      %v4157 = vunpack.c.l.b16 %v4022
      %v4158 = vunpack.c.l.b16 %v4023
      %v4159 = vunpack.c.l.b16 %v4024
      %v4160 = vunpack.c.l.b16 %v4025
      %v4161 = vunpack.c.l.b16 %v4026
      %v4162 = vunpack.c.l.b16 %v4027
      %v4163 = vunpack.c.l.b16 %v4028
      %v4164 = vunpack.c.l.b16 %v4029
      %v4165 = vunpack.c.l.b16 %v4030
      %v4166 = vunpack.c.l.b16 %v4031
      %v4167 = vunpack.c.l.b16 %v4032
      %v4168 = vunpack.c.l.b16 %v4033
      %v4169 = vunpack.c.l.b16 %v4034
      %v4170 = vunpack.c.l.b16 %v4035
      %v4171 = vunpack.c.l.b16 %v4036
      %v4172 = vunpack.c.l.b16 %v4037
      %v4173 = vunpack.c.l.b16 %v4038
      %v4174 = vpack.c.b16 %v4111, %v4110
      %v4175 = vpack.c.b16 %v4113, %v4112
      %v4176 = vpack.c.b16 %v4115, %v4114
      %v4177 = vpack.c.b16 %v4117, %v4116
      %v4178 = vpack.c.b16 %v4119, %v4118
      %v4179 = vpack.c.b16 %v4121, %v4120
      %v4180 = vpack.c.b16 %v4123, %v4122
      %v4181 = vpack.c.b16 %v4125, %v4124
      %v4182 = vpack.c.b16 %v4127, %v4126
      %v4183 = vpack.c.b16 %v4129, %v4128
      %v4184 = vpack.c.b16 %v4131, %v4130
      %v4185 = vpack.c.b16 %v4133, %v4132
      %v4186 = vpack.c.b16 %v4135, %v4134
      %v4187 = vpack.c.b16 %v4137, %v4136
      %v4188 = vpack.c.b16 %v4139, %v4138
      %v4189 = vpack.c.b16 %v4141, %v4140
      %v4190 = vpack.c.b16 %v4143, %v4142
      %v4191 = vpack.c.b16 %v4145, %v4144
      %v4192 = vpack.c.b16 %v4147, %v4146
      %v4193 = vpack.c.b16 %v4149, %v4148
      %v4194 = vpack.c.b16 %v4151, %v4150
      %v4195 = vpack.c.b16 %v4153, %v4152
      %v4196 = vpack.c.b16 %v4155, %v4154
      %v4197 = vpack.c.b16 %v4157, %v4156
      %v4198 = vpack.c.b16 %v4159, %v4158
      %v4199 = vpack.c.b16 %v4161, %v4160
      %v4200 = vpack.c.b16 %v4163, %v4162
      %v4201 = vpack.c.b16 %v4165, %v4164
      %v4202 = vpack.c.b16 %v4167, %v4166
      %v4203 = vpack.c.b16 %v4169, %v4168
      %v4204 = vpack.c.b16 %v4171, %v4170
      %v4205 = vpack.c.b16 %v4173, %v4172
      %4238 = vmatprep.subr.bf16.mxu0 0
      %4239 = vmatpush1.bf16.msra.mxu0 %v4174
      %4240 = vmatprep.subr.bf16.mxu0 0
      %4241 = vmatpush1.bf16.msra.mxu0 %v4175
      %4242 = vmatprep.subr.bf16.mxu0 0
      %4243 = vmatpush1.bf16.msra.mxu0 %v4176
      %4244 = vmatprep.subr.bf16.mxu0 0
      %4245 = vmatpush1.bf16.msra.mxu0 %v4177
      %4246 = vmatprep.subr.bf16.mxu0 0
      %4247 = vmatpush1.bf16.msra.mxu0 %v4178
      %4248 = vmatprep.subr.bf16.mxu0 0
      %4249 = vmatpush1.bf16.msra.mxu0 %v4179
      %4250 = vmatprep.subr.bf16.mxu0 0
      %4251 = vmatpush1.bf16.msra.mxu0 %v4180
      %4252 = vmatprep.subr.bf16.mxu0 0
      %4253 = vmatpush1.bf16.msra.mxu0 %v4181
      %4254 = vmatprep.subr.bf16.mxu0 0
      %4255 = vmatpush1.bf16.msra.mxu0 %v4182
      %4256 = vmatprep.subr.bf16.mxu0 0
      %4257 = vmatpush1.bf16.msra.mxu0 %v4183
      %4258 = vmatprep.subr.bf16.mxu0 0
      %4259 = vmatpush1.bf16.msra.mxu0 %v4184
      %4260 = vmatprep.subr.bf16.mxu0 0
      %4261 = vmatpush1.bf16.msra.mxu0 %v4185
      %4262 = vmatprep.subr.bf16.mxu0 0
      %4263 = vmatpush1.bf16.msra.mxu0 %v4186
      %4264 = vmatprep.subr.bf16.mxu0 0
      %4265 = vmatpush1.bf16.msra.mxu0 %v4187
      %4266 = vmatprep.subr.bf16.mxu0 0
      %4267 = vmatpush1.bf16.msra.mxu0 %v4188
      %4268 = vmatprep.subr.bf16.mxu0 0
      %4269 = vmatpush1.bf16.msra.mxu0 %v4189
      %4270 = vmatprep.mubr.bf16.mxu0 %v3924
      %4271 = vmatmul.mubr.bf16.gmra.mrb[0].mxu0 %v3923
      %v4272 = vpop.f32.mrb[0].mxu0
      %v4273 = vadd.f32 %v4044, %v4272
      %v4274 = vpop.f32.mrb[0].mxu0
      %v4275 = vpop.f32.mrb[0].mxu0
      %v4276 = vadd.f32 %v4044, %v4275
      %v4277 = vpop.f32.mrb[0].mxu0
      %4278 = vmatprep.mubr.bf16.mxu0 %v3928
      %4279 = vmatmul.mubr.bf16.gmra.mrb[0].mxu0 %v3927
      %v4280 = vpop.f32.mrb[0].mxu0
      %v4281 = vadd.f32 %v4044, %v4280
      %v4282 = vpop.f32.mrb[0].mxu0
      %v4283 = vpop.f32.mrb[0].mxu0
      %v4284 = vadd.f32 %v4044, %v4283
      %v4285 = vpop.f32.mrb[0].mxu0
      %4286 = vmatprep.mubr.bf16.mxu0 %v3932
      %4287 = vmatmul.mubr.bf16.gmra.mrb[0].mxu0 %v3931
      %v4288 = vpop.f32.mrb[0].mxu0
      %v4289 = vadd.f32 %v4044, %v4288
      %v4290 = vpop.f32.mrb[0].mxu0
      %v4291 = vpop.f32.mrb[0].mxu0
      %v4292 = vadd.f32 %v4044, %v4291
      %v4293 = vpop.f32.mrb[0].mxu0
      %4294 = vmatprep.mubr.bf16.mxu0 %v3936
      %4295 = vmatmul.mubr.bf16.gmra.mrb[0].mxu0 %v3935
      %v4296 = vpop.f32.mrb[0].mxu0
      %v4297 = vadd.f32 %v4044, %v4296
      %v4298 = vpop.f32.mrb[0].mxu0
      %v4299 = vpop.f32.mrb[0].mxu0
      %v4300 = vadd.f32 %v4044, %v4299
      %v4301 = vpop.f32.mrb[0].mxu0
      %4302 = vmatprep.mubr.bf16.mxu0 %v3940
      %4303 = vmatmul.mubr.bf16.gmra.mrb[0].mxu0 %v3939
      %v4304 = vpop.f32.mrb[0].mxu0
      %v4305 = vadd.f32 %v4044, %v4304
      %v4306 = vpop.f32.mrb[0].mxu0
      %v4307 = vpop.f32.mrb[0].mxu0
      %v4308 = vadd.f32 %v4044, %v4307
      %v4309 = vpop.f32.mrb[0].mxu0
      %4310 = vmatprep.mubr.bf16.mxu0 %v3944
      %4311 = vmatmul.mubr.bf16.gmra.mrb[0].mxu0 %v3943
      %v4312 = vpop.f32.mrb[0].mxu0
      %v4313 = vadd.f32 %v4044, %v4312
      %v4314 = vpop.f32.mrb[0].mxu0
      %v4315 = vpop.f32.mrb[0].mxu0
      %v4316 = vadd.f32 %v4044, %v4315
      %v4317 = vpop.f32.mrb[0].mxu0
      %4318 = vmatprep.mubr.bf16.mxu0 %v3948
      %4319 = vmatmul.mubr.bf16.gmra.mrb[0].mxu0 %v3947
      %v4320 = vpop.f32.mrb[0].mxu0
      %v4321 = vadd.f32 %v4044, %v4320
      %v4322 = vpop.f32.mrb[0].mxu0
      %v4323 = vpop.f32.mrb[0].mxu0
      %v4324 = vadd.f32 %v4044, %v4323
      %v4325 = vpop.f32.mrb[0].mxu0
      %4326 = vmatprep.mubr.bf16.mxu0 %v3952
      %4327 = vmatmul.mubr.bf16.gmra.mrb[0].mxu0 %v3951
      %v4328 = vpop.f32.mrb[0].mxu0
      %v4329 = vadd.f32 %v4044, %v4328
      %v4330 = vpop.f32.mrb[0].mxu0
      %v4331 = vpop.f32.mrb[0].mxu0
      %v4332 = vadd.f32 %v4044, %v4331
      %v4333 = vpop.f32.mrb[0].mxu0
      %4334 = vmatprep.mubr.bf16.mxu0 %v3956
      %4335 = vmatmul.mubr.bf16.gmra.mrb[0].mxu0 %v3955
      %v4336 = vpop.f32.mrb[0].mxu0
      %v4337 = vadd.f32 %v4044, %v4336
      %v4338 = vpop.f32.mrb[0].mxu0
      %v4339 = vpop.f32.mrb[0].mxu0
      %v4340 = vadd.f32 %v4044, %v4339
      %v4341 = vpop.f32.mrb[0].mxu0
      %4342 = vmatprep.mubr.bf16.mxu0 %v3960
      %4343 = vmatmul.mubr.bf16.gmra.mrb[0].mxu0 %v3959
      %v4344 = vpop.f32.mrb[0].mxu0
      %v4345 = vadd.f32 %v4044, %v4344
      %v4346 = vpop.f32.mrb[0].mxu0
      %v4347 = vpop.f32.mrb[0].mxu0
      %v4348 = vadd.f32 %v4044, %v4347
      %v4349 = vpop.f32.mrb[0].mxu0
      %4350 = vmatprep.mubr.bf16.mxu0 %v3964
      %4351 = vmatmul.mubr.bf16.gmra.mrb[0].mxu0 %v3963
      %v4352 = vpop.f32.mrb[0].mxu0
      %v4353 = vadd.f32 %v4044, %v4352
      %v4354 = vpop.f32.mrb[0].mxu0
      %v4355 = vpop.f32.mrb[0].mxu0
      %v4356 = vadd.f32 %v4044, %v4355
      %v4357 = vpop.f32.mrb[0].mxu0
      %4358 = vmatprep.mubr.bf16.mxu0 %v3968
      %4359 = vmatmul.mubr.bf16.gmra.mrb[0].mxu0 %v3967
      %v4360 = vpop.f32.mrb[0].mxu0
      %v4361 = vadd.f32 %v4044, %v4360
      %v4362 = vpop.f32.mrb[0].mxu0
      %v4363 = vpop.f32.mrb[0].mxu0
      %v4364 = vadd.f32 %v4044, %v4363
      %v4365 = vpop.f32.mrb[0].mxu0
      %4366 = vmatprep.mubr.bf16.mxu0 %v3972
      %4367 = vmatmul.mubr.bf16.gmra.mrb[0].mxu0 %v3971
      %v4368 = vpop.f32.mrb[0].mxu0
      %v4369 = vadd.f32 %v4044, %v4368
      %v4370 = vpop.f32.mrb[0].mxu0
      %v4371 = vpop.f32.mrb[0].mxu0
      %v4372 = vpop.f32.mrb[0].mxu0
      %4373 = vdwg.mxu0
      %4374 = vmatprep.subr.bf16.mxu0 0
      %4375 = vmatpush1.bf16.msra.mxu0 %v4190
      %4376 = vmatprep.subr.bf16.mxu0 0
      %4377 = vmatpush1.bf16.msra.mxu0 %v4191
      %4378 = vmatprep.subr.bf16.mxu0 0
      %4379 = vmatpush1.bf16.msra.mxu0 %v4192
      %4380 = vmatprep.subr.bf16.mxu0 0
      %4381 = vmatpush1.bf16.msra.mxu0 %v4193
      %4382 = vmatprep.subr.bf16.mxu0 0
      %4383 = vmatpush1.bf16.msra.mxu0 %v4194
      %4384 = vmatprep.subr.bf16.mxu0 0
      %4385 = vmatpush1.bf16.msra.mxu0 %v4195
      %4386 = vmatprep.subr.bf16.mxu0 0
      %4387 = vmatpush1.bf16.msra.mxu0 %v4196
      %4388 = vmatprep.subr.bf16.mxu0 0
      %4389 = vmatpush1.bf16.msra.mxu0 %v4197
      %4390 = vmatprep.subr.bf16.mxu0 0
      %4391 = vmatpush1.bf16.msra.mxu0 %v4198
      %4392 = vmatprep.subr.bf16.mxu0 0
      %4393 = vmatpush1.bf16.msra.mxu0 %v4199
      %4394 = vmatprep.subr.bf16.mxu0 0
      %4395 = vmatpush1.bf16.msra.mxu0 %v4200
      %4396 = vmatprep.subr.bf16.mxu0 0
      %4397 = vmatpush1.bf16.msra.mxu0 %v4201
      %4398 = vmatprep.subr.bf16.mxu0 0
      %4399 = vmatpush1.bf16.msra.mxu0 %v4202
      %4400 = vmatprep.subr.bf16.mxu0 0
      %4401 = vmatpush1.bf16.msra.mxu0 %v4203
      %4402 = vmatprep.subr.bf16.mxu0 0
      %4403 = vmatpush1.bf16.msra.mxu0 %v4204
      %4404 = vmatprep.subr.bf16.mxu0 0
      %4405 = vmatpush1.bf16.msra.mxu0 %v4205
      %4406 = vmatprep.mubr.bf16.mxu0 %v3926
      %4407 = vmatmul.mubr.bf16.gmra.mrb[0].mxu0 %v3925
      %v4408 = vpop.f32.mrb[0].mxu0
      %v4409 = vadd.f32 %v4273, %v4408
      %v4410 = vpop.f32.mrb[0].mxu0
      %v4411 = vpop.f32.mrb[0].mxu0
      %v4412 = vadd.f32 %v4276, %v4411
      %v4413 = vpop.f32.mrb[0].mxu0
      %4414 = vmatprep.mubr.bf16.mxu0 %v3930
      %4415 = vmatmul.mubr.bf16.gmra.mrb[0].mxu0 %v3929
      %v4416 = vpop.f32.mrb[0].mxu0
      %v4417 = vadd.f32 %v4281, %v4416
      %v4418 = vpop.f32.mrb[0].mxu0
      %v4419 = vpop.f32.mrb[0].mxu0
      %v4420 = vadd.f32 %v4284, %v4419
      %v4421 = vpop.f32.mrb[0].mxu0
      %4422 = vmatprep.mubr.bf16.mxu0 %v3934
      %4423 = vmatmul.mubr.bf16.gmra.mrb[0].mxu0 %v3933
      %v4424 = vpop.f32.mrb[0].mxu0
      %v4425 = vadd.f32 %v4289, %v4424
      %v4426 = vpop.f32.mrb[0].mxu0
      %v4427 = vpop.f32.mrb[0].mxu0
      %v4428 = vadd.f32 %v4292, %v4427
      %v4429 = vpop.f32.mrb[0].mxu0
      %4430 = vmatprep.mubr.bf16.mxu0 %v3938
      %4431 = vmatmul.mubr.bf16.gmra.mrb[0].mxu0 %v3937
      %v4432 = vpop.f32.mrb[0].mxu0
      %v4433 = vadd.f32 %v4297, %v4432
      %v4434 = vpop.f32.mrb[0].mxu0
      %v4435 = vpop.f32.mrb[0].mxu0
      %v4436 = vadd.f32 %v4300, %v4435
      %v4437 = vpop.f32.mrb[0].mxu0
      %4438 = vmatprep.mubr.bf16.mxu0 %v3942
      %4439 = vmatmul.mubr.bf16.gmra.mrb[0].mxu0 %v3941
      %v4440 = vpop.f32.mrb[0].mxu0
      %v4441 = vadd.f32 %v4305, %v4440
      %v4442 = vpop.f32.mrb[0].mxu0
      %v4443 = vpop.f32.mrb[0].mxu0
      %v4444 = vadd.f32 %v4308, %v4443
      %v4445 = vpop.f32.mrb[0].mxu0
      %4446 = vmatprep.mubr.bf16.mxu0 %v3946
      %4447 = vmatmul.mubr.bf16.gmra.mrb[0].mxu0 %v3945
      %v4448 = vpop.f32.mrb[0].mxu0
      %v4449 = vadd.f32 %v4313, %v4448
      %v4450 = vpop.f32.mrb[0].mxu0
      %v4451 = vpop.f32.mrb[0].mxu0
      %v4452 = vadd.f32 %v4316, %v4451
      %v4453 = vpop.f32.mrb[0].mxu0
      %4454 = vmatprep.mubr.bf16.mxu0 %v3950
      %4455 = vmatmul.mubr.bf16.gmra.mrb[0].mxu0 %v3949
      %v4456 = vpop.f32.mrb[0].mxu0
      %v4457 = vadd.f32 %v4321, %v4456
      %v4458 = vpop.f32.mrb[0].mxu0
      %v4459 = vpop.f32.mrb[0].mxu0
      %v4460 = vadd.f32 %v4324, %v4459
      %v4461 = vpop.f32.mrb[0].mxu0
      %4462 = vmatprep.mubr.bf16.mxu0 %v3954
      %4463 = vmatmul.mubr.bf16.gmra.mrb[0].mxu0 %v3953
      %v4464 = vpop.f32.mrb[0].mxu0
      %v4465 = vadd.f32 %v4329, %v4464
      %v4466 = vpop.f32.mrb[0].mxu0
      %v4467 = vpop.f32.mrb[0].mxu0
      %v4468 = vadd.f32 %v4332, %v4467
      %v4469 = vpop.f32.mrb[0].mxu0
      %4470 = vmatprep.mubr.bf16.mxu0 %v3958
      %4471 = vmatmul.mubr.bf16.gmra.mrb[0].mxu0 %v3957
      %v4472 = vpop.f32.mrb[0].mxu0
      %v4473 = vadd.f32 %v4337, %v4472
      %v4474 = vpop.f32.mrb[0].mxu0
      %v4475 = vpop.f32.mrb[0].mxu0
      %v4476 = vadd.f32 %v4340, %v4475
      %v4477 = vpop.f32.mrb[0].mxu0
      %4478 = vmatprep.mubr.bf16.mxu0 %v3962
      %4479 = vmatmul.mubr.bf16.gmra.mrb[0].mxu0 %v3961
      %v4480 = vpop.f32.mrb[0].mxu0
      %v4481 = vadd.f32 %v4345, %v4480
      %v4482 = vpop.f32.mrb[0].mxu0
      %v4483 = vpop.f32.mrb[0].mxu0
      %v4484 = vadd.f32 %v4348, %v4483
      %v4485 = vpop.f32.mrb[0].mxu0
      %4486 = vmatprep.mubr.bf16.mxu0 %v3966
      %4487 = vmatmul.mubr.bf16.gmra.mrb[0].mxu0 %v3965
      %v4488 = vpop.f32.mrb[0].mxu0
      %v4489 = vadd.f32 %v4353, %v4488
      %v4490 = vpop.f32.mrb[0].mxu0
      %v4491 = vpop.f32.mrb[0].mxu0
      %v4492 = vadd.f32 %v4356, %v4491
      %v4493 = vpop.f32.mrb[0].mxu0
      %4494 = vmatprep.mubr.bf16.mxu0 %v3970
      %4495 = vmatmul.mubr.bf16.gmra.mrb[0].mxu0 %v3969
      %v4496 = vpop.f32.mrb[0].mxu0
      %v4497 = vadd.f32 %v4361, %v4496
      %v4498 = vpop.f32.mrb[0].mxu0
      %v4499 = vpop.f32.mrb[0].mxu0
      %v4500 = vadd.f32 %v4364, %v4499
      %v4501 = vpop.f32.mrb[0].mxu0
      %4502 = vmatprep.mubr.bf16.mxu0 %v3974
      %4503 = vmatmul.mubr.bf16.gmra.mrb[0].mxu0 %v3973
      %v4504 = vpop.f32.mrb[0].mxu0
      %v4505 = vadd.f32 %v4369, %v4504
      %v4506 = vpop.f32.mrb[0].mxu0
      %v4507 = vpop.f32.mrb[0].mxu0
      %v4508 = vpop.f32.mrb[0].mxu0
      %4509 = vdwg.mxu0
      %v4510 = vadd.f32 %v1905, %v4409
      %v4511 = vadd.f32 %v1906, %v4412
      %v4512 = vadd.f32 %v1907, %v4417
      %v4513 = vadd.f32 %v1908, %v4420
      %v4514 = vadd.f32 %v1909, %v4425
      %v4515 = vadd.f32 %v1910, %v4428
      %v4516 = vadd.f32 %v1911, %v4433
      %v4517 = vadd.f32 %v1912, %v4436
      %v4518 = vadd.f32 %v1913, %v4441
      %v4519 = vadd.f32 %v1914, %v4444
      %v4520 = vadd.f32 %v1915, %v4449
      %v4521 = vadd.f32 %v1916, %v4452
      %v4522 = vadd.f32 %v1917, %v4457
      %v4523 = vadd.f32 %v1918, %v4460
      %v4524 = vadd.f32 %v1919, %v4465
      %v4525 = vadd.f32 %v1920, %v4468
      %v4526 = vadd.f32 %v1921, %v4473
      %v4527 = vadd.f32 %v1922, %v4476
      %v4528 = vadd.f32 %v1923, %v4481
      %v4529 = vadd.f32 %v1924, %v4484
      %v4530 = vadd.f32 %v1925, %v4489
      %v4531 = vadd.f32 %v1926, %v4492
      %v4532 = vadd.f32 %v1927, %v4497
      %v4533 = vadd.f32 %v1928, %v4500
      %v4534 = vadd.f32 %v1929, %v4505
      %v4535 = vld [vmem:[%s15] sm:$0xf]
      %v4536 = vld [vmem:[#allocation2] sm:$0x1]
      %v4538 = vlaneseq
      %v4539 = vshrl.u32 %v4538, 7
      %v4540 = vsub.s32 0, %v4539
      %v4541 = vrot.slane %v4536, %v4540
      %4542 = vset.pattern.permute.xlu0 0
      %4543 = vperm.xlu0 %4542, %v4541
      %v4544 = vpop.permute.xlu0 %4543
      %4546 = vmatprep.subr.mxu0 0.0
      %4547 = vmatpush1.xpose.msra.mxu0 %v4510
      %4548 = vmatprep.subr.mxu0 0.0
      %4549 = vmatpush1.xpose.msra.mxu0 %v4511
      %4550 = vmatprep.subr.mxu0 0.0
      %4551 = vmatpush1.xpose.msra.mxu0 %v4512
      %4552 = vmatprep.subr.mxu0 0.0
      %4553 = vmatpush1.xpose.msra.mxu0 %v4513
      %4554 = vmatprep.subr.mxu0 0.0
      %4555 = vmatpush1.xpose.msra.mxu0 %v4514
      %4556 = vmatprep.subr.mxu0 0.0
      %4557 = vmatpush1.xpose.msra.mxu0 %v4515
      %4558 = vmatprep.subr.mxu0 0.0
      %4559 = vmatpush1.xpose.msra.mxu0 %v4516
      %4560 = vmatprep.subr.mxu0 0.0
      %4561 = vmatpush1.xpose.msra.mxu0 %v4517
      %4562 = vmatprep.subr.mxu0 0.0
      %4563 = vmatpush1.xpose.msra.mxu0 %v4518
      %4564 = vmatprep.subr.mxu0 0.0
      %4565 = vmatpush1.xpose.msra.mxu0 %v4519
      %4566 = vmatprep.subr.mxu0 0.0
      %4567 = vmatpush1.xpose.msra.mxu0 %v4520
      %4568 = vmatprep.subr.mxu0 0.0
      %4569 = vmatpush1.xpose.msra.mxu0 %v4521
      %4570 = vmatprep.subr.mxu0 0.0
      %4571 = vmatpush1.xpose.msra.mxu0 %v4522
      %4572 = vmatprep.subr.mxu0 0.0
      %4573 = vmatpush1.xpose.msra.mxu0 %v4523
      %4574 = vmatprep.subr.mxu0 0.0
      %4575 = vmatpush1.xpose.msra.mxu0 %v4524
      %4576 = vmatprep.subr.mxu0 0.0
      %4577 = vmatpush1.xpose.msra.mxu0 %v4525
      %4578 = vmatprep.subr.mxu0 0.0
      %4579 = vmatpush1.xpose.msra.mxu0 %v4526
      %4580 = vmatprep.subr.mxu0 0.0
      %4581 = vmatpush1.xpose.msra.mxu0 %v4527
      %4582 = vmatprep.subr.mxu0 0.0
      %4583 = vmatpush1.xpose.msra.mxu0 %v4528
      %4584 = vmatprep.subr.mxu0 0.0
      %4585 = vmatpush1.xpose.msra.mxu0 %v4529
      %4586 = vmatprep.subr.mxu0 0.0
      %4587 = vmatpush1.xpose.msra.mxu0 %v4530
      %4588 = vmatprep.subr.mxu0 0.0
      %4589 = vmatpush1.xpose.msra.mxu0 %v4531
      %4590 = vmatprep.subr.mxu0 0.0
      %4591 = vmatpush1.xpose.msra.mxu0 %v4532
      %4592 = vmatprep.subr.mxu0 0.0
      %4593 = vmatpush1.xpose.msra.mxu0 %v4533
      %4594 = vmatprep.subr.mxu0 0.0
      %4595 = vmatpush1.xpose.msra.mxu0 %v4534
      %4596 = vmatprep.subr.mxu0 0.0
      %4597 = vmatpush1.xpose.msra.mxu0 0.0
      %4598 = vmatprep.subr.mxu0 0.0
      %4599 = vmatpush1.xpose.msra.mxu0 0.0
      %4600 = vmatprep.subr.mxu0 0.0
      %4601 = vmatpush1.xpose.msra.mxu0 0.0
      %4602 = vmatprep.subr.mxu0 0.0
      %4603 = vmatpush1.xpose.msra.mxu0 0.0
      %4604 = vmatprep.subr.mxu0 0.0
      %4605 = vmatpush1.xpose.msra.mxu0 0.0
      %4606 = vmatprep.subr.mxu0 0.0
      %4607 = vmatpush1.xpose.msra.mxu0 0.0
      %4608 = vmatprep.subr.mxu0 0.0
      %4609 = vmatpush1.xpose.msra.mxu0 0.0
      %4610 = vmatprep.mubr.f32.mxu0 0.0
      %4611 = vmatmul.mubr.f32.gmra.mrb[0].mxu0 %v4535
      %v4612 = vpop.f32.mrb[0].mxu0
      %v4613 = vadd.f32 %v4544, %v4612
      %v4614 = vpop.f32.mrb[0].mxu0
      %v4615 = vadd.f32 %v4544, %v4614
      %4616 = vdwg.mxu0
      %v4619 = vcombine.low %v4613, %v4615
      %vm4621 = vcmask 1043456
      %vm4622 = vcmask 564228
      %vm4623 = vmor %vm4622, %vm4621
      %4624 = vst.msk [vmem:[%s550] sm:$0xff] %vm4623, %v4619
      %p4625 = scmp.lt.s32.totalorder %s30, 1
      %s4626 = scalar_select %p4625, %s30, 1
      %s4627 = smul.addr %s4626, 2
      %s4628 = smul.addr %s4627, 4
      %s4629 = scalar_lea.vmem %s17, %s4628
      // Predicated region
      $region89: #{predictor_forward.1} parent=87 // pred_check
        %p4630 = pneg %p410
      $region90: #{predictor_forward.1} parent=87 // pred_check_branch
        %4632 = sbr.rel (%p4630) target = $region92
      $region91: #{predictor_forward.1} parent=87 // pred_region
        _
      $region92: #{predictor_forward.1} parent=87 // pred_fallthru
        _
    $region88: #{predictor_forward.1} parent=5 // pred_fallthru
      _
    %p4633 = scmp.le.s32.totalorder 2, %s25
    // Predicated region
    $region93: #{predictor_forward.1} parent=5 // pred_check
      %p4634 = pneg %p4633
    $region94: #{predictor_forward.1} parent=5 // pred_check_branch
      %4636 = sbr.rel (%p4634) target = $region96
    $region95: #{predictor_forward.1} parent=5 // pred_region
      %s4637 = ssub.s32 %s25, 2
      // Predicated region
      $region97: #{predictor_forward.1} parent=95 // pred_check
        %p4638 = pneg %p416
      $region98: #{predictor_forward.1} parent=95 // pred_check_branch
        %4640 = sbr.rel (%p4638) target = $region100
      $region99: #{predictor_forward.1} parent=95 // pred_region
        %p4641 = scmp.lt.s32.totalorder %s31, 1
        %s4642 = scalar_select %p4641, %s31, 1
        %s4643 = smul.addr %s4642, 2
        %s4644 = smul.addr %s4643, 4
        %s4645 = scalar_lea.vmem %s17, %s4644
      $region100: #{predictor_forward.1} parent=95 // pred_fallthru
        _
    $region96: #{predictor_forward.1} parent=5 // pred_fallthru
      _
  $region6: #{predictor_forward.1} parent=0 // loop_footer
    %s29 = sadd.s32 1, %s25
  $region7: #{predictor_forward.1} parent=0 // loop_footer_branch
    %24 = sbr.rel target = $region3
  $region8: #{predictor_forward.1} parent=0 // loop_exit
    _

</llo_original>
